<compile_context>
chip_gen: v7x
topology: tpu7x:2x2x1
jax: 0.10.0
libtpu: 0.0.40
codegen_flags: <defaults>
</compile_context>

<pallas_src>
import numpy as np
import jax
import jax.numpy as jnp
from jax.experimental import pallas as pl
from jax.experimental.pallas import tpu as pltpu


def _round_up(x, m):
    return ((x + m - 1) // m) * m


# ---------------------------------------------------------------------------
# Kernel
# ---------------------------------------------------------------------------
def _lora_qkv_kernel(x_ref, wqkv_ref, bias_ref, a_ref, b_ref, out_ref):
    """One tile of rows.

    x_ref   : (tile_m, C)     compute_dtype
    wqkv_ref: (C, 3C)         compute_dtype   (Wqkv^T)
    bias_ref: (1, 3C)         f32
    a_ref   : (C, 2r)         compute_dtype   ([A_q^T | A_v^T])
    b_ref   : (2r, 2C)        f32             (block-diag [B_q^T ; B_v^T])
    out_ref : (tile_m, 3C)    out_dtype
    """
    C = a_ref.shape[0]

    x = x_ref[...]

    # Frozen qkv projection, f32 accumulation on the MXU.
    qkv = jnp.dot(x, wqkv_ref[...], preferred_element_type=jnp.float32)
    qkv = qkv + bias_ref[...]                                        # (tile_m, 3C)

    # Fused LoRA: one down-projection, one block-diagonal up-projection.
    xa = jnp.dot(x, a_ref[...], preferred_element_type=jnp.float32)      # (tile_m, 2r)
    delta = jnp.dot(xa, b_ref[...], preferred_element_type=jnp.float32)  # (tile_m, 2C)
    # delta[:, :C] == B_q(A_q(x)),  delta[:, C:] == B_v(A_v(x))

    od = out_ref.dtype
    out_ref[:, :C] = (qkv[:, :C] + delta[:, :C]).astype(od)          # q + LoRA_q
    out_ref[:, C:2 * C] = qkv[:, C:2 * C].astype(od)                 # k untouched
    out_ref[:, 2 * C:] = (qkv[:, 2 * C:] + delta[:, C:]).astype(od)  # v + LoRA_v


# ---------------------------------------------------------------------------
# One-time parameter preparation (hoists transposes / concats out of the
# per-call path; store these, don't rebuild them every attention block call).
# ---------------------------------------------------------------------------
def prepare_lora_qkv_params(w_qkv, b_qkv, w_a_q, w_b_q, w_a_v, w_b_v,
                            compute_dtype=jnp.bfloat16):
    """PyTorch layouts: w_qkv (3C, C), b_qkv (3C,), w_a_* (r, C), w_b_* (C, r)."""
    C = w_qkv.shape[1]
    r = w_a_q.shape[0]

    wqkv_t = jnp.asarray(w_qkv, jnp.float32).T.astype(compute_dtype)      # (C, 3C)
    bias = jnp.asarray(b_qkv, jnp.float32).reshape(1, 3 * C)              # (1, 3C)

    a_cat = jnp.concatenate(
        [jnp.asarray(w_a_q, jnp.float32).T,
         jnp.asarray(w_a_v, jnp.float32).T], axis=1).astype(compute_dtype)  # (C, 2r)

    b_blk = jnp.zeros((2 * r, 2 * C), jnp.float32)                        # (2r, 2C)
    b_blk = b_blk.at[:r, :C].set(jnp.asarray(w_b_q, jnp.float32).T)
    b_blk = b_blk.at[r:, C:].set(jnp.asarray(w_b_v, jnp.float32).T)

    return {"wqkv_t": wqkv_t, "bias": bias, "a_cat": a_cat, "b_blk": b_blk}


def merge_lora_into_qkv(w_qkv, w_a_q, w_b_q, w_a_v, w_b_v):
    """Inference-only option: fold the LoRA update into the frozen weight
    (W_eff rows [:C] += B_q @ A_q, rows [2C:] += B_v @ A_v, PyTorch layout),
    after which a plain x @ W_eff^T + b kernel suffices (no LoRA matmuls,
    no delta temporaries, no a_cat/b_blk buffers)."""
    C = w_qkv.shape[1]
    w_eff = jnp.asarray(w_qkv, jnp.float32)
    w_eff = w_eff.at[:C, :].add(
        jnp.asarray(w_b_q, jnp.float32) @ jnp.asarray(w_a_q, jnp.float32))
    w_eff = w_eff.at[2 * C:, :].add(
        jnp.asarray(w_b_v, jnp.float32) @ jnp.asarray(w_a_v, jnp.float32))
    return w_eff


# ---------------------------------------------------------------------------
# Heuristics
# ---------------------------------------------------------------------------
def _default_tile_m():
    """v5e/v6e (128 MiB VMEM): big 512-row tiles amortize per-step overhead.
    v7x / unknown (64 MiB VMEM, 2 TCs): 256 keeps small DINOv2 row grids
    splitting evenly across the two TensorCores."""
    try:
        kind = jax.devices()[0].device_kind.lower()
    except Exception:
        kind = ""
    if "v5" in kind or "v6" in kind:
        return 512
    return 256


def _estimate_vmem_bytes(tile_m, C, r2, compute_dtype, out_dtype):
    """Scoped-VMEM budget: double-buffered x/out tiles, grid-invariant weights
    (budgeted at 2 buffers so the Buffered(1) fallback is covered), plus the
    in-kernel f32 temporaries, all with (8, 128) layout padding."""
    in_b = np.dtype(compute_dtype).itemsize
    out_b = np.dtype(out_dtype).itemsize

    def buf(rows, cols, itemsize):
        return _round_up(max(int(rows), 1), 8) * _round_up(int(cols), 128) * itemsize

    est = (2 * (buf(C, 3 * C, in_b)             # Wqkv^T
                + buf(1, 3 * C, 4)              # bias (f32, sublane-padded)
                + buf(C, r2, in_b)              # [A_q^T | A_v^T] (lane-padded)
                + buf(r2, 2 * C, 4))            # block-diag B^T (f32)
           + 2 * (buf(tile_m, C, in_b)          # x tile (double-buffered)
                  + buf(tile_m, 3 * C, out_b))  # out tile (double-buffered)
           + buf(tile_m, 3 * C, 4)              # f32 qkv temporary
           + buf(tile_m, r2, 4)                 # f32 xa temporary (lane-padded)
           + buf(tile_m, 2 * C, 4))             # f32 delta temporary
    # Always pass an explicit limit (v5e's default is only ~16 MiB); clamp to
    # [32 MiB, 64 MiB] so the request is valid on every generation incl. v7x.
    return min(max(int(est * 1.25) + (4 << 20), 32 << 20), 64 << 20)


# Flipped to False (once) if this runtime rejects pl.Buffered(1).
_SINGLE_BUFFER_WEIGHTS_OK = True


# ---------------------------------------------------------------------------
# Pallas wrapper
# ---------------------------------------------------------------------------
def lora_qkv(x, params, *, tile_m=None, out_dtype=jnp.bfloat16,
             vmem_limit_bytes=None):
    """Pallas version of _LoRA_qkv.forward.

    x: (B, N, C); params from prepare_lora_qkv_params().  Returns (B, N, 3C).
    Pass out_dtype=jnp.float32 for exact-PyTorch-semantics validation; the
    bf16 default is the production (write-back-bandwidth-friendly) path.
    """
    global _SINGLE_BUFFER_WEIGHTS_OK

    wqkv_t, bias = params["wqkv_t"], params["bias"]
    a_cat, b_blk = params["a_cat"], params["b_blk"]

    B, N, C = x.shape
    assert wqkv_t.shape == (C, 3 * C)
    assert C % 128 == 0, "embed dim must be a multiple of the 128-lane width"
    r2 = a_cat.shape[1]
    compute_dtype = wqkv_t.dtype

    M = B * N
    if tile_m is None:
        tile_m = _default_tile_m()
    # Clamp the tile to the (8-aligned) row count so tiny inputs don't
    # over-allocate; ragged final blocks are handled by Pallas masking.
    tile_m = min(tile_m, _round_up(M, 8))
    assert tile_m % 8 == 0
    n_tiles = pl.cdiv(M, tile_m)

    x2d = x.reshape(M, C)
    if x2d.dtype != compute_dtype:
        x2d = x2d.astype(compute_dtype)

    if vmem_limit_bytes is None:
        vmem_limit_bytes = _estimate_vmem_bytes(tile_m, C, r2,
                                                compute_dtype, out_dtype)

    def build_call(single_buffer_weights):
        # Grid-invariant operands: constant index_map, so double-buffering is
        # pure VMEM waste — request a single buffer when supported.
        w_kwargs = ({"pipeline_mode": pl.Buffered(1)}
                    if single_buffer_weights else {})
        in_specs = [
            pl.BlockSpec((tile_m, C), lambda i: (i, 0)),                 # x rows
            pl.BlockSpec((C, 3 * C), lambda i: (0, 0), **w_kwargs),      # Wqkv^T
            pl.BlockSpec((1, 3 * C), lambda i: (0, 0), **w_kwargs),      # bias
            pl.BlockSpec((C, r2), lambda i: (0, 0), **w_kwargs),         # [A_q^T|A_v^T]
            pl.BlockSpec((r2, 2 * C), lambda i: (0, 0), **w_kwargs),     # block-diag B^T
        ]
        return pl.pallas_call(
            _lora_qkv_kernel,
            out_shape=jax.ShapeDtypeStruct((M, 3 * C), out_dtype),
            grid_spec=pltpu.PrefetchScalarGridSpec(
                num_scalar_prefetch=0,
                grid=(n_tiles,),
                in_specs=in_specs,
                out_specs=pl.BlockSpec((tile_m, 3 * C), lambda i: (i, 0)),
            ),
            compiler_params=pltpu.CompilerParams(
                dimension_semantics=("parallel",),
                vmem_limit_bytes=vmem_limit_bytes),
        )

    args = (x2d, wqkv_t, bias, a_cat, b_blk)
    if _SINGLE_BUFFER_WEIGHTS_OK:
        try:
            out = build_call(True)(*args)
        except Exception:
            # Runtime doesn't accept buffer_count=1; fall back to defaults.
            _SINGLE_BUFFER_WEIGHTS_OK = False
            out = build_call(False)(*args)
    else:
        out = build_call(False)(*args)

    return out.reshape(B, N, 3 * C)


# ---------------------------------------------------------------------------
# Plain-JAX reference (PyTorch semantics; compute_dtype mirrors the kernel's
# cast policy — f32 is the exact PyTorch path).
# ---------------------------------------------------------------------------
def lora_qkv_reference(x, w_qkv, b_qkv, w_a_q, w_b_q, w_a_v, w_b_v,
                       compute_dtype=jnp.float32):
    C = x.shape[-1]
    xc = x.astype(compute_dtype)
    qkv = jnp.einsum('bnc,oc->bno', xc, w_qkv.astype(compute_dtype),
                     preferred_element_type=jnp.float32)
    qkv = qkv + b_qkv.astype(jnp.float32)
    aq = jnp.einsum('bnc,rc->bnr', xc, w_a_q.astype(compute_dtype),
                    preferred_element_type=jnp.float32)
    new_q = jnp.einsum('bnr,cr->bnc', aq, w_b_q.astype(jnp.float32),
                       preferred_element_type=jnp.float32)
    av = jnp.einsum('bnc,rc->bnr', xc, w_a_v.astype(compute_dtype),
                    preferred_element_type=jnp.float32)
    new_v = jnp.einsum('bnr,cr->bnc', av, w_b_v.astype(jnp.float32),
                       preferred_element_type=jnp.float32)
    qkv = qkv.at[..., :C].add(new_q)
    qkv = qkv.at[..., 2 * C:].add(new_v)
    return qkv


if __name__ == "__main__":
    # Small shapes consistent with the module: (B, N, C) token embeddings,
    # LoRA rank r=4 (module default).  C=128 keeps the last dim lane-aligned
    # (real DINOv2 dims 384/768/1024/1536 are all multiples of 128); N=200 is
    # deliberately NOT a multiple of tile_m so the ragged (masked) final block
    # path is exercised.
    B, N, C, r = 2, 200, 128, 4

    key = jax.random.PRNGKey(0)
    kx, kw, kb, ka1, kb1, ka2, kb2 = jax.random.split(key, 7)

    x = jax.random.normal(kx, (B, N, C), jnp.float32)

    # Frozen qkv linear: weight (3C, C), bias (3C,)  (qkv_bias=True in DINOv2).
    w_qkv = jax.random.normal(kw, (3 * C, C), jnp.float32) / jnp.sqrt(C)
    b_qkv = jax.random.normal(kb, (3 * C,), jnp.float32) * 0.01

    # LoRA params.  reset_parameters(): kaiming_uniform on A, zeros on B.
    bound = 1.0 / float(np.sqrt(C))
    w_a_q = jax.random.uniform(ka1, (r, C), jnp.float32, -bound, bound)
    w_a_v = jax.random.uniform(ka2, (r, C), jnp.float32, -bound, bound)
    # NOTE: the module zero-inits B_q / B_v; nonzero values are used here so
    # the LoRA add-path is actually exercised (semantics identical).
    w_b_q = jax.random.normal(kb1, (C, r), jnp.float32) * 0.1
    w_b_v = jax.random.normal(kb2, (C, r), jnp.float32) * 0.1

    # --- exact-semantics check: f32 compute / f32 output vs reference ---
    params_f32 = prepare_lora_qkv_params(
        w_qkv, b_qkv, w_a_q, w_b_q, w_a_v, w_b_v, compute_dtype=jnp.float32)
    out_f32 = jax.block_until_ready(
        lora_qkv(x, params_f32, out_dtype=jnp.float32))
    ref_f32 = lora_qkv_reference(x, w_qkv, b_qkv, w_a_q, w_b_q, w_a_v, w_b_v,
                                 compute_dtype=jnp.float32)
    assert out_f32.shape == (B, N, 3 * C)
    assert jnp.allclose(out_f32, ref_f32, atol=2e-2, rtol=2e-2), \
        "f32 kernel mismatch vs reference"

    # --- production path: bf16 inputs, f32 accumulation, bf16 output ---
    params_bf16 = prepare_lora_qkv_params(
        w_qkv, b_qkv, w_a_q, w_b_q, w_a_v, w_b_v, compute_dtype=jnp.bfloat16)
    out_bf16 = jax.block_until_ready(lora_qkv(x, params_bf16))  # bf16 out default
    ref_bf16 = lora_qkv_reference(x, w_qkv, b_qkv, w_a_q, w_b_q, w_a_v, w_b_v,
                                  compute_dtype=jnp.bfloat16)
    assert out_bf16.shape == (B, N, 3 * C)
    assert out_bf16.dtype == jnp.bfloat16
    assert jnp.allclose(out_bf16.astype(jnp.float32), ref_bf16,
                        atol=5e-2, rtol=5e-2), \
        "bf16 kernel mismatch vs bf16 reference"

    print("KERNEL_OK")
</pallas_src>

<mosaic_0001>
module attributes {stable_mosaic.version = 11 : i64} {
  func.func @_lora_qkv_kernel(%arg0: i32, %arg1: memref<256x128xf32, #tpu.memory_space<vmem>>, %arg2: memref<128x384xf32, #tpu.memory_space<vmem>>, %arg3: memref<1x384xf32, #tpu.memory_space<vmem>>, %arg4: memref<128x8xf32, #tpu.memory_space<vmem>>, %arg5: memref<8x256xf32, #tpu.memory_space<vmem>>, %arg6: memref<256x384xf32, #tpu.memory_space<vmem>>) attributes {dimension_semantics = [#tpu.dimension_semantics<parallel>], iteration_bounds = array<i64: 2>, scalar_prefetch = 0 : i64, scratch_operands = 0 : i64, tpu.core_type = #tpu.core_type<tc>, window_params = [{transform_indices = @transform_0, window_bounds = array<i64: 256, 128>}, {pipeline_mode = #tpu.pipeline_mode<synchronous>, transform_indices = @transform_1, window_bounds = array<i64: 128, 384>}, {pipeline_mode = #tpu.pipeline_mode<synchronous>, transform_indices = @transform_2, window_bounds = array<i64: 1, 384>}, {pipeline_mode = #tpu.pipeline_mode<synchronous>, transform_indices = @transform_3, window_bounds = array<i64: 128, 8>}, {pipeline_mode = #tpu.pipeline_mode<synchronous>, transform_indices = @transform_4, window_bounds = array<i64: 8, 256>}, {transform_indices = @transform_5, window_bounds = array<i64: 256, 384>}]} {
    %c0 = arith.constant 0 : index
    %c0_0 = arith.constant 0 : index
    %0 = vector.load %arg1[%c0, %c0_0] : memref<256x128xf32, #tpu.memory_space<vmem>>, vector<256x128xf32>
    %c0_1 = arith.constant 0 : index
    %c0_2 = arith.constant 0 : index
    %1 = vector.load %arg2[%c0_1, %c0_2] : memref<128x384xf32, #tpu.memory_space<vmem>>, vector<128x384xf32>
    %cst = arith.constant dense<0.000000e+00> : vector<256x384xf32>
    %2 = tpu.matmul %0, %1, %cst {dimension_numbers = #tpu.dot_dimension_numbers<[1], [0], [0], [1], [0, 0, 1, 1], [], []>} : vector<256x128xf32>, vector<128x384xf32>, vector<256x384xf32> -> vector<256x384xf32>
    %c0_3 = arith.constant 0 : index
    %c0_4 = arith.constant 0 : index
    %3 = vector.load %arg3[%c0_3, %c0_4] : memref<1x384xf32, #tpu.memory_space<vmem>>, vector<1x384xf32>
    %4 = vector.broadcast %3 : vector<1x384xf32> to vector<256x384xf32>
    %5 = arith.addf %2, %4 : vector<256x384xf32>
    %c0_5 = arith.constant 0 : index
    %c0_6 = arith.constant 0 : index
    %6 = vector.load %arg4[%c0_5, %c0_6] : memref<128x8xf32, #tpu.memory_space<vmem>>, vector<128x8xf32>
    %cst_7 = arith.constant dense<0.000000e+00> : vector<256x8xf32>
    %7 = tpu.matmul %0, %6, %cst_7 {dimension_numbers = #tpu.dot_dimension_numbers<[1], [0], [0], [1], [0, 0, 1, 1], [], []>} : vector<256x128xf32>, vector<128x8xf32>, vector<256x8xf32> -> vector<256x8xf32>
    %c0_8 = arith.constant 0 : index
    %c0_9 = arith.constant 0 : index
    %8 = vector.load %arg5[%c0_8, %c0_9] : memref<8x256xf32, #tpu.memory_space<vmem>>, vector<8x256xf32>
    %cst_10 = arith.constant dense<0.000000e+00> : vector<256x256xf32>
    %9 = tpu.matmul %7, %8, %cst_10 {dimension_numbers = #tpu.dot_dimension_numbers<[1], [0], [0], [1], [0, 0, 1, 1], [], []>} : vector<256x8xf32>, vector<8x256xf32>, vector<256x256xf32> -> vector<256x256xf32>
    %10 = vector.extract_strided_slice %5 {offsets = [0, 0], sizes = [256, 128], strides = [1, 1]} : vector<256x384xf32> to vector<256x128xf32>
    %11 = vector.extract_strided_slice %9 {offsets = [0, 0], sizes = [256, 128], strides = [1, 1]} : vector<256x256xf32> to vector<256x128xf32>
    %12 = arith.addf %10, %11 : vector<256x128xf32>
    %c0_11 = arith.constant 0 : index
    %c0_12 = arith.constant 0 : index
    %13 = vector.load %arg6[%c0_11, %c0_12] : memref<256x384xf32, #tpu.memory_space<vmem>>, vector<256x128xf32>
    tpu.vector_store %arg6[%c0_11, %c0_12], %12 {strides = array<i32>} : memref<256x384xf32, #tpu.memory_space<vmem>>, vector<256x128xf32>,
    %14 = vector.extract_strided_slice %5 {offsets = [0, 128], sizes = [256, 128], strides = [1, 1]} : vector<256x384xf32> to vector<256x128xf32>
    %c0_13 = arith.constant 0 : index
    %c128 = arith.constant 128 : index
    %15 = vector.load %arg6[%c0_13, %c128] : memref<256x384xf32, #tpu.memory_space<vmem>>, vector<256x128xf32>
    tpu.vector_store %arg6[%c0_13, %c128], %14 {strides = array<i32>} : memref<256x384xf32, #tpu.memory_space<vmem>>, vector<256x128xf32>,
    %16 = vector.extract_strided_slice %5 {offsets = [0, 256], sizes = [256, 128], strides = [1, 1]} : vector<256x384xf32> to vector<256x128xf32>
    %17 = vector.extract_strided_slice %9 {offsets = [0, 128], sizes = [256, 128], strides = [1, 1]} : vector<256x256xf32> to vector<256x128xf32>
    %18 = arith.addf %16, %17 : vector<256x128xf32>
    %c0_14 = arith.constant 0 : index
    %c256 = arith.constant 256 : index
    %19 = vector.load %arg6[%c0_14, %c256] : memref<256x384xf32, #tpu.memory_space<vmem>>, vector<256x128xf32>
    tpu.vector_store %arg6[%c0_14, %c256], %18 {strides = array<i32>} : memref<256x384xf32, #tpu.memory_space<vmem>>, vector<256x128xf32>,
    return
  }
  func.func @transform_0(%arg0: i32) -> (i32, i32) {
    %c0_i32 = arith.constant 0 : i32
    %c0_i32_0 = arith.constant 0 : i32
    return %arg0, %c0_i32 : i32, i32
  }
  func.func @transform_1(%arg0: i32) -> (i32, i32) {
    %c0_i32 = arith.constant 0 : i32
    %c0_i32_0 = arith.constant 0 : i32
    %c0_i32_1 = arith.constant 0 : i32
    return %c0_i32, %c0_i32_0 : i32, i32
  }
  func.func @transform_2(%arg0: i32) -> (i32, i32) {
    %c0_i32 = arith.constant 0 : i32
    %c0_i32_0 = arith.constant 0 : i32
    %c0_i32_1 = arith.constant 0 : i32
    return %c0_i32, %c0_i32_0 : i32, i32
  }
  func.func @transform_3(%arg0: i32) -> (i32, i32) {
    %c0_i32 = arith.constant 0 : i32
    %c0_i32_0 = arith.constant 0 : i32
    %c0_i32_1 = arith.constant 0 : i32
    return %c0_i32, %c0_i32_0 : i32, i32
  }
  func.func @transform_4(%arg0: i32) -> (i32, i32) {
    %c0_i32 = arith.constant 0 : i32
    %c0_i32_0 = arith.constant 0 : i32
    %c0_i32_1 = arith.constant 0 : i32
    return %c0_i32, %c0_i32_0 : i32, i32
  }
  func.func @transform_5(%arg0: i32) -> (i32, i32) {
    %c0_i32 = arith.constant 0 : i32
    %c0_i32_0 = arith.constant 0 : i32
    return %arg0, %c0_i32 : i32, i32
  }
}

module attributes {stable_mosaic.version = 11 : i64} {
  func.func @_lora_qkv_kernel(%arg0: i32, %arg1: memref<256x128xf32, #tpu.memory_space<vmem>>, %arg2: memref<128x384xf32, #tpu.memory_space<vmem>>, %arg3: memref<1x384xf32, #tpu.memory_space<vmem>>, %arg4: memref<128x8xf32, #tpu.memory_space<vmem>>, %arg5: memref<8x256xf32, #tpu.memory_space<vmem>>, %arg6: memref<256x384xf32, #tpu.memory_space<vmem>>) attributes {dimension_semantics = [#tpu.dimension_semantics<parallel>], iteration_bounds = array<i64: 2>, scalar_prefetch = 0 : i64, scratch_operands = 0 : i64, tpu.core_type = #tpu.core_type<tc>, window_params = [{transform_indices = @transform_0, window_bounds = array<i64: 256, 128>}, {pipeline_mode = #tpu.pipeline_mode<synchronous>, transform_indices = @transform_1, window_bounds = array<i64: 128, 384>}, {pipeline_mode = #tpu.pipeline_mode<synchronous>, transform_indices = @transform_2, window_bounds = array<i64: 1, 384>}, {pipeline_mode = #tpu.pipeline_mode<synchronous>, transform_indices = @transform_3, window_bounds = array<i64: 128, 8>}, {pipeline_mode = #tpu.pipeline_mode<synchronous>, transform_indices = @transform_4, window_bounds = array<i64: 8, 256>}, {transform_indices = @transform_5, window_bounds = array<i64: 256, 384>}]} {
    %c0 = arith.constant 0 : index
    %c0_0 = arith.constant 0 : index
    %0 = vector.load %arg1[%c0, %c0_0] : memref<256x128xf32, #tpu.memory_space<vmem>>, vector<256x128xf32>
    %c0_1 = arith.constant 0 : index
    %c0_2 = arith.constant 0 : index
    %1 = vector.load %arg2[%c0_1, %c0_2] : memref<128x384xf32, #tpu.memory_space<vmem>>, vector<128x384xf32>
    %cst = arith.constant dense<0.000000e+00> : vector<256x384xf32>
    %2 = tpu.matmul %0, %1, %cst {dimension_numbers = #tpu.dot_dimension_numbers<[1], [0], [0], [1], [0, 0, 1, 1], [], []>} : vector<256x128xf32>, vector<128x384xf32>, vector<256x384xf32> -> vector<256x384xf32>
    %c0_3 = arith.constant 0 : index
    %c0_4 = arith.constant 0 : index
    %3 = vector.load %arg3[%c0_3, %c0_4] : memref<1x384xf32, #tpu.memory_space<vmem>>, vector<1x384xf32>
    %4 = vector.broadcast %3 : vector<1x384xf32> to vector<256x384xf32>
    %5 = arith.addf %2, %4 : vector<256x384xf32>
    %c0_5 = arith.constant 0 : index
    %c0_6 = arith.constant 0 : index
    %6 = vector.load %arg4[%c0_5, %c0_6] : memref<128x8xf32, #tpu.memory_space<vmem>>, vector<128x8xf32>
    %cst_7 = arith.constant dense<0.000000e+00> : vector<256x8xf32>
    %7 = tpu.matmul %0, %6, %cst_7 {dimension_numbers = #tpu.dot_dimension_numbers<[1], [0], [0], [1], [0, 0, 1, 1], [], []>} : vector<256x128xf32>, vector<128x8xf32>, vector<256x8xf32> -> vector<256x8xf32>
    %c0_8 = arith.constant 0 : index
    %c0_9 = arith.constant 0 : index
    %8 = vector.load %arg5[%c0_8, %c0_9] : memref<8x256xf32, #tpu.memory_space<vmem>>, vector<8x256xf32>
    %cst_10 = arith.constant dense<0.000000e+00> : vector<256x256xf32>
    %9 = tpu.matmul %7, %8, %cst_10 {dimension_numbers = #tpu.dot_dimension_numbers<[1], [0], [0], [1], [0, 0, 1, 1], [], []>} : vector<256x8xf32>, vector<8x256xf32>, vector<256x256xf32> -> vector<256x256xf32>
    %10 = vector.extract_strided_slice %5 {offsets = [0, 0], sizes = [256, 128], strides = [1, 1]} : vector<256x384xf32> to vector<256x128xf32>
    %11 = vector.extract_strided_slice %9 {offsets = [0, 0], sizes = [256, 128], strides = [1, 1]} : vector<256x256xf32> to vector<256x128xf32>
    %12 = arith.addf %10, %11 : vector<256x128xf32>
    %c0_11 = arith.constant 0 : index
    %c0_12 = arith.constant 0 : index
    %13 = vector.load %arg6[%c0_11, %c0_12] : memref<256x384xf32, #tpu.memory_space<vmem>>, vector<256x128xf32>
    tpu.vector_store %arg6[%c0_11, %c0_12], %12 {strides = array<i32>} : memref<256x384xf32, #tpu.memory_space<vmem>>, vector<256x128xf32>,
    %14 = vector.extract_strided_slice %5 {offsets = [0, 128], sizes = [256, 128], strides = [1, 1]} : vector<256x384xf32> to vector<256x128xf32>
    %c0_13 = arith.constant 0 : index
    %c128 = arith.constant 128 : index
    %15 = vector.load %arg6[%c0_13, %c128] : memref<256x384xf32, #tpu.memory_space<vmem>>, vector<256x128xf32>
    tpu.vector_store %arg6[%c0_13, %c128], %14 {strides = array<i32>} : memref<256x384xf32, #tpu.memory_space<vmem>>, vector<256x128xf32>,
    %16 = vector.extract_strided_slice %5 {offsets = [0, 256], sizes = [256, 128], strides = [1, 1]} : vector<256x384xf32> to vector<256x128xf32>
    %17 = vector.extract_strided_slice %9 {offsets = [0, 128], sizes = [256, 128], strides = [1, 1]} : vector<256x256xf32> to vector<256x128xf32>
    %18 = arith.addf %16, %17 : vector<256x128xf32>
    %c0_14 = arith.constant 0 : index
    %c256 = arith.constant 256 : index
    %19 = vector.load %arg6[%c0_14, %c256] : memref<256x384xf32, #tpu.memory_space<vmem>>, vector<256x128xf32>
    tpu.vector_store %arg6[%c0_14, %c256], %18 {strides = array<i32>} : memref<256x384xf32, #tpu.memory_space<vmem>>, vector<256x128xf32>,
    return
  }
  func.func @transform_0(%arg0: i32) -> (i32, i32) {
    %c0_i32 = arith.constant 0 : i32
    %c0_i32_0 = arith.constant 0 : i32
    return %arg0, %c0_i32 : i32, i32
  }
  func.func @transform_1(%arg0: i32) -> (i32, i32) {
    %c0_i32 = arith.constant 0 : i32
    %c0_i32_0 = arith.constant 0 : i32
    %c0_i32_1 = arith.constant 0 : i32
    return %c0_i32, %c0_i32_0 : i32, i32
  }
  func.func @transform_2(%arg0: i32) -> (i32, i32) {
    %c0_i32 = arith.constant 0 : i32
    %c0_i32_0 = arith.constant 0 : i32
    %c0_i32_1 = arith.constant 0 : i32
    return %c0_i32, %c0_i32_0 : i32, i32
  }
  func.func @transform_3(%arg0: i32) -> (i32, i32) {
    %c0_i32 = arith.constant 0 : i32
    %c0_i32_0 = arith.constant 0 : i32
    %c0_i32_1 = arith.constant 0 : i32
    return %c0_i32, %c0_i32_0 : i32, i32
  }
  func.func @transform_4(%arg0: i32) -> (i32, i32) {
    %c0_i32 = arith.constant 0 : i32
    %c0_i32_0 = arith.constant 0 : i32
    %c0_i32_1 = arith.constant 0 : i32
    return %c0_i32, %c0_i32_0 : i32, i32
  }
  func.func @transform_5(%arg0: i32) -> (i32, i32) {
    %c0_i32 = arith.constant 0 : i32
    %c0_i32_0 = arith.constant 0 : i32
    return %arg0, %c0_i32 : i32, i32
  }
}

</mosaic_0001>

<llo_original>
// kernel: tpu_custom_call.1
$region0: #{tpu_custom_call.1}
  #allocation0 [shape = 'u32[]', space=smem, size = 0x4, offset = 0x4, fixed_abs, tag = 'smem constant byte address 0x4 - core index']
  #allocation1 [shape = 'u32[144,128]{1,0:T(1,128)}', space=vmem, size = 0x12000, scoped, tag = 'internal scratch']
  %s0 = inlined_call_operand.hbm [shape: f32[400,128], index: 0, kind: input, shape index: {}]
  %s1 = inlined_call_operand.hbm [shape: f32[128,384], index: 1, kind: input, shape index: {}]
  %s2 = inlined_call_operand.vmem [shape: f32[1,384], index: 2, kind: input, shape index: {}]
  %s3 = inlined_call_operand.vmem [shape: f32[128,8], index: 3, kind: input, shape index: {}]
  %s4 = inlined_call_operand.vmem [shape: f32[8,256], index: 4, kind: input, shape index: {}]
  %s5 = inlined_call_operand.hbm [shape: f32[400,384], index: 5, kind: output, shape index: {}]
  %s6 = sld [smem:[#allocation0]]
  $region61: #{tpu_custom_call.1} parent=0
    _
  %s8 = ssub.s32 1, %s6
  %s9 = scalar_select 0, %s8, %s6
  $region1: #{tpu_custom_call.1} parent=0
    #allocation2 [shape = 'u8[262144]{0}', space=vmem, size = 0x40000, scoped, tag = 'input window, operand 0']
    #allocation3 [shape = 's32[2]{0}', space=sflag, size = 0x8, scoped, tag = 'scoped memory for tpu_custom_call.1']
    #allocation4 [shape = 's32[2]{0}', space=sflag, size = 0x8, scoped, tag = 'scoped memory for tpu_custom_call.1']
    #allocation5 [shape = 'u8[196608]{0}', space=vmem, size = 0x30000, scoped, tag = 'input window, operand 1, single buffered']
    #allocation6 [shape = 's32[1]{0}', space=sflag, size = 0x4, scoped, tag = 'scoped memory for tpu_custom_call.1']
    #allocation7 [shape = 'u8[786432]{0}', space=vmem, size = 0xc0000, scoped, tag = 'output window, operand 0']
    %10 = vsyncpa [#allocation3], 0
    %s11 = scalar_lea.sflag [#allocation3], 1
    %12 = vsyncpa %s11, 0
    %13 = vsyncpa [#allocation6], 0
    %14 = vsyncpa [#allocation4], 0
    %s15 = scalar_lea.sflag [#allocation4], 1
    %16 = vsyncpa %s15, 0
    loop: start=0, step=1, limit=4
    $region2: #{tpu_custom_call.1} parent=1 // loop_pre_header
      _
    $region3: #{tpu_custom_call.1} parent=1 // loop_header
      %s18 = sphi 0, %s22
      %p19 = scmp.ge.s32.totalorder %s18, 4
      %s28 = sphi 0, %s30
      %s31 = sphi 0, %s28
      %s32 = sphi 0, %s31
      %s48 = sphi 0, %s32
      %s52 = sphi 0, %s52
      %s54 = sphi 0, %s52
      %s55 = sphi 0, %s54
      %s69 = sphi 0, %s55
      %s73 = sphi 0, %s73
      %s75 = sphi 0, %s73
      %s76 = sphi 0, %s75
      %s90 = sphi 0, %s76
      %s94 = sphi 0, %s94
      %s96 = sphi 0, %s94
      %s97 = sphi 0, %s96
      %s111 = sphi 0, %s97
      %s115 = sphi 0, %s115
      %s117 = sphi 0, %s115
      %s118 = sphi 0, %s117
      %s132 = sphi 0, %s118
      %s138 = sphi 0, %s140
      %s141 = sphi 0, %s138
      %s142 = sphi 0, %s141
      %s158 = sphi 0, %s142
    $region4: #{tpu_custom_call.1} parent=1 // loop_header_branch
      %21 = sbr.rel (%p19) target = $region8
    $region5: #{tpu_custom_call.1} parent=1 // loop_body
      %s23 = ssub.s32 %s18, 1
      %s24 = ssub.s32 %s18, 2
      %s25 = sadd.s32 %s18, 1
      %s26 = ssub.s32 %s18, %s25
      %p27 = scmp.eq.s32.totalorder %s26, 0
      %s29 = sadd.s32 %s28, 1
      %s30 = scalar_select %p27, %s28, %s29
      %p33 = pneg %p27
      %p34 = scmp.eq.s32.totalorder %s18, 1
      %p35 = por %p33, %p34
      %p36 = scmp.ne.s32.totalorder %s28, %s31
      %p37 = scmp.eq.s32.totalorder %s18, 0
      %p38 = por %p36, %p37
      %p39 = scmp.ne.s32.totalorder %s28, %s31
      %p40 = scmp.eq.s32.totalorder %s23, 1
      %p41 = por %p39, %p40
      %p42 = scmp.ne.s32.totalorder %s31, %s32
      %p43 = scmp.eq.s32.totalorder %s23, 0
      %p44 = por %p42, %p43
      %p45 = scmp.ne.s32.totalorder %s31, %s32
      %p46 = scmp.eq.s32.totalorder %s24, 1
      %p47 = por %p45, %p46
      %p49 = scmp.ne.s32.totalorder %s32, %s48
      %p50 = scmp.eq.s32.totalorder %s24, 0
      %p51 = por %p49, %p50
      %s53 = sadd.s32 %s52, 1
      %p56 = scmp.eq.s32.totalorder %s18, 1
      %p57 = scmp.ne.s32.totalorder %s52, %s54
      %p58 = scmp.eq.s32.totalorder %s18, 0
      %p59 = por %p57, %p58
      %p60 = scmp.ne.s32.totalorder %s52, %s54
      %p61 = scmp.eq.s32.totalorder %s23, 1
      %p62 = por %p60, %p61
      %p63 = scmp.ne.s32.totalorder %s54, %s55
      %p64 = scmp.eq.s32.totalorder %s23, 0
      %p65 = por %p63, %p64
      %p66 = scmp.ne.s32.totalorder %s54, %s55
      %p67 = scmp.eq.s32.totalorder %s24, 1
      %p68 = por %p66, %p67
      %p70 = scmp.ne.s32.totalorder %s55, %s69
      %p71 = scmp.eq.s32.totalorder %s24, 0
      %p72 = por %p70, %p71
      %s74 = sadd.s32 %s73, 1
      %p77 = scmp.eq.s32.totalorder %s18, 1
      %p78 = scmp.ne.s32.totalorder %s73, %s75
      %p79 = scmp.eq.s32.totalorder %s18, 0
      %p80 = por %p78, %p79
      %p81 = scmp.ne.s32.totalorder %s73, %s75
      %p82 = scmp.eq.s32.totalorder %s23, 1
      %p83 = por %p81, %p82
      %p84 = scmp.ne.s32.totalorder %s75, %s76
      %p85 = scmp.eq.s32.totalorder %s23, 0
      %p86 = por %p84, %p85
      %p87 = scmp.ne.s32.totalorder %s75, %s76
      %p88 = scmp.eq.s32.totalorder %s24, 1
      %p89 = por %p87, %p88
      %p91 = scmp.ne.s32.totalorder %s76, %s90
      %p92 = scmp.eq.s32.totalorder %s24, 0
      %p93 = por %p91, %p92
      %s95 = sadd.s32 %s94, 1
      %p98 = scmp.eq.s32.totalorder %s18, 1
      %p99 = scmp.ne.s32.totalorder %s94, %s96
      %p100 = scmp.eq.s32.totalorder %s18, 0
      %p101 = por %p99, %p100
      %p102 = scmp.ne.s32.totalorder %s94, %s96
      %p103 = scmp.eq.s32.totalorder %s23, 1
      %p104 = por %p102, %p103
      %p105 = scmp.ne.s32.totalorder %s96, %s97
      %p106 = scmp.eq.s32.totalorder %s23, 0
      %p107 = por %p105, %p106
      %p108 = scmp.ne.s32.totalorder %s96, %s97
      %p109 = scmp.eq.s32.totalorder %s24, 1
      %p110 = por %p108, %p109
      %p112 = scmp.ne.s32.totalorder %s97, %s111
      %p113 = scmp.eq.s32.totalorder %s24, 0
      %p114 = por %p112, %p113
      %s116 = sadd.s32 %s115, 1
      %p119 = scmp.eq.s32.totalorder %s18, 1
      %p120 = scmp.ne.s32.totalorder %s115, %s117
      %p121 = scmp.eq.s32.totalorder %s18, 0
      %p122 = por %p120, %p121
      %p123 = scmp.ne.s32.totalorder %s115, %s117
      %p124 = scmp.eq.s32.totalorder %s23, 1
      %p125 = por %p123, %p124
      %p126 = scmp.ne.s32.totalorder %s117, %s118
      %p127 = scmp.eq.s32.totalorder %s23, 0
      %p128 = por %p126, %p127
      %p129 = scmp.ne.s32.totalorder %s117, %s118
      %p130 = scmp.eq.s32.totalorder %s24, 1
      %p131 = por %p129, %p130
      %p133 = scmp.ne.s32.totalorder %s118, %s132
      %p134 = scmp.eq.s32.totalorder %s24, 0
      %p135 = por %p133, %p134
      %s136 = ssub.s32 %s18, %s25
      %p137 = scmp.eq.s32.totalorder %s136, 0
      %s139 = sadd.s32 %s138, 1
      %s140 = scalar_select %p137, %s138, %s139
      %p143 = pneg %p137
      %p144 = scmp.eq.s32.totalorder %s18, 1
      %p145 = por %p143, %p144
      %p146 = scmp.ne.s32.totalorder %s138, %s141
      %p147 = scmp.eq.s32.totalorder %s18, 0
      %p148 = por %p146, %p147
      %p149 = scmp.ne.s32.totalorder %s138, %s141
      %p150 = scmp.eq.s32.totalorder %s23, 1
      %p151 = por %p149, %p150
      %p152 = scmp.ne.s32.totalorder %s141, %s142
      %p153 = scmp.eq.s32.totalorder %s23, 0
      %p154 = por %p152, %p153
      %p155 = scmp.ne.s32.totalorder %s141, %s142
      %p156 = scmp.eq.s32.totalorder %s24, 1
      %p157 = por %p155, %p156
      %p159 = scmp.ne.s32.totalorder %s142, %s158
      %p160 = scmp.eq.s32.totalorder %s24, 0
      %p161 = por %p159, %p160
      %p162 = scmp.le.s32.totalorder 1, %s18
      %p163 = scmp.lt.s32.totalorder %s18, 3
      %p164 = pnand %p162, %p163
      %p165 = pneg %p164
      // Predicated region
      $region9: #{tpu_custom_call.1} parent=5 // pred_check
        _
      $region10: #{tpu_custom_call.1} parent=5 // pred_check_branch
        %167 = sbr.rel (%p164) target = $region12
      $region11: #{tpu_custom_call.1} parent=5 // pred_region
        %s168 = ssub.s32 %s18, 1
        // Predicated region
        $region13: #{tpu_custom_call.1} parent=11 // pred_check
          %p169 = pneg %p65
        $region14: #{tpu_custom_call.1} parent=11 // pred_check_branch
          %171 = sbr.rel (%p169) target = $region16
        $region15: #{tpu_custom_call.1} parent=11 // pred_region
          %s173 = ssub.s32 6144, 6144
          %174 = vsyncadd [#allocation6], %s173
          %s175 = sshll.u32 [#allocation5], 4
          %s176 = int_to_ptr.vmem [resolvable:$true] %s175
          %181 = dma.hbm_to_vmem [thread:$0]  %s1, 6144, %s176, [#allocation6], 384, 384, 24
        $region16: #{tpu_custom_call.1} parent=11 // pred_fallthru
          _
        // Predicated region
        $region17: #{tpu_custom_call.1} parent=11 // pred_check
          %p182 = pneg %p86
        $region18: #{tpu_custom_call.1} parent=11 // pred_check_branch
          %184 = sbr.rel (%p182) target = $region20
        $region19: #{tpu_custom_call.1} parent=11 // pred_region
          _
        $region20: #{tpu_custom_call.1} parent=11 // pred_fallthru
          _
        // Predicated region
        $region21: #{tpu_custom_call.1} parent=11 // pred_check
          %p185 = pneg %p107
        $region22: #{tpu_custom_call.1} parent=11 // pred_check_branch
          %187 = sbr.rel (%p185) target = $region24
        $region23: #{tpu_custom_call.1} parent=11 // pred_region
          _
        $region24: #{tpu_custom_call.1} parent=11 // pred_fallthru
          _
        // Predicated region
        $region25: #{tpu_custom_call.1} parent=11 // pred_check
          %p188 = pneg %p128
        $region26: #{tpu_custom_call.1} parent=11 // pred_check_branch
          %190 = sbr.rel (%p188) target = $region28
        $region27: #{tpu_custom_call.1} parent=11 // pred_region
          _
        $region28: #{tpu_custom_call.1} parent=11 // pred_fallthru
          _
      $region12: #{tpu_custom_call.1} parent=5 // pred_fallthru
        _
      %p191 = scmp.lt.s32.totalorder %s18, 2
      // Predicated region
      $region29: #{tpu_custom_call.1} parent=5 // pred_check
        %p192 = pneg %p191
      $region30: #{tpu_custom_call.1} parent=5 // pred_check_branch
        %194 = sbr.rel (%p192) target = $region32
      $region31: #{tpu_custom_call.1} parent=5 // pred_region
        // Predicated region
        $region33: #{tpu_custom_call.1} parent=31 // pred_check
          %p195 = pneg %p38
        $region34: #{tpu_custom_call.1} parent=31 // pred_check_branch
          %197 = sbr.rel (%p195) target = $region36
        $region35: #{tpu_custom_call.1} parent=31 // pred_region
          %s198 = sand.u32 %s28, 1
          %s199 = scalar_lea.sflag [#allocation3], %s198
          %s200 = sand.u32 %s28, 1
          %s201 = smul.addr %s200, 256
          %s202 = scalar_lea.vmem [#allocation2], %s201
          %s203 = smul.u32 32, %s18
          %s204 = ssub.s32 50, %s203
          %p205 = scmp.lt.s32.totalorder %s204, 32
          %s206 = scalar_select %p205, %s204, 32
          %s207 = smul.u32 128, %s206
          %s209 = ssub.s32 4096, %s207
          %210 = vsyncadd %s199, %s209
          %p211 = scmp.ne.s32.totalorder 0, %s207
          %s212 = smul.addr %s203, 128
          %s213 = scalar_lea.hbm %s0, %s212
          %s214 = smul.u32 8, %s206
          %s215 = sshll.u32 %s202, 4
          %s216 = int_to_ptr.vmem [resolvable:$true] %s215
          %s217 = sshll.u32 %s214, 4
          %221 = dma.hbm_to_vmem [thread:$0]  (%p211), %s213, %s217, %s216, %s199, 128, 128, 8
        $region36: #{tpu_custom_call.1} parent=31 // pred_fallthru
          _
      $region32: #{tpu_custom_call.1} parent=5 // pred_fallthru
        _
      %p222 = scmp.le.s32.totalorder 1, %s18
      %p223 = scmp.lt.s32.totalorder %s18, 3
      %p224 = pnand %p222, %p223
      %p225 = pneg %p224
      // Predicated region
      $region37: #{tpu_custom_call.1} parent=5 // pred_check
        _
      $region38: #{tpu_custom_call.1} parent=5 // pred_check_branch
        %227 = sbr.rel (%p224) target = $region40
      $region39: #{tpu_custom_call.1} parent=5 // pred_region
        %s228 = ssub.s32 %s18, 1
        %s229 = sand.u32 %s31, 1
        %s230 = scalar_lea.sflag [#allocation3], %s229
        %s231 = sand.u32 %s31, 1
        %s232 = smul.addr %s231, 256
        %s233 = scalar_lea.vmem [#allocation2], %s232
        // Predicated region
        $region41: #{tpu_custom_call.1} parent=39 // pred_check
          %p234 = pneg %p44
        $region42: #{tpu_custom_call.1} parent=39 // pred_check_branch
          %236 = sbr.rel (%p234) target = $region44
        $region43: #{tpu_custom_call.1} parent=39 // pred_region
          %237 = dma.done %s230, 4096
        $region44: #{tpu_custom_call.1} parent=39 // pred_fallthru
          _
        // Predicated region
        $region45: #{tpu_custom_call.1} parent=39 // pred_check
          %p238 = pneg %p65
        $region46: #{tpu_custom_call.1} parent=39 // pred_check_branch
          %240 = sbr.rel (%p238) target = $region48
        $region47: #{tpu_custom_call.1} parent=39 // pred_region
          %241 = dma.done [#allocation6], 6144
        $region48: #{tpu_custom_call.1} parent=39 // pred_fallthru
          _
        %s242 = sand.u32 %s31, 1
        %s243 = scalar_lea.sflag [#allocation3], %s242
        %s244 = sand.u32 %s31, 1
        %s245 = smul.addr %s244, 256
        %s246 = scalar_lea.vmem [#allocation2], %s245
        %p247 = pneg %p44
        %p248 = pneg %p41
        %p249 = pneg %p65
        %p250 = pneg %p62
        %p251 = pneg %p86
        %p252 = pneg %p83
        %p253 = pneg %p107
        %p254 = pneg %p104
        %p255 = pneg %p128
        %p256 = pneg %p125
        %p257 = pneg %p154
        %p258 = pneg %p151
        %s259 = sand.u32 %s141, 1
        %s260 = scalar_lea.sflag [#allocation4], %s259
        %s261 = sand.u32 %s141, 1
        %s262 = smul.addr %s261, 768
        %s263 = scalar_lea.vmem [#allocation7], %s262
        %s264 = smul.u32 32, %s23
        %s265 = ssub.s32 50, %s264
        %p266 = scmp.lt.s32.totalorder %s265, 32
        %s267 = scalar_select %p266, %s265, 32
        %s268 = smul.u32 128, %s267
        %s269 = smul.u32 32, %s23
        %s270 = ssub.s32 50, %s269
        %p271 = scmp.lt.s32.totalorder %s270, 32
        %s272 = scalar_select %p271, %s270, 32
        %s273 = smul.u32 128, %s272
        %s274 = smul.u32 %s273, 3
        %v275 = vld [vmem:[%s233] sm:$0xff]
        %v276 = vld [vmem:[%s233 + $0x8] sm:$0xff]
        %v277 = vld [vmem:[%s233 + $0x10] sm:$0xff]
        %v278 = vld [vmem:[%s233 + $0x18] sm:$0xff]
        %v279 = vld [vmem:[%s233 + $0x20] sm:$0xff]
        %v280 = vld [vmem:[%s233 + $0x28] sm:$0xff]
        %v281 = vld [vmem:[%s233 + $0x30] sm:$0xff]
        %v282 = vld [vmem:[%s233 + $0x38] sm:$0xff]
        %v283 = vld [vmem:[%s233 + $0x40] sm:$0xff]
        %v284 = vld [vmem:[%s233 + $0x48] sm:$0xff]
        %v285 = vld [vmem:[%s233 + $0x50] sm:$0xff]
        %v286 = vld [vmem:[%s233 + $0x58] sm:$0xff]
        %v287 = vld [vmem:[%s233 + $0x60] sm:$0xff]
        %v288 = vld [vmem:[%s233 + $0x68] sm:$0xff]
        %v289 = vld [vmem:[%s233 + $0x70] sm:$0xff]
        %v290 = vld [vmem:[%s233 + $0x78] sm:$0xff]
        %v291 = vld [vmem:[%s233 + $0x80] sm:$0xff]
        %v292 = vld [vmem:[%s233 + $0x88] sm:$0xff]
        %v293 = vld [vmem:[%s233 + $0x90] sm:$0xff]
        %v294 = vld [vmem:[%s233 + $0x98] sm:$0xff]
        %v295 = vld [vmem:[%s233 + $0xa0] sm:$0xff]
        %v296 = vld [vmem:[%s233 + $0xa8] sm:$0xff]
        %v297 = vld [vmem:[%s233 + $0xb0] sm:$0xff]
        %v298 = vld [vmem:[%s233 + $0xb8] sm:$0xff]
        %v299 = vld [vmem:[%s233 + $0xc0] sm:$0xff]
        %v300 = vld [vmem:[%s233 + $0xc8] sm:$0xff]
        %v301 = vld [vmem:[%s233 + $0xd0] sm:$0xff]
        %v302 = vld [vmem:[%s233 + $0xd8] sm:$0xff]
        %v303 = vld [vmem:[%s233 + $0xe0] sm:$0xff]
        %v304 = vld [vmem:[%s233 + $0xe8] sm:$0xff]
        %v305 = vld [vmem:[%s233 + $0xf0] sm:$0xff]
        %v306 = vld [vmem:[%s233 + $0xf8] sm:$0xff]
        %v307 = vld [vmem:[#allocation5] sm:$0xff]
        %v308 = vld [vmem:[#allocation5 + $0x8] sm:$0xff]
        %v309 = vld [vmem:[#allocation5 + $0x10] sm:$0xff]
        %v310 = vld [vmem:[#allocation5 + $0x18] sm:$0xff]
        %v311 = vld [vmem:[#allocation5 + $0x20] sm:$0xff]
        %v312 = vld [vmem:[#allocation5 + $0x28] sm:$0xff]
        %v313 = vld [vmem:[#allocation5 + $0x30] sm:$0xff]
        %v314 = vld [vmem:[#allocation5 + $0x38] sm:$0xff]
        %v315 = vld [vmem:[#allocation5 + $0x40] sm:$0xff]
        %v316 = vld [vmem:[#allocation5 + $0x48] sm:$0xff]
        %v317 = vld [vmem:[#allocation5 + $0x50] sm:$0xff]
        %v318 = vld [vmem:[#allocation5 + $0x58] sm:$0xff]
        %v319 = vld [vmem:[#allocation5 + $0x60] sm:$0xff]
        %v320 = vld [vmem:[#allocation5 + $0x68] sm:$0xff]
        %v321 = vld [vmem:[#allocation5 + $0x70] sm:$0xff]
        %v322 = vld [vmem:[#allocation5 + $0x78] sm:$0xff]
        %v323 = vld [vmem:[#allocation5 + $0x80] sm:$0xff]
        %v324 = vld [vmem:[#allocation5 + $0x88] sm:$0xff]
        %v325 = vld [vmem:[#allocation5 + $0x90] sm:$0xff]
        %v326 = vld [vmem:[#allocation5 + $0x98] sm:$0xff]
        %v327 = vld [vmem:[#allocation5 + $0xa0] sm:$0xff]
        %v328 = vld [vmem:[#allocation5 + $0xa8] sm:$0xff]
        %v329 = vld [vmem:[#allocation5 + $0xb0] sm:$0xff]
        %v330 = vld [vmem:[#allocation5 + $0xb8] sm:$0xff]
        %v331 = vld [vmem:[#allocation5 + $0xc0] sm:$0xff]
        %v332 = vld [vmem:[#allocation5 + $0xc8] sm:$0xff]
        %v333 = vld [vmem:[#allocation5 + $0xd0] sm:$0xff]
        %v334 = vld [vmem:[#allocation5 + $0xd8] sm:$0xff]
        %v335 = vld [vmem:[#allocation5 + $0xe0] sm:$0xff]
        %v336 = vld [vmem:[#allocation5 + $0xe8] sm:$0xff]
        %v337 = vld [vmem:[#allocation5 + $0xf0] sm:$0xff]
        %v338 = vld [vmem:[#allocation5 + $0xf8] sm:$0xff]
        %v339 = vld [vmem:[#allocation5 + $0x100] sm:$0xff]
        %v340 = vld [vmem:[#allocation5 + $0x108] sm:$0xff]
        %v341 = vld [vmem:[#allocation5 + $0x110] sm:$0xff]
        %v342 = vld [vmem:[#allocation5 + $0x118] sm:$0xff]
        %v343 = vld [vmem:[#allocation5 + $0x120] sm:$0xff]
        %v344 = vld [vmem:[#allocation5 + $0x128] sm:$0xff]
        %v345 = vld [vmem:[#allocation5 + $0x130] sm:$0xff]
        %v346 = vld [vmem:[#allocation5 + $0x138] sm:$0xff]
        %v347 = vld [vmem:[#allocation5 + $0x140] sm:$0xff]
        %v348 = vld [vmem:[#allocation5 + $0x148] sm:$0xff]
        %v349 = vld [vmem:[#allocation5 + $0x150] sm:$0xff]
        %v350 = vld [vmem:[#allocation5 + $0x158] sm:$0xff]
        %v351 = vld [vmem:[#allocation5 + $0x160] sm:$0xff]
        %v352 = vld [vmem:[#allocation5 + $0x168] sm:$0xff]
        %v353 = vld [vmem:[#allocation5 + $0x170] sm:$0xff]
        %v354 = vld [vmem:[#allocation5 + $0x178] sm:$0xff]
        %v355 = vld [vmem:[%s2] sm:$0x7]
        %v357 = vlaneseq
        %v358 = vshrl.u32 %v357, 7
        %v359 = vsub.s32 0, %v358
        %v360 = vrot.slane %v355, %v359
        %v361 = vlaneseq
        %v362 = vshrl.u32 %v361, 7
        %v363 = vsub.s32 1, %v362
        %v364 = vrot.slane %v355, %v363
        %v365 = vlaneseq
        %v366 = vshrl.u32 %v365, 7
        %v367 = vsub.s32 2, %v366
        %v368 = vrot.slane %v355, %v367
        %372 = vmatprep.subr.mxu0 %v308
        %373 = vmatpush1.msra.mxu0 %v307
        %374 = vmatprep.subr.mxu0 %v311
        %375 = vmatpush1.msra.mxu0 %v310
        %376 = vmatprep.subr.mxu0 %v314
        %377 = vmatpush1.msra.mxu0 %v313
        %378 = vmatprep.subr.mxu0 %v317
        %379 = vmatpush1.msra.mxu0 %v316
        %380 = vmatprep.subr.mxu0 %v320
        %381 = vmatpush1.msra.mxu0 %v319
        %382 = vmatprep.subr.mxu0 %v323
        %383 = vmatpush1.msra.mxu0 %v322
        %384 = vmatprep.subr.mxu0 %v326
        %385 = vmatpush1.msra.mxu0 %v325
        %386 = vmatprep.subr.mxu0 %v329
        %387 = vmatpush1.msra.mxu0 %v328
        %388 = vmatprep.subr.mxu0 %v332
        %389 = vmatpush1.msra.mxu0 %v331
        %390 = vmatprep.subr.mxu0 %v335
        %391 = vmatpush1.msra.mxu0 %v334
        %392 = vmatprep.subr.mxu0 %v338
        %393 = vmatpush1.msra.mxu0 %v337
        %394 = vmatprep.subr.mxu0 %v341
        %395 = vmatpush1.msra.mxu0 %v340
        %396 = vmatprep.subr.mxu0 %v344
        %397 = vmatpush1.msra.mxu0 %v343
        %398 = vmatprep.subr.mxu0 %v347
        %399 = vmatpush1.msra.mxu0 %v346
        %400 = vmatprep.subr.mxu0 %v350
        %401 = vmatpush1.msra.mxu0 %v349
        %402 = vmatprep.subr.mxu0 %v353
        %403 = vmatpush1.msra.mxu0 %v352
        %404 = vmatprep.subr.mxu0 0.0
        %405 = vmatpush1.msra.mxu0 0.0
        %406 = vmatprep.subr.mxu0 0.0
        %407 = vmatpush1.msra.mxu0 0.0
        %408 = vmatprep.subr.mxu0 0.0
        %409 = vmatpush1.msra.mxu0 0.0
        %410 = vmatprep.subr.mxu0 0.0
        %411 = vmatpush1.msra.mxu0 0.0
        %412 = vmatprep.subr.mxu0 0.0
        %413 = vmatpush1.msra.mxu0 0.0
        %414 = vmatprep.subr.mxu0 0.0
        %415 = vmatpush1.msra.mxu0 0.0
        %416 = vmatprep.subr.mxu0 0.0
        %417 = vmatpush1.msra.mxu0 0.0
        %418 = vmatprep.subr.mxu0 0.0
        %419 = vmatpush1.msra.mxu0 0.0
        %420 = vmatprep.subr.mxu0 0.0
        %421 = vmatpush1.msra.mxu0 0.0
        %422 = vmatprep.subr.mxu0 0.0
        %423 = vmatpush1.msra.mxu0 0.0
        %424 = vmatprep.subr.mxu0 0.0
        %425 = vmatpush1.msra.mxu0 0.0
        %426 = vmatprep.subr.mxu0 0.0
        %427 = vmatpush1.msra.mxu0 0.0
        %428 = vmatprep.subr.mxu0 0.0
        %429 = vmatpush1.msra.mxu0 0.0
        %430 = vmatprep.subr.mxu0 0.0
        %431 = vmatpush1.msra.mxu0 0.0
        %432 = vmatprep.subr.mxu0 0.0
        %433 = vmatpush1.msra.mxu0 0.0
        %434 = vmatprep.subr.mxu0 0.0
        %435 = vmatpush1.msra.mxu0 0.0
        %436 = vmatprep.mubr.f32.mxu0 0.0
        %437 = vmatmul.mubr.f32.gmra.mrb[0].mxu0 %v275
        %v438 = vpop.f32.mrb[0].mxu0
        %v439 = vadd.f32 %v360, %v438
        %v440 = vpop.f32.mrb[0].mxu0
        %v441 = vadd.f32 %v364, %v440
        %442 = vmatprep.mubr.f32.mxu0 0.0
        %443 = vmatmul.mubr.f32.gmra.mrb[0].mxu0 %v276
        %v444 = vpop.f32.mrb[0].mxu0
        %v445 = vadd.f32 %v360, %v444
        %v446 = vpop.f32.mrb[0].mxu0
        %v447 = vadd.f32 %v364, %v446
        %448 = vmatprep.mubr.f32.mxu0 0.0
        %449 = vmatmul.mubr.f32.gmra.mrb[0].mxu0 %v277
        %v450 = vpop.f32.mrb[0].mxu0
        %v451 = vadd.f32 %v360, %v450
        %v452 = vpop.f32.mrb[0].mxu0
        %v453 = vadd.f32 %v364, %v452
        %454 = vmatprep.mubr.f32.mxu0 0.0
        %455 = vmatmul.mubr.f32.gmra.mrb[0].mxu0 %v278
        %v456 = vpop.f32.mrb[0].mxu0
        %v457 = vadd.f32 %v360, %v456
        %v458 = vpop.f32.mrb[0].mxu0
        %v459 = vadd.f32 %v364, %v458
        %460 = vmatprep.mubr.f32.mxu0 0.0
        %461 = vmatmul.mubr.f32.gmra.mrb[0].mxu0 %v279
        %v462 = vpop.f32.mrb[0].mxu0
        %v463 = vadd.f32 %v360, %v462
        %v464 = vpop.f32.mrb[0].mxu0
        %v465 = vadd.f32 %v364, %v464
        %466 = vmatprep.mubr.f32.mxu0 0.0
        %467 = vmatmul.mubr.f32.gmra.mrb[0].mxu0 %v280
        %v468 = vpop.f32.mrb[0].mxu0
        %v469 = vadd.f32 %v360, %v468
        %v470 = vpop.f32.mrb[0].mxu0
        %v471 = vadd.f32 %v364, %v470
        %472 = vmatprep.mubr.f32.mxu0 0.0
        %473 = vmatmul.mubr.f32.gmra.mrb[0].mxu0 %v281
        %v474 = vpop.f32.mrb[0].mxu0
        %v475 = vadd.f32 %v360, %v474
        %v476 = vpop.f32.mrb[0].mxu0
        %v477 = vadd.f32 %v364, %v476
        %478 = vmatprep.mubr.f32.mxu0 0.0
        %479 = vmatmul.mubr.f32.gmra.mrb[0].mxu0 %v282
        %v480 = vpop.f32.mrb[0].mxu0
        %v481 = vadd.f32 %v360, %v480
        %v482 = vpop.f32.mrb[0].mxu0
        %v483 = vadd.f32 %v364, %v482
        %484 = vmatprep.mubr.f32.mxu0 0.0
        %485 = vmatmul.mubr.f32.gmra.mrb[0].mxu0 %v283
        %v486 = vpop.f32.mrb[0].mxu0
        %v487 = vadd.f32 %v360, %v486
        %v488 = vpop.f32.mrb[0].mxu0
        %v489 = vadd.f32 %v364, %v488
        %490 = vmatprep.mubr.f32.mxu0 0.0
        %491 = vmatmul.mubr.f32.gmra.mrb[0].mxu0 %v284
        %v492 = vpop.f32.mrb[0].mxu0
        %v493 = vadd.f32 %v360, %v492
        %v494 = vpop.f32.mrb[0].mxu0
        %v495 = vadd.f32 %v364, %v494
        %496 = vmatprep.mubr.f32.mxu0 0.0
        %497 = vmatmul.mubr.f32.gmra.mrb[0].mxu0 %v285
        %v498 = vpop.f32.mrb[0].mxu0
        %v499 = vadd.f32 %v360, %v498
        %v500 = vpop.f32.mrb[0].mxu0
        %v501 = vadd.f32 %v364, %v500
        %502 = vmatprep.mubr.f32.mxu0 0.0
        %503 = vmatmul.mubr.f32.gmra.mrb[0].mxu0 %v286
        %v504 = vpop.f32.mrb[0].mxu0
        %v505 = vadd.f32 %v360, %v504
        %v506 = vpop.f32.mrb[0].mxu0
        %v507 = vadd.f32 %v364, %v506
        %508 = vmatprep.mubr.f32.mxu0 0.0
        %509 = vmatmul.mubr.f32.gmra.mrb[0].mxu0 %v287
        %v510 = vpop.f32.mrb[0].mxu0
        %v511 = vadd.f32 %v360, %v510
        %v512 = vpop.f32.mrb[0].mxu0
        %v513 = vadd.f32 %v364, %v512
        %514 = vmatprep.mubr.f32.mxu0 0.0
        %515 = vmatmul.mubr.f32.gmra.mrb[0].mxu0 %v288
        %v516 = vpop.f32.mrb[0].mxu0
        %v517 = vadd.f32 %v360, %v516
        %v518 = vpop.f32.mrb[0].mxu0
        %v519 = vadd.f32 %v364, %v518
        %520 = vmatprep.mubr.f32.mxu0 0.0
        %521 = vmatmul.mubr.f32.gmra.mrb[0].mxu0 %v289
        %v522 = vpop.f32.mrb[0].mxu0
        %v523 = vadd.f32 %v360, %v522
        %v524 = vpop.f32.mrb[0].mxu0
        %v525 = vadd.f32 %v364, %v524
        %526 = vmatprep.mubr.f32.mxu0 0.0
        %527 = vmatmul.mubr.f32.gmra.mrb[0].mxu0 %v290
        %v528 = vpop.f32.mrb[0].mxu0
        %v529 = vadd.f32 %v360, %v528
        %v530 = vpop.f32.mrb[0].mxu0
        %v531 = vadd.f32 %v364, %v530
        %532 = vmatprep.mubr.f32.mxu0 0.0
        %533 = vmatmul.mubr.f32.gmra.mrb[0].mxu0 %v291
        %v534 = vpop.f32.mrb[0].mxu0
        %v535 = vadd.f32 %v360, %v534
        %v536 = vpop.f32.mrb[0].mxu0
        %v537 = vadd.f32 %v364, %v536
        %538 = vmatprep.mubr.f32.mxu0 0.0
        %539 = vmatmul.mubr.f32.gmra.mrb[0].mxu0 %v292
        %v540 = vpop.f32.mrb[0].mxu0
        %v541 = vadd.f32 %v360, %v540
        %v542 = vpop.f32.mrb[0].mxu0
        %v543 = vadd.f32 %v364, %v542
        %544 = vmatprep.mubr.f32.mxu0 0.0
        %545 = vmatmul.mubr.f32.gmra.mrb[0].mxu0 %v293
        %v546 = vpop.f32.mrb[0].mxu0
        %v547 = vadd.f32 %v360, %v546
        %v548 = vpop.f32.mrb[0].mxu0
        %v549 = vadd.f32 %v364, %v548
        %550 = vmatprep.mubr.f32.mxu0 0.0
        %551 = vmatmul.mubr.f32.gmra.mrb[0].mxu0 %v294
        %v552 = vpop.f32.mrb[0].mxu0
        %v553 = vadd.f32 %v360, %v552
        %v554 = vpop.f32.mrb[0].mxu0
        %v555 = vadd.f32 %v364, %v554
        %556 = vmatprep.mubr.f32.mxu0 0.0
        %557 = vmatmul.mubr.f32.gmra.mrb[0].mxu0 %v295
        %v558 = vpop.f32.mrb[0].mxu0
        %v559 = vadd.f32 %v360, %v558
        %v560 = vpop.f32.mrb[0].mxu0
        %v561 = vadd.f32 %v364, %v560
        %562 = vmatprep.mubr.f32.mxu0 0.0
        %563 = vmatmul.mubr.f32.gmra.mrb[0].mxu0 %v296
        %v564 = vpop.f32.mrb[0].mxu0
        %v565 = vadd.f32 %v360, %v564
        %v566 = vpop.f32.mrb[0].mxu0
        %v567 = vadd.f32 %v364, %v566
        %568 = vmatprep.mubr.f32.mxu0 0.0
        %569 = vmatmul.mubr.f32.gmra.mrb[0].mxu0 %v297
        %v570 = vpop.f32.mrb[0].mxu0
        %v571 = vadd.f32 %v360, %v570
        %v572 = vpop.f32.mrb[0].mxu0
        %v573 = vadd.f32 %v364, %v572
        %574 = vmatprep.mubr.f32.mxu0 0.0
        %575 = vmatmul.mubr.f32.gmra.mrb[0].mxu0 %v298
        %v576 = vpop.f32.mrb[0].mxu0
        %v577 = vadd.f32 %v360, %v576
        %v578 = vpop.f32.mrb[0].mxu0
        %v579 = vadd.f32 %v364, %v578
        %580 = vmatprep.mubr.f32.mxu0 0.0
        %581 = vmatmul.mubr.f32.gmra.mrb[0].mxu0 %v299
        %v582 = vpop.f32.mrb[0].mxu0
        %v583 = vadd.f32 %v360, %v582
        %v584 = vpop.f32.mrb[0].mxu0
        %v585 = vadd.f32 %v364, %v584
        %586 = vmatprep.mubr.f32.mxu0 0.0
        %587 = vmatmul.mubr.f32.gmra.mrb[0].mxu0 %v300
        %v588 = vpop.f32.mrb[0].mxu0
        %v589 = vadd.f32 %v360, %v588
        %v590 = vpop.f32.mrb[0].mxu0
        %v591 = vadd.f32 %v364, %v590
        %592 = vmatprep.mubr.f32.mxu0 0.0
        %593 = vmatmul.mubr.f32.gmra.mrb[0].mxu0 %v301
        %v594 = vpop.f32.mrb[0].mxu0
        %v595 = vadd.f32 %v360, %v594
        %v596 = vpop.f32.mrb[0].mxu0
        %v597 = vadd.f32 %v364, %v596
        %598 = vmatprep.mubr.f32.mxu0 0.0
        %599 = vmatmul.mubr.f32.gmra.mrb[0].mxu0 %v302
        %v600 = vpop.f32.mrb[0].mxu0
        %v601 = vadd.f32 %v360, %v600
        %v602 = vpop.f32.mrb[0].mxu0
        %v603 = vadd.f32 %v364, %v602
        %604 = vmatprep.mubr.f32.mxu0 0.0
        %605 = vmatmul.mubr.f32.gmra.mrb[0].mxu0 %v303
        %v606 = vpop.f32.mrb[0].mxu0
        %v607 = vadd.f32 %v360, %v606
        %v608 = vpop.f32.mrb[0].mxu0
        %v609 = vadd.f32 %v364, %v608
        %610 = vmatprep.mubr.f32.mxu0 0.0
        %611 = vmatmul.mubr.f32.gmra.mrb[0].mxu0 %v304
        %v612 = vpop.f32.mrb[0].mxu0
        %v613 = vadd.f32 %v360, %v612
        %v614 = vpop.f32.mrb[0].mxu0
        %v615 = vadd.f32 %v364, %v614
        %616 = vmatprep.mubr.f32.mxu0 0.0
        %617 = vmatmul.mubr.f32.gmra.mrb[0].mxu0 %v305
        %v618 = vpop.f32.mrb[0].mxu0
        %v619 = vadd.f32 %v360, %v618
        %v620 = vpop.f32.mrb[0].mxu0
        %v621 = vadd.f32 %v364, %v620
        %622 = vmatprep.mubr.f32.mxu0 0.0
        %623 = vmatmul.mubr.f32.gmra.mrb[0].mxu0 %v306
        %v624 = vpop.f32.mrb[0].mxu0
        %v625 = vadd.f32 %v360, %v624
        %v626 = vpop.f32.mrb[0].mxu0
        %v627 = vadd.f32 %v364, %v626
        %628 = vdwg.mxu0
        %629 = vmatprep.subr.mxu0 0.0
        %630 = vmatpush1.msra.mxu0 %v309
        %631 = vmatprep.subr.mxu0 0.0
        %632 = vmatpush1.msra.mxu0 %v312
        %633 = vmatprep.subr.mxu0 0.0
        %634 = vmatpush1.msra.mxu0 %v315
        %635 = vmatprep.subr.mxu0 0.0
        %636 = vmatpush1.msra.mxu0 %v318
        %637 = vmatprep.subr.mxu0 0.0
        %638 = vmatpush1.msra.mxu0 %v321
        %639 = vmatprep.subr.mxu0 0.0
        %640 = vmatpush1.msra.mxu0 %v324
        %641 = vmatprep.subr.mxu0 0.0
        %642 = vmatpush1.msra.mxu0 %v327
        %643 = vmatprep.subr.mxu0 0.0
        %644 = vmatpush1.msra.mxu0 %v330
        %645 = vmatprep.subr.mxu0 0.0
        %646 = vmatpush1.msra.mxu0 %v333
        %647 = vmatprep.subr.mxu0 0.0
        %648 = vmatpush1.msra.mxu0 %v336
        %649 = vmatprep.subr.mxu0 0.0
        %650 = vmatpush1.msra.mxu0 %v339
        %651 = vmatprep.subr.mxu0 0.0
        %652 = vmatpush1.msra.mxu0 %v342
        %653 = vmatprep.subr.mxu0 0.0
        %654 = vmatpush1.msra.mxu0 %v345
        %655 = vmatprep.subr.mxu0 0.0
        %656 = vmatpush1.msra.mxu0 %v348
        %657 = vmatprep.subr.mxu0 0.0
        %658 = vmatpush1.msra.mxu0 %v351
        %659 = vmatprep.subr.mxu0 0.0
        %660 = vmatpush1.msra.mxu0 %v354
        %661 = vmatprep.subr.mxu0 0.0
        %662 = vmatpush1.msra.mxu0 0.0
        %663 = vmatprep.subr.mxu0 0.0
        %664 = vmatpush1.msra.mxu0 0.0
        %665 = vmatprep.subr.mxu0 0.0
        %666 = vmatpush1.msra.mxu0 0.0
        %667 = vmatprep.subr.mxu0 0.0
        %668 = vmatpush1.msra.mxu0 0.0
        %669 = vmatprep.subr.mxu0 0.0
        %670 = vmatpush1.msra.mxu0 0.0
        %671 = vmatprep.subr.mxu0 0.0
        %672 = vmatpush1.msra.mxu0 0.0
        %673 = vmatprep.subr.mxu0 0.0
        %674 = vmatpush1.msra.mxu0 0.0
        %675 = vmatprep.subr.mxu0 0.0
        %676 = vmatpush1.msra.mxu0 0.0
        %677 = vmatprep.subr.mxu0 0.0
        %678 = vmatpush1.msra.mxu0 0.0
        %679 = vmatprep.subr.mxu0 0.0
        %680 = vmatpush1.msra.mxu0 0.0
        %681 = vmatprep.subr.mxu0 0.0
        %682 = vmatpush1.msra.mxu0 0.0
        %683 = vmatprep.subr.mxu0 0.0
        %684 = vmatpush1.msra.mxu0 0.0
        %685 = vmatprep.subr.mxu0 0.0
        %686 = vmatpush1.msra.mxu0 0.0
        %687 = vmatprep.subr.mxu0 0.0
        %688 = vmatpush1.msra.mxu0 0.0
        %689 = vmatprep.subr.mxu0 0.0
        %690 = vmatpush1.msra.mxu0 0.0
        %691 = vmatprep.subr.mxu0 0.0
        %692 = vmatpush1.msra.mxu0 0.0
        %693 = vmatprep.mubr.f32.mxu0 0.0
        %694 = vmatmul.mubr.f32.gmra.mrb[0].mxu0 %v275
        %v695 = vpop.f32.mrb[0].mxu0
        %v696 = vadd.f32 %v368, %v695
        %v697 = vpop.f32.mrb[0].mxu0
        %698 = vmatprep.mubr.f32.mxu0 0.0
        %699 = vmatmul.mubr.f32.gmra.mrb[0].mxu0 %v276
        %v700 = vpop.f32.mrb[0].mxu0
        %v701 = vadd.f32 %v368, %v700
        %v702 = vpop.f32.mrb[0].mxu0
        %703 = vmatprep.mubr.f32.mxu0 0.0
        %704 = vmatmul.mubr.f32.gmra.mrb[0].mxu0 %v277
        %v705 = vpop.f32.mrb[0].mxu0
        %v706 = vadd.f32 %v368, %v705
        %v707 = vpop.f32.mrb[0].mxu0
        %708 = vmatprep.mubr.f32.mxu0 0.0
        %709 = vmatmul.mubr.f32.gmra.mrb[0].mxu0 %v278
        %v710 = vpop.f32.mrb[0].mxu0
        %v711 = vadd.f32 %v368, %v710
        %v712 = vpop.f32.mrb[0].mxu0
        %713 = vmatprep.mubr.f32.mxu0 0.0
        %714 = vmatmul.mubr.f32.gmra.mrb[0].mxu0 %v279
        %v715 = vpop.f32.mrb[0].mxu0
        %v716 = vadd.f32 %v368, %v715
        %v717 = vpop.f32.mrb[0].mxu0
        %718 = vmatprep.mubr.f32.mxu0 0.0
        %719 = vmatmul.mubr.f32.gmra.mrb[0].mxu0 %v280
        %v720 = vpop.f32.mrb[0].mxu0
        %v721 = vadd.f32 %v368, %v720
        %v722 = vpop.f32.mrb[0].mxu0
        %723 = vmatprep.mubr.f32.mxu0 0.0
        %724 = vmatmul.mubr.f32.gmra.mrb[0].mxu0 %v281
        %v725 = vpop.f32.mrb[0].mxu0
        %v726 = vadd.f32 %v368, %v725
        %v727 = vpop.f32.mrb[0].mxu0
        %728 = vmatprep.mubr.f32.mxu0 0.0
        %729 = vmatmul.mubr.f32.gmra.mrb[0].mxu0 %v282
        %v730 = vpop.f32.mrb[0].mxu0
        %v731 = vadd.f32 %v368, %v730
        %v732 = vpop.f32.mrb[0].mxu0
        %733 = vmatprep.mubr.f32.mxu0 0.0
        %734 = vmatmul.mubr.f32.gmra.mrb[0].mxu0 %v283
        %v735 = vpop.f32.mrb[0].mxu0
        %v736 = vadd.f32 %v368, %v735
        %v737 = vpop.f32.mrb[0].mxu0
        %738 = vmatprep.mubr.f32.mxu0 0.0
        %739 = vmatmul.mubr.f32.gmra.mrb[0].mxu0 %v284
        %v740 = vpop.f32.mrb[0].mxu0
        %v741 = vadd.f32 %v368, %v740
        %v742 = vpop.f32.mrb[0].mxu0
        %743 = vmatprep.mubr.f32.mxu0 0.0
        %744 = vmatmul.mubr.f32.gmra.mrb[0].mxu0 %v285
        %v745 = vpop.f32.mrb[0].mxu0
        %v746 = vadd.f32 %v368, %v745
        %v747 = vpop.f32.mrb[0].mxu0
        %748 = vmatprep.mubr.f32.mxu0 0.0
        %749 = vmatmul.mubr.f32.gmra.mrb[0].mxu0 %v286
        %v750 = vpop.f32.mrb[0].mxu0
        %v751 = vadd.f32 %v368, %v750
        %v752 = vpop.f32.mrb[0].mxu0
        %753 = vmatprep.mubr.f32.mxu0 0.0
        %754 = vmatmul.mubr.f32.gmra.mrb[0].mxu0 %v287
        %v755 = vpop.f32.mrb[0].mxu0
        %v756 = vadd.f32 %v368, %v755
        %v757 = vpop.f32.mrb[0].mxu0
        %758 = vmatprep.mubr.f32.mxu0 0.0
        %759 = vmatmul.mubr.f32.gmra.mrb[0].mxu0 %v288
        %v760 = vpop.f32.mrb[0].mxu0
        %v761 = vadd.f32 %v368, %v760
        %v762 = vpop.f32.mrb[0].mxu0
        %763 = vmatprep.mubr.f32.mxu0 0.0
        %764 = vmatmul.mubr.f32.gmra.mrb[0].mxu0 %v289
        %v765 = vpop.f32.mrb[0].mxu0
        %v766 = vadd.f32 %v368, %v765
        %v767 = vpop.f32.mrb[0].mxu0
        %768 = vmatprep.mubr.f32.mxu0 0.0
        %769 = vmatmul.mubr.f32.gmra.mrb[0].mxu0 %v290
        %v770 = vpop.f32.mrb[0].mxu0
        %v771 = vadd.f32 %v368, %v770
        %v772 = vpop.f32.mrb[0].mxu0
        %773 = vmatprep.mubr.f32.mxu0 0.0
        %774 = vmatmul.mubr.f32.gmra.mrb[0].mxu0 %v291
        %v775 = vpop.f32.mrb[0].mxu0
        %v776 = vadd.f32 %v368, %v775
        %v777 = vpop.f32.mrb[0].mxu0
        %778 = vmatprep.mubr.f32.mxu0 0.0
        %779 = vmatmul.mubr.f32.gmra.mrb[0].mxu0 %v292
        %v780 = vpop.f32.mrb[0].mxu0
        %v781 = vadd.f32 %v368, %v780
        %v782 = vpop.f32.mrb[0].mxu0
        %783 = vmatprep.mubr.f32.mxu0 0.0
        %784 = vmatmul.mubr.f32.gmra.mrb[0].mxu0 %v293
        %v785 = vpop.f32.mrb[0].mxu0
        %v786 = vadd.f32 %v368, %v785
        %v787 = vpop.f32.mrb[0].mxu0
        %788 = vmatprep.mubr.f32.mxu0 0.0
        %789 = vmatmul.mubr.f32.gmra.mrb[0].mxu0 %v294
        %v790 = vpop.f32.mrb[0].mxu0
        %v791 = vadd.f32 %v368, %v790
        %v792 = vpop.f32.mrb[0].mxu0
        %793 = vmatprep.mubr.f32.mxu0 0.0
        %794 = vmatmul.mubr.f32.gmra.mrb[0].mxu0 %v295
        %v795 = vpop.f32.mrb[0].mxu0
        %v796 = vadd.f32 %v368, %v795
        %v797 = vpop.f32.mrb[0].mxu0
        %798 = vmatprep.mubr.f32.mxu0 0.0
        %799 = vmatmul.mubr.f32.gmra.mrb[0].mxu0 %v296
        %v800 = vpop.f32.mrb[0].mxu0
        %v801 = vadd.f32 %v368, %v800
        %v802 = vpop.f32.mrb[0].mxu0
        %803 = vmatprep.mubr.f32.mxu0 0.0
        %804 = vmatmul.mubr.f32.gmra.mrb[0].mxu0 %v297
        %v805 = vpop.f32.mrb[0].mxu0
        %v806 = vadd.f32 %v368, %v805
        %v807 = vpop.f32.mrb[0].mxu0
        %808 = vmatprep.mubr.f32.mxu0 0.0
        %809 = vmatmul.mubr.f32.gmra.mrb[0].mxu0 %v298
        %v810 = vpop.f32.mrb[0].mxu0
        %v811 = vadd.f32 %v368, %v810
        %v812 = vpop.f32.mrb[0].mxu0
        %813 = vmatprep.mubr.f32.mxu0 0.0
        %814 = vmatmul.mubr.f32.gmra.mrb[0].mxu0 %v299
        %v815 = vpop.f32.mrb[0].mxu0
        %v816 = vadd.f32 %v368, %v815
        %v817 = vpop.f32.mrb[0].mxu0
        %818 = vmatprep.mubr.f32.mxu0 0.0
        %819 = vmatmul.mubr.f32.gmra.mrb[0].mxu0 %v300
        %v820 = vpop.f32.mrb[0].mxu0
        %v821 = vadd.f32 %v368, %v820
        %v822 = vpop.f32.mrb[0].mxu0
        %823 = vmatprep.mubr.f32.mxu0 0.0
        %824 = vmatmul.mubr.f32.gmra.mrb[0].mxu0 %v301
        %v825 = vpop.f32.mrb[0].mxu0
        %v826 = vadd.f32 %v368, %v825
        %v827 = vpop.f32.mrb[0].mxu0
        %828 = vmatprep.mubr.f32.mxu0 0.0
        %829 = vmatmul.mubr.f32.gmra.mrb[0].mxu0 %v302
        %v830 = vpop.f32.mrb[0].mxu0
        %v831 = vadd.f32 %v368, %v830
        %v832 = vpop.f32.mrb[0].mxu0
        %833 = vmatprep.mubr.f32.mxu0 0.0
        %834 = vmatmul.mubr.f32.gmra.mrb[0].mxu0 %v303
        %v835 = vpop.f32.mrb[0].mxu0
        %v836 = vadd.f32 %v368, %v835
        %v837 = vpop.f32.mrb[0].mxu0
        %838 = vmatprep.mubr.f32.mxu0 0.0
        %839 = vmatmul.mubr.f32.gmra.mrb[0].mxu0 %v304
        %v840 = vpop.f32.mrb[0].mxu0
        %v841 = vadd.f32 %v368, %v840
        %v842 = vpop.f32.mrb[0].mxu0
        %843 = vmatprep.mubr.f32.mxu0 0.0
        %844 = vmatmul.mubr.f32.gmra.mrb[0].mxu0 %v305
        %v845 = vpop.f32.mrb[0].mxu0
        %v846 = vadd.f32 %v368, %v845
        %v847 = vpop.f32.mrb[0].mxu0
        %848 = vmatprep.mubr.f32.mxu0 0.0
        %849 = vmatmul.mubr.f32.gmra.mrb[0].mxu0 %v306
        %v850 = vpop.f32.mrb[0].mxu0
        %v851 = vadd.f32 %v368, %v850
        %v852 = vpop.f32.mrb[0].mxu0
        %853 = vdwg.mxu0
        %v854 = vld [vmem:[%s3] sm:$0xff]
        %v855 = vld [vmem:[%s3 + $0x8] sm:$0xff]
        %v856 = vld [vmem:[%s3 + $0x10] sm:$0xff]
        %v857 = vld [vmem:[%s3 + $0x18] sm:$0xff]
        %v858 = vld [vmem:[%s3 + $0x20] sm:$0xff]
        %v859 = vld [vmem:[%s3 + $0x28] sm:$0xff]
        %v860 = vld [vmem:[%s3 + $0x30] sm:$0xff]
        %v861 = vld [vmem:[%s3 + $0x38] sm:$0xff]
        %v862 = vld [vmem:[%s3 + $0x40] sm:$0xff]
        %v863 = vld [vmem:[%s3 + $0x48] sm:$0xff]
        %v864 = vld [vmem:[%s3 + $0x50] sm:$0xff]
        %v865 = vld [vmem:[%s3 + $0x58] sm:$0xff]
        %v866 = vld [vmem:[%s3 + $0x60] sm:$0xff]
        %v867 = vld [vmem:[%s3 + $0x68] sm:$0xff]
        %v868 = vld [vmem:[%s3 + $0x70] sm:$0xff]
        %v869 = vld [vmem:[%s3 + $0x78] sm:$0xff]
        %870 = vmatprep.subr.mxu0 0.0
        %871 = vmatpush1.msra.mxu0 %v854
        %872 = vmatprep.subr.mxu0 0.0
        %873 = vmatpush1.msra.mxu0 %v855
        %874 = vmatprep.subr.mxu0 0.0
        %875 = vmatpush1.msra.mxu0 %v856
        %876 = vmatprep.subr.mxu0 0.0
        %877 = vmatpush1.msra.mxu0 %v857
        %878 = vmatprep.subr.mxu0 0.0
        %879 = vmatpush1.msra.mxu0 %v858
        %880 = vmatprep.subr.mxu0 0.0
        %881 = vmatpush1.msra.mxu0 %v859
        %882 = vmatprep.subr.mxu0 0.0
        %883 = vmatpush1.msra.mxu0 %v860
        %884 = vmatprep.subr.mxu0 0.0
        %885 = vmatpush1.msra.mxu0 %v861
        %886 = vmatprep.subr.mxu0 0.0
        %887 = vmatpush1.msra.mxu0 %v862
        %888 = vmatprep.subr.mxu0 0.0
        %889 = vmatpush1.msra.mxu0 %v863
        %890 = vmatprep.subr.mxu0 0.0
        %891 = vmatpush1.msra.mxu0 %v864
        %892 = vmatprep.subr.mxu0 0.0
        %893 = vmatpush1.msra.mxu0 %v865
        %894 = vmatprep.subr.mxu0 0.0
        %895 = vmatpush1.msra.mxu0 %v866
        %896 = vmatprep.subr.mxu0 0.0
        %897 = vmatpush1.msra.mxu0 %v867
        %898 = vmatprep.subr.mxu0 0.0
        %899 = vmatpush1.msra.mxu0 %v868
        %900 = vmatprep.subr.mxu0 0.0
        %901 = vmatpush1.msra.mxu0 %v869
        %902 = vmatprep.subr.mxu0 0.0
        %903 = vmatpush1.msra.mxu0 0.0
        %904 = vmatprep.subr.mxu0 0.0
        %905 = vmatpush1.msra.mxu0 0.0
        %906 = vmatprep.subr.mxu0 0.0
        %907 = vmatpush1.msra.mxu0 0.0
        %908 = vmatprep.subr.mxu0 0.0
        %909 = vmatpush1.msra.mxu0 0.0
        %910 = vmatprep.subr.mxu0 0.0
        %911 = vmatpush1.msra.mxu0 0.0
        %912 = vmatprep.subr.mxu0 0.0
        %913 = vmatpush1.msra.mxu0 0.0
        %914 = vmatprep.subr.mxu0 0.0
        %915 = vmatpush1.msra.mxu0 0.0
        %916 = vmatprep.subr.mxu0 0.0
        %917 = vmatpush1.msra.mxu0 0.0
        %918 = vmatprep.subr.mxu0 0.0
        %919 = vmatpush1.msra.mxu0 0.0
        %920 = vmatprep.subr.mxu0 0.0
        %921 = vmatpush1.msra.mxu0 0.0
        %922 = vmatprep.subr.mxu0 0.0
        %923 = vmatpush1.msra.mxu0 0.0
        %924 = vmatprep.subr.mxu0 0.0
        %925 = vmatpush1.msra.mxu0 0.0
        %926 = vmatprep.subr.mxu0 0.0
        %927 = vmatpush1.msra.mxu0 0.0
        %928 = vmatprep.subr.mxu0 0.0
        %929 = vmatpush1.msra.mxu0 0.0
        %930 = vmatprep.subr.mxu0 0.0
        %931 = vmatpush1.msra.mxu0 0.0
        %932 = vmatprep.subr.mxu0 0.0
        %933 = vmatpush1.msra.mxu0 0.0
        %934 = vmatprep.mubr.f32.mxu0 0.0
        %935 = vmatmul.mubr.f32.gmra.mrb[0].mxu0 %v275
        %v936 = vpop.f32.mrb[0].mxu0
        %v937 = vadd.f32 0.0, %v936
        %v938 = vpop.f32.mrb[0].mxu0
        %939 = vmatprep.mubr.f32.mxu0 0.0
        %940 = vmatmul.mubr.f32.gmra.mrb[0].mxu0 %v276
        %v941 = vpop.f32.mrb[0].mxu0
        %v942 = vadd.f32 0.0, %v941
        %v943 = vpop.f32.mrb[0].mxu0
        %944 = vmatprep.mubr.f32.mxu0 0.0
        %945 = vmatmul.mubr.f32.gmra.mrb[0].mxu0 %v277
        %v946 = vpop.f32.mrb[0].mxu0
        %v947 = vadd.f32 0.0, %v946
        %v948 = vpop.f32.mrb[0].mxu0
        %949 = vmatprep.mubr.f32.mxu0 0.0
        %950 = vmatmul.mubr.f32.gmra.mrb[0].mxu0 %v278
        %v951 = vpop.f32.mrb[0].mxu0
        %v952 = vadd.f32 0.0, %v951
        %v953 = vpop.f32.mrb[0].mxu0
        %954 = vmatprep.mubr.f32.mxu0 0.0
        %955 = vmatmul.mubr.f32.gmra.mrb[0].mxu0 %v279
        %v956 = vpop.f32.mrb[0].mxu0
        %v957 = vadd.f32 0.0, %v956
        %v958 = vpop.f32.mrb[0].mxu0
        %959 = vmatprep.mubr.f32.mxu0 0.0
        %960 = vmatmul.mubr.f32.gmra.mrb[0].mxu0 %v280
        %v961 = vpop.f32.mrb[0].mxu0
        %v962 = vadd.f32 0.0, %v961
        %v963 = vpop.f32.mrb[0].mxu0
        %964 = vmatprep.mubr.f32.mxu0 0.0
        %965 = vmatmul.mubr.f32.gmra.mrb[0].mxu0 %v281
        %v966 = vpop.f32.mrb[0].mxu0
        %v967 = vadd.f32 0.0, %v966
        %v968 = vpop.f32.mrb[0].mxu0
        %969 = vmatprep.mubr.f32.mxu0 0.0
        %970 = vmatmul.mubr.f32.gmra.mrb[0].mxu0 %v282
        %v971 = vpop.f32.mrb[0].mxu0
        %v972 = vadd.f32 0.0, %v971
        %v973 = vpop.f32.mrb[0].mxu0
        %974 = vmatprep.mubr.f32.mxu0 0.0
        %975 = vmatmul.mubr.f32.gmra.mrb[0].mxu0 %v283
        %v976 = vpop.f32.mrb[0].mxu0
        %v977 = vadd.f32 0.0, %v976
        %v978 = vpop.f32.mrb[0].mxu0
        %979 = vmatprep.mubr.f32.mxu0 0.0
        %980 = vmatmul.mubr.f32.gmra.mrb[0].mxu0 %v284
        %v981 = vpop.f32.mrb[0].mxu0
        %v982 = vadd.f32 0.0, %v981
        %v983 = vpop.f32.mrb[0].mxu0
        %984 = vmatprep.mubr.f32.mxu0 0.0
        %985 = vmatmul.mubr.f32.gmra.mrb[0].mxu0 %v285
        %v986 = vpop.f32.mrb[0].mxu0
        %v987 = vadd.f32 0.0, %v986
        %v988 = vpop.f32.mrb[0].mxu0
        %989 = vmatprep.mubr.f32.mxu0 0.0
        %990 = vmatmul.mubr.f32.gmra.mrb[0].mxu0 %v286
        %v991 = vpop.f32.mrb[0].mxu0
        %v992 = vadd.f32 0.0, %v991
        %v993 = vpop.f32.mrb[0].mxu0
        %994 = vmatprep.mubr.f32.mxu0 0.0
        %995 = vmatmul.mubr.f32.gmra.mrb[0].mxu0 %v287
        %v996 = vpop.f32.mrb[0].mxu0
        %v997 = vadd.f32 0.0, %v996
        %v998 = vpop.f32.mrb[0].mxu0
        %999 = vmatprep.mubr.f32.mxu0 0.0
        %1000 = vmatmul.mubr.f32.gmra.mrb[0].mxu0 %v288
        %v1001 = vpop.f32.mrb[0].mxu0
        %v1002 = vadd.f32 0.0, %v1001
        %v1003 = vpop.f32.mrb[0].mxu0
        %1004 = vmatprep.mubr.f32.mxu0 0.0
        %1005 = vmatmul.mubr.f32.gmra.mrb[0].mxu0 %v289
        %v1006 = vpop.f32.mrb[0].mxu0
        %v1007 = vadd.f32 0.0, %v1006
        %v1008 = vpop.f32.mrb[0].mxu0
        %1009 = vmatprep.mubr.f32.mxu0 0.0
        %1010 = vmatmul.mubr.f32.gmra.mrb[0].mxu0 %v290
        %v1011 = vpop.f32.mrb[0].mxu0
        %v1012 = vadd.f32 0.0, %v1011
        %v1013 = vpop.f32.mrb[0].mxu0
        %1014 = vmatprep.mubr.f32.mxu0 0.0
        %1015 = vmatmul.mubr.f32.gmra.mrb[0].mxu0 %v291
        %v1016 = vpop.f32.mrb[0].mxu0
        %v1017 = vadd.f32 0.0, %v1016
        %v1018 = vpop.f32.mrb[0].mxu0
        %1019 = vmatprep.mubr.f32.mxu0 0.0
        %1020 = vmatmul.mubr.f32.gmra.mrb[0].mxu0 %v292
        %v1021 = vpop.f32.mrb[0].mxu0
        %v1022 = vadd.f32 0.0, %v1021
        %v1023 = vpop.f32.mrb[0].mxu0
        %1024 = vmatprep.mubr.f32.mxu0 0.0
        %1025 = vmatmul.mubr.f32.gmra.mrb[0].mxu0 %v293
        %v1026 = vpop.f32.mrb[0].mxu0
        %v1027 = vadd.f32 0.0, %v1026
        %v1028 = vpop.f32.mrb[0].mxu0
        %1029 = vmatprep.mubr.f32.mxu0 0.0
        %1030 = vmatmul.mubr.f32.gmra.mrb[0].mxu0 %v294
        %v1031 = vpop.f32.mrb[0].mxu0
        %v1032 = vadd.f32 0.0, %v1031
        %v1033 = vpop.f32.mrb[0].mxu0
        %1034 = vmatprep.mubr.f32.mxu0 0.0
        %1035 = vmatmul.mubr.f32.gmra.mrb[0].mxu0 %v295
        %v1036 = vpop.f32.mrb[0].mxu0
        %v1037 = vadd.f32 0.0, %v1036
        %v1038 = vpop.f32.mrb[0].mxu0
        %1039 = vmatprep.mubr.f32.mxu0 0.0
        %1040 = vmatmul.mubr.f32.gmra.mrb[0].mxu0 %v296
        %v1041 = vpop.f32.mrb[0].mxu0
        %v1042 = vadd.f32 0.0, %v1041
        %v1043 = vpop.f32.mrb[0].mxu0
        %1044 = vmatprep.mubr.f32.mxu0 0.0
        %1045 = vmatmul.mubr.f32.gmra.mrb[0].mxu0 %v297
        %v1046 = vpop.f32.mrb[0].mxu0
        %v1047 = vadd.f32 0.0, %v1046
        %v1048 = vpop.f32.mrb[0].mxu0
        %1049 = vmatprep.mubr.f32.mxu0 0.0
        %1050 = vmatmul.mubr.f32.gmra.mrb[0].mxu0 %v298
        %v1051 = vpop.f32.mrb[0].mxu0
        %v1052 = vadd.f32 0.0, %v1051
        %v1053 = vpop.f32.mrb[0].mxu0
        %1054 = vmatprep.mubr.f32.mxu0 0.0
        %1055 = vmatmul.mubr.f32.gmra.mrb[0].mxu0 %v299
        %v1056 = vpop.f32.mrb[0].mxu0
        %v1057 = vadd.f32 0.0, %v1056
        %v1058 = vpop.f32.mrb[0].mxu0
        %1059 = vmatprep.mubr.f32.mxu0 0.0
        %1060 = vmatmul.mubr.f32.gmra.mrb[0].mxu0 %v300
        %v1061 = vpop.f32.mrb[0].mxu0
        %v1062 = vadd.f32 0.0, %v1061
        %v1063 = vpop.f32.mrb[0].mxu0
        %1064 = vmatprep.mubr.f32.mxu0 0.0
        %1065 = vmatmul.mubr.f32.gmra.mrb[0].mxu0 %v301
        %v1066 = vpop.f32.mrb[0].mxu0
        %v1067 = vadd.f32 0.0, %v1066
        %v1068 = vpop.f32.mrb[0].mxu0
        %1069 = vmatprep.mubr.f32.mxu0 0.0
        %1070 = vmatmul.mubr.f32.gmra.mrb[0].mxu0 %v302
        %v1071 = vpop.f32.mrb[0].mxu0
        %v1072 = vadd.f32 0.0, %v1071
        %v1073 = vpop.f32.mrb[0].mxu0
        %1074 = vmatprep.mubr.f32.mxu0 0.0
        %1075 = vmatmul.mubr.f32.gmra.mrb[0].mxu0 %v303
        %v1076 = vpop.f32.mrb[0].mxu0
        %v1077 = vadd.f32 0.0, %v1076
        %v1078 = vpop.f32.mrb[0].mxu0
        %1079 = vmatprep.mubr.f32.mxu0 0.0
        %1080 = vmatmul.mubr.f32.gmra.mrb[0].mxu0 %v304
        %v1081 = vpop.f32.mrb[0].mxu0
        %v1082 = vadd.f32 0.0, %v1081
        %v1083 = vpop.f32.mrb[0].mxu0
        %1084 = vmatprep.mubr.f32.mxu0 0.0
        %1085 = vmatmul.mubr.f32.gmra.mrb[0].mxu0 %v305
        %v1086 = vpop.f32.mrb[0].mxu0
        %v1087 = vadd.f32 0.0, %v1086
        %v1088 = vpop.f32.mrb[0].mxu0
        %1089 = vmatprep.mubr.f32.mxu0 0.0
        %1090 = vmatmul.mubr.f32.gmra.mrb[0].mxu0 %v306
        %v1091 = vpop.f32.mrb[0].mxu0
        %v1092 = vadd.f32 0.0, %v1091
        %v1093 = vpop.f32.mrb[0].mxu0
        %1094 = vdwg.mxu0
        %v1095 = vld [vmem:[%s4] sm:$0xff]
        %v1096 = vld [vmem:[%s4 + $0x8] sm:$0xff]
        %vm1097 = vcmask 64512
        %v1099 = vsel %vm1097, %v937, 0
        %v1102 = vsel %vm1097, %v942, 0
        %v1105 = vsel %vm1097, %v947, 0
        %v1108 = vsel %vm1097, %v952, 0
        %v1111 = vsel %vm1097, %v957, 0
        %v1114 = vsel %vm1097, %v962, 0
        %v1117 = vsel %vm1097, %v967, 0
        %v1120 = vsel %vm1097, %v972, 0
        %v1123 = vsel %vm1097, %v977, 0
        %v1126 = vsel %vm1097, %v982, 0
        %v1129 = vsel %vm1097, %v987, 0
        %v1132 = vsel %vm1097, %v992, 0
        %v1135 = vsel %vm1097, %v997, 0
        %v1138 = vsel %vm1097, %v1002, 0
        %v1141 = vsel %vm1097, %v1007, 0
        %v1144 = vsel %vm1097, %v1012, 0
        %v1147 = vsel %vm1097, %v1017, 0
        %v1150 = vsel %vm1097, %v1022, 0
        %v1153 = vsel %vm1097, %v1027, 0
        %v1156 = vsel %vm1097, %v1032, 0
        %v1159 = vsel %vm1097, %v1037, 0
        %v1162 = vsel %vm1097, %v1042, 0
        %v1165 = vsel %vm1097, %v1047, 0
        %v1168 = vsel %vm1097, %v1052, 0
        %v1171 = vsel %vm1097, %v1057, 0
        %v1174 = vsel %vm1097, %v1062, 0
        %v1177 = vsel %vm1097, %v1067, 0
        %v1180 = vsel %vm1097, %v1072, 0
        %v1183 = vsel %vm1097, %v1077, 0
        %v1186 = vsel %vm1097, %v1082, 0
        %v1189 = vsel %vm1097, %v1087, 0
        %v1192 = vsel %vm1097, %v1092, 0
        %1194 = vmatprep.subr.mxu0 %v1096
        %1195 = vmatpush1.msra.mxu0 %v1095
        %1196 = vmatprep.subr.mxu0 0.0
        %1197 = vmatpush1.msra.mxu0 0.0
        %1198 = vmatprep.subr.mxu0 0.0
        %1199 = vmatpush1.msra.mxu0 0.0
        %1200 = vmatprep.subr.mxu0 0.0
        %1201 = vmatpush1.msra.mxu0 0.0
        %1202 = vmatprep.subr.mxu0 0.0
        %1203 = vmatpush1.msra.mxu0 0.0
        %1204 = vmatprep.subr.mxu0 0.0
        %1205 = vmatpush1.msra.mxu0 0.0
        %1206 = vmatprep.subr.mxu0 0.0
        %1207 = vmatpush1.msra.mxu0 0.0
        %1208 = vmatprep.subr.mxu0 0.0
        %1209 = vmatpush1.msra.mxu0 0.0
        %1210 = vmatprep.subr.mxu0 0.0
        %1211 = vmatpush1.msra.mxu0 0.0
        %1212 = vmatprep.subr.mxu0 0.0
        %1213 = vmatpush1.msra.mxu0 0.0
        %1214 = vmatprep.subr.mxu0 0.0
        %1215 = vmatpush1.msra.mxu0 0.0
        %1216 = vmatprep.subr.mxu0 0.0
        %1217 = vmatpush1.msra.mxu0 0.0
        %1218 = vmatprep.subr.mxu0 0.0
        %1219 = vmatpush1.msra.mxu0 0.0
        %1220 = vmatprep.subr.mxu0 0.0
        %1221 = vmatpush1.msra.mxu0 0.0
        %1222 = vmatprep.subr.mxu0 0.0
        %1223 = vmatpush1.msra.mxu0 0.0
        %1224 = vmatprep.subr.mxu0 0.0
        %1225 = vmatpush1.msra.mxu0 0.0
        %1226 = vmatprep.subr.mxu0 0.0
        %1227 = vmatpush1.msra.mxu0 0.0
        %1228 = vmatprep.subr.mxu0 0.0
        %1229 = vmatpush1.msra.mxu0 0.0
        %1230 = vmatprep.subr.mxu0 0.0
        %1231 = vmatpush1.msra.mxu0 0.0
        %1232 = vmatprep.subr.mxu0 0.0
        %1233 = vmatpush1.msra.mxu0 0.0
        %1234 = vmatprep.subr.mxu0 0.0
        %1235 = vmatpush1.msra.mxu0 0.0
        %1236 = vmatprep.subr.mxu0 0.0
        %1237 = vmatpush1.msra.mxu0 0.0
        %1238 = vmatprep.subr.mxu0 0.0
        %1239 = vmatpush1.msra.mxu0 0.0
        %1240 = vmatprep.subr.mxu0 0.0
        %1241 = vmatpush1.msra.mxu0 0.0
        %1242 = vmatprep.subr.mxu0 0.0
        %1243 = vmatpush1.msra.mxu0 0.0
        %1244 = vmatprep.subr.mxu0 0.0
        %1245 = vmatpush1.msra.mxu0 0.0
        %1246 = vmatprep.subr.mxu0 0.0
        %1247 = vmatpush1.msra.mxu0 0.0
        %1248 = vmatprep.subr.mxu0 0.0
        %1249 = vmatpush1.msra.mxu0 0.0
        %1250 = vmatprep.subr.mxu0 0.0
        %1251 = vmatpush1.msra.mxu0 0.0
        %1252 = vmatprep.subr.mxu0 0.0
        %1253 = vmatpush1.msra.mxu0 0.0
        %1254 = vmatprep.subr.mxu0 0.0
        %1255 = vmatpush1.msra.mxu0 0.0
        %1256 = vmatprep.subr.mxu0 0.0
        %1257 = vmatpush1.msra.mxu0 0.0
        %1258 = vmatprep.mubr.f32.mxu0 0.0
        %1259 = vmatmul.mubr.f32.gmra.mrb[0].mxu0 %v1099
        %v1260 = vpop.f32.mrb[0].mxu0
        %v1261 = vadd.f32 0.0, %v1260
        %v1262 = vpop.f32.mrb[0].mxu0
        %v1263 = vadd.f32 0.0, %v1262
        %1264 = vmatprep.mubr.f32.mxu0 0.0
        %1265 = vmatmul.mubr.f32.gmra.mrb[0].mxu0 %v1102
        %v1266 = vpop.f32.mrb[0].mxu0
        %v1267 = vadd.f32 0.0, %v1266
        %v1268 = vpop.f32.mrb[0].mxu0
        %v1269 = vadd.f32 0.0, %v1268
        %1270 = vmatprep.mubr.f32.mxu0 0.0
        %1271 = vmatmul.mubr.f32.gmra.mrb[0].mxu0 %v1105
        %v1272 = vpop.f32.mrb[0].mxu0
        %v1273 = vadd.f32 0.0, %v1272
        %v1274 = vpop.f32.mrb[0].mxu0
        %v1275 = vadd.f32 0.0, %v1274
        %1276 = vmatprep.mubr.f32.mxu0 0.0
        %1277 = vmatmul.mubr.f32.gmra.mrb[0].mxu0 %v1108
        %v1278 = vpop.f32.mrb[0].mxu0
        %v1279 = vadd.f32 0.0, %v1278
        %v1280 = vpop.f32.mrb[0].mxu0
        %v1281 = vadd.f32 0.0, %v1280
        %1282 = vmatprep.mubr.f32.mxu0 0.0
        %1283 = vmatmul.mubr.f32.gmra.mrb[0].mxu0 %v1111
        %v1284 = vpop.f32.mrb[0].mxu0
        %v1285 = vadd.f32 0.0, %v1284
        %v1286 = vpop.f32.mrb[0].mxu0
        %v1287 = vadd.f32 0.0, %v1286
        %1288 = vmatprep.mubr.f32.mxu0 0.0
        %1289 = vmatmul.mubr.f32.gmra.mrb[0].mxu0 %v1114
        %v1290 = vpop.f32.mrb[0].mxu0
        %v1291 = vadd.f32 0.0, %v1290
        %v1292 = vpop.f32.mrb[0].mxu0
        %v1293 = vadd.f32 0.0, %v1292
        %1294 = vmatprep.mubr.f32.mxu0 0.0
        %1295 = vmatmul.mubr.f32.gmra.mrb[0].mxu0 %v1117
        %v1296 = vpop.f32.mrb[0].mxu0
        %v1297 = vadd.f32 0.0, %v1296
        %v1298 = vpop.f32.mrb[0].mxu0
        %v1299 = vadd.f32 0.0, %v1298
        %1300 = vmatprep.mubr.f32.mxu0 0.0
        %1301 = vmatmul.mubr.f32.gmra.mrb[0].mxu0 %v1120
        %v1302 = vpop.f32.mrb[0].mxu0
        %v1303 = vadd.f32 0.0, %v1302
        %v1304 = vpop.f32.mrb[0].mxu0
        %v1305 = vadd.f32 0.0, %v1304
        %1306 = vmatprep.mubr.f32.mxu0 0.0
        %1307 = vmatmul.mubr.f32.gmra.mrb[0].mxu0 %v1123
        %v1308 = vpop.f32.mrb[0].mxu0
        %v1309 = vadd.f32 0.0, %v1308
        %v1310 = vpop.f32.mrb[0].mxu0
        %v1311 = vadd.f32 0.0, %v1310
        %1312 = vmatprep.mubr.f32.mxu0 0.0
        %1313 = vmatmul.mubr.f32.gmra.mrb[0].mxu0 %v1126
        %v1314 = vpop.f32.mrb[0].mxu0
        %v1315 = vadd.f32 0.0, %v1314
        %v1316 = vpop.f32.mrb[0].mxu0
        %v1317 = vadd.f32 0.0, %v1316
        %1318 = vmatprep.mubr.f32.mxu0 0.0
        %1319 = vmatmul.mubr.f32.gmra.mrb[0].mxu0 %v1129
        %v1320 = vpop.f32.mrb[0].mxu0
        %v1321 = vadd.f32 0.0, %v1320
        %v1322 = vpop.f32.mrb[0].mxu0
        %v1323 = vadd.f32 0.0, %v1322
        %1324 = vmatprep.mubr.f32.mxu0 0.0
        %1325 = vmatmul.mubr.f32.gmra.mrb[0].mxu0 %v1132
        %v1326 = vpop.f32.mrb[0].mxu0
        %v1327 = vadd.f32 0.0, %v1326
        %v1328 = vpop.f32.mrb[0].mxu0
        %v1329 = vadd.f32 0.0, %v1328
        %1330 = vmatprep.mubr.f32.mxu0 0.0
        %1331 = vmatmul.mubr.f32.gmra.mrb[0].mxu0 %v1135
        %v1332 = vpop.f32.mrb[0].mxu0
        %v1333 = vadd.f32 0.0, %v1332
        %v1334 = vpop.f32.mrb[0].mxu0
        %v1335 = vadd.f32 0.0, %v1334
        %1336 = vmatprep.mubr.f32.mxu0 0.0
        %1337 = vmatmul.mubr.f32.gmra.mrb[0].mxu0 %v1138
        %v1338 = vpop.f32.mrb[0].mxu0
        %v1339 = vadd.f32 0.0, %v1338
        %v1340 = vpop.f32.mrb[0].mxu0
        %v1341 = vadd.f32 0.0, %v1340
        %1342 = vmatprep.mubr.f32.mxu0 0.0
        %1343 = vmatmul.mubr.f32.gmra.mrb[0].mxu0 %v1141
        %v1344 = vpop.f32.mrb[0].mxu0
        %v1345 = vadd.f32 0.0, %v1344
        %v1346 = vpop.f32.mrb[0].mxu0
        %v1347 = vadd.f32 0.0, %v1346
        %1348 = vmatprep.mubr.f32.mxu0 0.0
        %1349 = vmatmul.mubr.f32.gmra.mrb[0].mxu0 %v1144
        %v1350 = vpop.f32.mrb[0].mxu0
        %v1351 = vadd.f32 0.0, %v1350
        %v1352 = vpop.f32.mrb[0].mxu0
        %v1353 = vadd.f32 0.0, %v1352
        %1354 = vmatprep.mubr.f32.mxu0 0.0
        %1355 = vmatmul.mubr.f32.gmra.mrb[0].mxu0 %v1147
        %v1356 = vpop.f32.mrb[0].mxu0
        %v1357 = vadd.f32 0.0, %v1356
        %v1358 = vpop.f32.mrb[0].mxu0
        %v1359 = vadd.f32 0.0, %v1358
        %1360 = vmatprep.mubr.f32.mxu0 0.0
        %1361 = vmatmul.mubr.f32.gmra.mrb[0].mxu0 %v1150
        %v1362 = vpop.f32.mrb[0].mxu0
        %v1363 = vadd.f32 0.0, %v1362
        %v1364 = vpop.f32.mrb[0].mxu0
        %v1365 = vadd.f32 0.0, %v1364
        %1366 = vmatprep.mubr.f32.mxu0 0.0
        %1367 = vmatmul.mubr.f32.gmra.mrb[0].mxu0 %v1153
        %v1368 = vpop.f32.mrb[0].mxu0
        %v1369 = vadd.f32 0.0, %v1368
        %v1370 = vpop.f32.mrb[0].mxu0
        %v1371 = vadd.f32 0.0, %v1370
        %1372 = vmatprep.mubr.f32.mxu0 0.0
        %1373 = vmatmul.mubr.f32.gmra.mrb[0].mxu0 %v1156
        %v1374 = vpop.f32.mrb[0].mxu0
        %v1375 = vadd.f32 0.0, %v1374
        %v1376 = vpop.f32.mrb[0].mxu0
        %v1377 = vadd.f32 0.0, %v1376
        %1378 = vmatprep.mubr.f32.mxu0 0.0
        %1379 = vmatmul.mubr.f32.gmra.mrb[0].mxu0 %v1159
        %v1380 = vpop.f32.mrb[0].mxu0
        %v1381 = vadd.f32 0.0, %v1380
        %v1382 = vpop.f32.mrb[0].mxu0
        %v1383 = vadd.f32 0.0, %v1382
        %1384 = vmatprep.mubr.f32.mxu0 0.0
        %1385 = vmatmul.mubr.f32.gmra.mrb[0].mxu0 %v1162
        %v1386 = vpop.f32.mrb[0].mxu0
        %v1387 = vadd.f32 0.0, %v1386
        %v1388 = vpop.f32.mrb[0].mxu0
        %v1389 = vadd.f32 0.0, %v1388
        %1390 = vmatprep.mubr.f32.mxu0 0.0
        %1391 = vmatmul.mubr.f32.gmra.mrb[0].mxu0 %v1165
        %v1392 = vpop.f32.mrb[0].mxu0
        %v1393 = vadd.f32 0.0, %v1392
        %v1394 = vpop.f32.mrb[0].mxu0
        %v1395 = vadd.f32 0.0, %v1394
        %1396 = vmatprep.mubr.f32.mxu0 0.0
        %1397 = vmatmul.mubr.f32.gmra.mrb[0].mxu0 %v1168
        %v1398 = vpop.f32.mrb[0].mxu0
        %v1399 = vadd.f32 0.0, %v1398
        %v1400 = vpop.f32.mrb[0].mxu0
        %v1401 = vadd.f32 0.0, %v1400
        %1402 = vmatprep.mubr.f32.mxu0 0.0
        %1403 = vmatmul.mubr.f32.gmra.mrb[0].mxu0 %v1171
        %v1404 = vpop.f32.mrb[0].mxu0
        %v1405 = vadd.f32 0.0, %v1404
        %v1406 = vpop.f32.mrb[0].mxu0
        %v1407 = vadd.f32 0.0, %v1406
        %1408 = vmatprep.mubr.f32.mxu0 0.0
        %1409 = vmatmul.mubr.f32.gmra.mrb[0].mxu0 %v1174
        %v1410 = vpop.f32.mrb[0].mxu0
        %v1411 = vadd.f32 0.0, %v1410
        %v1412 = vpop.f32.mrb[0].mxu0
        %v1413 = vadd.f32 0.0, %v1412
        %1414 = vmatprep.mubr.f32.mxu0 0.0
        %1415 = vmatmul.mubr.f32.gmra.mrb[0].mxu0 %v1177
        %v1416 = vpop.f32.mrb[0].mxu0
        %v1417 = vadd.f32 0.0, %v1416
        %v1418 = vpop.f32.mrb[0].mxu0
        %v1419 = vadd.f32 0.0, %v1418
        %1420 = vmatprep.mubr.f32.mxu0 0.0
        %1421 = vmatmul.mubr.f32.gmra.mrb[0].mxu0 %v1180
        %v1422 = vpop.f32.mrb[0].mxu0
        %v1423 = vadd.f32 0.0, %v1422
        %v1424 = vpop.f32.mrb[0].mxu0
        %v1425 = vadd.f32 0.0, %v1424
        %1426 = vmatprep.mubr.f32.mxu0 0.0
        %1427 = vmatmul.mubr.f32.gmra.mrb[0].mxu0 %v1183
        %v1428 = vpop.f32.mrb[0].mxu0
        %v1429 = vadd.f32 0.0, %v1428
        %v1430 = vpop.f32.mrb[0].mxu0
        %v1431 = vadd.f32 0.0, %v1430
        %1432 = vmatprep.mubr.f32.mxu0 0.0
        %1433 = vmatmul.mubr.f32.gmra.mrb[0].mxu0 %v1186
        %v1434 = vpop.f32.mrb[0].mxu0
        %v1435 = vadd.f32 0.0, %v1434
        %v1436 = vpop.f32.mrb[0].mxu0
        %v1437 = vadd.f32 0.0, %v1436
        %1438 = vmatprep.mubr.f32.mxu0 0.0
        %1439 = vmatmul.mubr.f32.gmra.mrb[0].mxu0 %v1189
        %v1440 = vpop.f32.mrb[0].mxu0
        %v1441 = vadd.f32 0.0, %v1440
        %v1442 = vpop.f32.mrb[0].mxu0
        %v1443 = vadd.f32 0.0, %v1442
        %1444 = vmatprep.mubr.f32.mxu0 0.0
        %1445 = vmatmul.mubr.f32.gmra.mrb[0].mxu0 %v1192
        %v1446 = vpop.f32.mrb[0].mxu0
        %v1447 = vadd.f32 0.0, %v1446
        %v1448 = vpop.f32.mrb[0].mxu0
        %v1449 = vadd.f32 0.0, %v1448
        %1450 = vdwg.mxu0
        %v1451 = vadd.f32 %v439, %v1261
        %v1452 = vadd.f32 %v445, %v1267
        %v1453 = vadd.f32 %v451, %v1273
        %v1454 = vadd.f32 %v457, %v1279
        %v1455 = vadd.f32 %v463, %v1285
        %v1456 = vadd.f32 %v469, %v1291
        %v1457 = vadd.f32 %v475, %v1297
        %v1458 = vadd.f32 %v481, %v1303
        %v1459 = vadd.f32 %v487, %v1309
        %v1460 = vadd.f32 %v493, %v1315
        %v1461 = vadd.f32 %v499, %v1321
        %v1462 = vadd.f32 %v505, %v1327
        %v1463 = vadd.f32 %v511, %v1333
        %v1464 = vadd.f32 %v517, %v1339
        %v1465 = vadd.f32 %v523, %v1345
        %v1466 = vadd.f32 %v529, %v1351
        %v1467 = vadd.f32 %v535, %v1357
        %v1468 = vadd.f32 %v541, %v1363
        %v1469 = vadd.f32 %v547, %v1369
        %v1470 = vadd.f32 %v553, %v1375
        %v1471 = vadd.f32 %v559, %v1381
        %v1472 = vadd.f32 %v565, %v1387
        %v1473 = vadd.f32 %v571, %v1393
        %v1474 = vadd.f32 %v577, %v1399
        %v1475 = vadd.f32 %v583, %v1405
        %v1476 = vadd.f32 %v589, %v1411
        %v1477 = vadd.f32 %v595, %v1417
        %v1478 = vadd.f32 %v601, %v1423
        %v1479 = vadd.f32 %v607, %v1429
        %v1480 = vadd.f32 %v613, %v1435
        %v1481 = vadd.f32 %v619, %v1441
        %v1482 = vadd.f32 %v625, %v1447
        %1483 = vst [vmem:[%s263] sm:$0xff] %v1451
        %1484 = vst [vmem:[%s263 + $0x18] sm:$0xff] %v1452
        %1485 = vst [vmem:[%s263 + $0x30] sm:$0xff] %v1453
        %1486 = vst [vmem:[%s263 + $0x48] sm:$0xff] %v1454
        %1487 = vst [vmem:[%s263 + $0x60] sm:$0xff] %v1455
        %1488 = vst [vmem:[%s263 + $0x78] sm:$0xff] %v1456
        %1489 = vst [vmem:[%s263 + $0x90] sm:$0xff] %v1457
        %1490 = vst [vmem:[%s263 + $0xa8] sm:$0xff] %v1458
        %1491 = vst [vmem:[%s263 + $0xc0] sm:$0xff] %v1459
        %1492 = vst [vmem:[%s263 + $0xd8] sm:$0xff] %v1460
        %1493 = vst [vmem:[%s263 + $0xf0] sm:$0xff] %v1461
        %1494 = vst [vmem:[%s263 + $0x108] sm:$0xff] %v1462
        %1495 = vst [vmem:[%s263 + $0x120] sm:$0xff] %v1463
        %1496 = vst [vmem:[%s263 + $0x138] sm:$0xff] %v1464
        %1497 = vst [vmem:[%s263 + $0x150] sm:$0xff] %v1465
        %1498 = vst [vmem:[%s263 + $0x168] sm:$0xff] %v1466
        %1499 = vst [vmem:[%s263 + $0x180] sm:$0xff] %v1467
        %1500 = vst [vmem:[%s263 + $0x198] sm:$0xff] %v1468
        %1501 = vst [vmem:[%s263 + $0x1b0] sm:$0xff] %v1469
        %1502 = vst [vmem:[%s263 + $0x1c8] sm:$0xff] %v1470
        %1503 = vst [vmem:[%s263 + $0x1e0] sm:$0xff] %v1471
        %1504 = vst [vmem:[%s263 + $0x1f8] sm:$0xff] %v1472
        %1505 = vst [vmem:[%s263 + $0x210] sm:$0xff] %v1473
        %1506 = vst [vmem:[%s263 + $0x228] sm:$0xff] %v1474
        %1507 = vst [vmem:[%s263 + $0x240] sm:$0xff] %v1475
        %1508 = vst [vmem:[%s263 + $0x258] sm:$0xff] %v1476
        %1509 = vst [vmem:[%s263 + $0x270] sm:$0xff] %v1477
        %1510 = vst [vmem:[%s263 + $0x288] sm:$0xff] %v1478
        %1511 = vst [vmem:[%s263 + $0x2a0] sm:$0xff] %v1479
        %1512 = vst [vmem:[%s263 + $0x2b8] sm:$0xff] %v1480
        %1513 = vst [vmem:[%s263 + $0x2d0] sm:$0xff] %v1481
        %1514 = vst [vmem:[%s263 + $0x2e8] sm:$0xff] %v1482
        %1515 = vst [vmem:[%s263 + $0x8] sm:$0xff] %v441
        %1516 = vst [vmem:[%s263 + $0x20] sm:$0xff] %v447
        %1517 = vst [vmem:[%s263 + $0x38] sm:$0xff] %v453
        %1518 = vst [vmem:[%s263 + $0x50] sm:$0xff] %v459
        %1519 = vst [vmem:[%s263 + $0x68] sm:$0xff] %v465
        %1520 = vst [vmem:[%s263 + $0x80] sm:$0xff] %v471
        %1521 = vst [vmem:[%s263 + $0x98] sm:$0xff] %v477
        %1522 = vst [vmem:[%s263 + $0xb0] sm:$0xff] %v483
        %1523 = vst [vmem:[%s263 + $0xc8] sm:$0xff] %v489
        %1524 = vst [vmem:[%s263 + $0xe0] sm:$0xff] %v495
        %1525 = vst [vmem:[%s263 + $0xf8] sm:$0xff] %v501
        %1526 = vst [vmem:[%s263 + $0x110] sm:$0xff] %v507
        %1527 = vst [vmem:[%s263 + $0x128] sm:$0xff] %v513
        %1528 = vst [vmem:[%s263 + $0x140] sm:$0xff] %v519
        %1529 = vst [vmem:[%s263 + $0x158] sm:$0xff] %v525
        %1530 = vst [vmem:[%s263 + $0x170] sm:$0xff] %v531
        %1531 = vst [vmem:[%s263 + $0x188] sm:$0xff] %v537
        %1532 = vst [vmem:[%s263 + $0x1a0] sm:$0xff] %v543
        %1533 = vst [vmem:[%s263 + $0x1b8] sm:$0xff] %v549
        %1534 = vst [vmem:[%s263 + $0x1d0] sm:$0xff] %v555
        %1535 = vst [vmem:[%s263 + $0x1e8] sm:$0xff] %v561
        %1536 = vst [vmem:[%s263 + $0x200] sm:$0xff] %v567
        %1537 = vst [vmem:[%s263 + $0x218] sm:$0xff] %v573
        %1538 = vst [vmem:[%s263 + $0x230] sm:$0xff] %v579
        %1539 = vst [vmem:[%s263 + $0x248] sm:$0xff] %v585
        %1540 = vst [vmem:[%s263 + $0x260] sm:$0xff] %v591
        %1541 = vst [vmem:[%s263 + $0x278] sm:$0xff] %v597
        %1542 = vst [vmem:[%s263 + $0x290] sm:$0xff] %v603
        %1543 = vst [vmem:[%s263 + $0x2a8] sm:$0xff] %v609
        %1544 = vst [vmem:[%s263 + $0x2c0] sm:$0xff] %v615
        %1545 = vst [vmem:[%s263 + $0x2d8] sm:$0xff] %v621
        %1546 = vst [vmem:[%s263 + $0x2f0] sm:$0xff] %v627
        %v1547 = vadd.f32 %v696, %v1263
        %v1548 = vadd.f32 %v701, %v1269
        %v1549 = vadd.f32 %v706, %v1275
        %v1550 = vadd.f32 %v711, %v1281
        %v1551 = vadd.f32 %v716, %v1287
        %v1552 = vadd.f32 %v721, %v1293
        %v1553 = vadd.f32 %v726, %v1299
        %v1554 = vadd.f32 %v731, %v1305
        %v1555 = vadd.f32 %v736, %v1311
        %v1556 = vadd.f32 %v741, %v1317
        %v1557 = vadd.f32 %v746, %v1323
        %v1558 = vadd.f32 %v751, %v1329
        %v1559 = vadd.f32 %v756, %v1335
        %v1560 = vadd.f32 %v761, %v1341
        %v1561 = vadd.f32 %v766, %v1347
        %v1562 = vadd.f32 %v771, %v1353
        %v1563 = vadd.f32 %v776, %v1359
        %v1564 = vadd.f32 %v781, %v1365
        %v1565 = vadd.f32 %v786, %v1371
        %v1566 = vadd.f32 %v791, %v1377
        %v1567 = vadd.f32 %v796, %v1383
        %v1568 = vadd.f32 %v801, %v1389
        %v1569 = vadd.f32 %v806, %v1395
        %v1570 = vadd.f32 %v811, %v1401
        %v1571 = vadd.f32 %v816, %v1407
        %v1572 = vadd.f32 %v821, %v1413
        %v1573 = vadd.f32 %v826, %v1419
        %v1574 = vadd.f32 %v831, %v1425
        %v1575 = vadd.f32 %v836, %v1431
        %v1576 = vadd.f32 %v841, %v1437
        %v1577 = vadd.f32 %v846, %v1443
        %v1578 = vadd.f32 %v851, %v1449
        %1579 = vst [vmem:[%s263 + $0x10] sm:$0xff] %v1547
        %1580 = vst [vmem:[%s263 + $0x28] sm:$0xff] %v1548
        %1581 = vst [vmem:[%s263 + $0x40] sm:$0xff] %v1549
        %1582 = vst [vmem:[%s263 + $0x58] sm:$0xff] %v1550
        %1583 = vst [vmem:[%s263 + $0x70] sm:$0xff] %v1551
        %1584 = vst [vmem:[%s263 + $0x88] sm:$0xff] %v1552
        %1585 = vst [vmem:[%s263 + $0xa0] sm:$0xff] %v1553
        %1586 = vst [vmem:[%s263 + $0xb8] sm:$0xff] %v1554
        %1587 = vst [vmem:[%s263 + $0xd0] sm:$0xff] %v1555
        %1588 = vst [vmem:[%s263 + $0xe8] sm:$0xff] %v1556
        %1589 = vst [vmem:[%s263 + $0x100] sm:$0xff] %v1557
        %1590 = vst [vmem:[%s263 + $0x118] sm:$0xff] %v1558
        %1591 = vst [vmem:[%s263 + $0x130] sm:$0xff] %v1559
        %1592 = vst [vmem:[%s263 + $0x148] sm:$0xff] %v1560
        %1593 = vst [vmem:[%s263 + $0x160] sm:$0xff] %v1561
        %1594 = vst [vmem:[%s263 + $0x178] sm:$0xff] %v1562
        %1595 = vst [vmem:[%s263 + $0x190] sm:$0xff] %v1563
        %1596 = vst [vmem:[%s263 + $0x1a8] sm:$0xff] %v1564
        %1597 = vst [vmem:[%s263 + $0x1c0] sm:$0xff] %v1565
        %1598 = vst [vmem:[%s263 + $0x1d8] sm:$0xff] %v1566
        %1599 = vst [vmem:[%s263 + $0x1f0] sm:$0xff] %v1567
        %1600 = vst [vmem:[%s263 + $0x208] sm:$0xff] %v1568
        %1601 = vst [vmem:[%s263 + $0x220] sm:$0xff] %v1569
        %1602 = vst [vmem:[%s263 + $0x238] sm:$0xff] %v1570
        %1603 = vst [vmem:[%s263 + $0x250] sm:$0xff] %v1571
        %1604 = vst [vmem:[%s263 + $0x268] sm:$0xff] %v1572
        %1605 = vst [vmem:[%s263 + $0x280] sm:$0xff] %v1573
        %1606 = vst [vmem:[%s263 + $0x298] sm:$0xff] %v1574
        %1607 = vst [vmem:[%s263 + $0x2b0] sm:$0xff] %v1575
        %1608 = vst [vmem:[%s263 + $0x2c8] sm:$0xff] %v1576
        %1609 = vst [vmem:[%s263 + $0x2e0] sm:$0xff] %v1577
        %1610 = vst [vmem:[%s263 + $0x2f8] sm:$0xff] %v1578
        %s1611 = sand.u32 %s141, 1
        %s1612 = scalar_lea.sflag [#allocation4], %s1611
        %s1613 = sand.u32 %s141, 1
        %s1614 = smul.addr %s1613, 768
        %s1615 = scalar_lea.vmem [#allocation7], %s1614
        // Predicated region
        $region49: #{tpu_custom_call.1} parent=39 // pred_check
          %p1616 = pneg %p151
        $region50: #{tpu_custom_call.1} parent=39 // pred_check_branch
          %1618 = sbr.rel (%p1616) target = $region52
        $region51: #{tpu_custom_call.1} parent=39 // pred_region
          %s1619 = smul.u32 32, %s23
          %s1620 = ssub.s32 50, %s1619
          %p1621 = scmp.lt.s32.totalorder %s1620, 32
          %s1622 = scalar_select %p1621, %s1620, 32
          %s1623 = smul.u32 128, %s1622
          %s1624 = smul.u32 %s1623, 3
          %s1626 = ssub.s32 12288, %s1624
          %1627 = vsyncadd %s1612, %s1626
          %p1628 = scmp.ne.s32.totalorder 0, %s1624
          %s1629 = smul.addr %s1619, 3
          %s1630 = smul.addr %s1629, 128
          %s1631 = scalar_lea.hbm %s5, %s1630
          %s1632 = smul.u32 24, %s1622
          %s1633 = sshll.u32 %s1615, 4
          %s1634 = int_to_ptr.vmem [resolvable:$true] %s1633
          %s1635 = sshll.u32 %s1632, 4
          %1639 = dma.vmem_to_hbm [thread:$0]  (%p1628), %s1634, %s1635, %s1631, %s1612, 384, 384, 24
        $region52: #{tpu_custom_call.1} parent=39 // pred_fallthru
          _
      $region40: #{tpu_custom_call.1} parent=5 // pred_fallthru
        _
      %p1640 = scmp.le.s32.totalorder 2, %s18
      // Predicated region
      $region53: #{tpu_custom_call.1} parent=5 // pred_check
        %p1641 = pneg %p1640
      $region54: #{tpu_custom_call.1} parent=5 // pred_check_branch
        %1643 = sbr.rel (%p1641) target = $region56
      $region55: #{tpu_custom_call.1} parent=5 // pred_region
        %s1644 = ssub.s32 %s18, 2
        // Predicated region
        $region57: #{tpu_custom_call.1} parent=55 // pred_check
          %p1645 = pneg %p157
        $region58: #{tpu_custom_call.1} parent=55 // pred_check_branch
          %1647 = sbr.rel (%p1645) target = $region60
        $region59: #{tpu_custom_call.1} parent=55 // pred_region
          %s1648 = sand.u32 %s142, 1
          %s1649 = scalar_lea.sflag [#allocation4], %s1648
          %s1650 = sand.u32 %s142, 1
          %s1651 = smul.addr %s1650, 768
          %s1652 = scalar_lea.vmem [#allocation7], %s1651
          %1653 = dma.done %s1649, 12288
        $region60: #{tpu_custom_call.1} parent=55 // pred_fallthru
          _
      $region56: #{tpu_custom_call.1} parent=5 // pred_fallthru
        _
    $region6: #{tpu_custom_call.1} parent=1 // loop_footer
      %s22 = sadd.s32 1, %s18
    $region7: #{tpu_custom_call.1} parent=1 // loop_footer_branch
      %17 = sbr.rel target = $region3
    $region8: #{tpu_custom_call.1} parent=1 // loop_exit
      _
    %1654 = vsyncpa [#allocation3], 1
    %s1655 = scalar_lea.sflag [#allocation3], 1
    %1656 = vsyncpa %s1655, 1
    %1657 = vsyncpa [#allocation6], 1
    %1658 = vsyncpa [#allocation4], 1
    %s1659 = scalar_lea.sflag [#allocation4], 1
    %1660 = vsyncpa %s1659, 1

// kernel: tpu_custom_call.1
$region0: #{tpu_custom_call.1}
  #allocation0 [shape = 'u32[]', space=smem, size = 0x4, offset = 0x4, fixed_abs, tag = 'smem constant byte address 0x4 - core index']
  #allocation1 [shape = 'u32[144,128]{1,0:T(1,128)}', space=vmem, size = 0x12000, scoped, tag = 'internal scratch']
  %s0 = inlined_call_operand.hbm [shape: f32[400,128], index: 0, kind: input, shape index: {}]
  %s1 = inlined_call_operand.hbm [shape: f32[128,384], index: 1, kind: input, shape index: {}]
  %s2 = inlined_call_operand.vmem [shape: f32[1,384], index: 2, kind: input, shape index: {}]
  %s3 = inlined_call_operand.vmem [shape: f32[128,8], index: 3, kind: input, shape index: {}]
  %s4 = inlined_call_operand.vmem [shape: f32[8,256], index: 4, kind: input, shape index: {}]
  %s5 = inlined_call_operand.hbm [shape: f32[400,384], index: 5, kind: output, shape index: {}]
  %s6 = sld [smem:[#allocation0]]
  $region61: #{tpu_custom_call.1} parent=0
    _
  %s8 = ssub.s32 1, %s6
  %s9 = scalar_select 0, %s8, %s6
  $region1: #{tpu_custom_call.1} parent=0
    #allocation2 [shape = 'u8[262144]{0}', space=vmem, size = 0x40000, scoped, tag = 'input window, operand 0']
    #allocation3 [shape = 's32[2]{0}', space=sflag, size = 0x8, scoped, tag = 'scoped memory for tpu_custom_call.1']
    #allocation4 [shape = 's32[2]{0}', space=sflag, size = 0x8, scoped, tag = 'scoped memory for tpu_custom_call.1']
    #allocation5 [shape = 'u8[196608]{0}', space=vmem, size = 0x30000, scoped, tag = 'input window, operand 1, single buffered']
    #allocation6 [shape = 's32[1]{0}', space=sflag, size = 0x4, scoped, tag = 'scoped memory for tpu_custom_call.1']
    #allocation7 [shape = 'u8[786432]{0}', space=vmem, size = 0xc0000, scoped, tag = 'output window, operand 0']
    %10 = vsyncpa [#allocation3], 0
    %s11 = scalar_lea.sflag [#allocation3], 1
    %12 = vsyncpa %s11, 0
    %13 = vsyncpa [#allocation6], 0
    %14 = vsyncpa [#allocation4], 0
    %s15 = scalar_lea.sflag [#allocation4], 1
    %16 = vsyncpa %s15, 0
    loop: start=0, step=1, limit=4
    $region2: #{tpu_custom_call.1} parent=1 // loop_pre_header
      _
    $region3: #{tpu_custom_call.1} parent=1 // loop_header
      %s18 = sphi 0, %s22
      %p19 = scmp.ge.s32.totalorder %s18, 4
      %s28 = sphi 0, %s30
      %s31 = sphi 0, %s28
      %s32 = sphi 0, %s31
      %s48 = sphi 0, %s32
      %s52 = sphi 0, %s52
      %s54 = sphi 0, %s52
      %s55 = sphi 0, %s54
      %s69 = sphi 0, %s55
      %s73 = sphi 0, %s73
      %s75 = sphi 0, %s73
      %s76 = sphi 0, %s75
      %s90 = sphi 0, %s76
      %s94 = sphi 0, %s94
      %s96 = sphi 0, %s94
      %s97 = sphi 0, %s96
      %s111 = sphi 0, %s97
      %s115 = sphi 0, %s115
      %s117 = sphi 0, %s115
      %s118 = sphi 0, %s117
      %s132 = sphi 0, %s118
      %s138 = sphi 0, %s140
      %s141 = sphi 0, %s138
      %s142 = sphi 0, %s141
      %s158 = sphi 0, %s142
    $region4: #{tpu_custom_call.1} parent=1 // loop_header_branch
      %21 = sbr.rel (%p19) target = $region8
    $region5: #{tpu_custom_call.1} parent=1 // loop_body
      %s23 = ssub.s32 %s18, 1
      %s24 = ssub.s32 %s18, 2
      %s25 = sadd.s32 %s18, 1
      %s26 = ssub.s32 %s18, %s25
      %p27 = scmp.eq.s32.totalorder %s26, 0
      %s29 = sadd.s32 %s28, 1
      %s30 = scalar_select %p27, %s28, %s29
      %p33 = pneg %p27
      %p34 = scmp.eq.s32.totalorder %s18, 1
      %p35 = por %p33, %p34
      %p36 = scmp.ne.s32.totalorder %s28, %s31
      %p37 = scmp.eq.s32.totalorder %s18, 0
      %p38 = por %p36, %p37
      %p39 = scmp.ne.s32.totalorder %s28, %s31
      %p40 = scmp.eq.s32.totalorder %s23, 1
      %p41 = por %p39, %p40
      %p42 = scmp.ne.s32.totalorder %s31, %s32
      %p43 = scmp.eq.s32.totalorder %s23, 0
      %p44 = por %p42, %p43
      %p45 = scmp.ne.s32.totalorder %s31, %s32
      %p46 = scmp.eq.s32.totalorder %s24, 1
      %p47 = por %p45, %p46
      %p49 = scmp.ne.s32.totalorder %s32, %s48
      %p50 = scmp.eq.s32.totalorder %s24, 0
      %p51 = por %p49, %p50
      %s53 = sadd.s32 %s52, 1
      %p56 = scmp.eq.s32.totalorder %s18, 1
      %p57 = scmp.ne.s32.totalorder %s52, %s54
      %p58 = scmp.eq.s32.totalorder %s18, 0
      %p59 = por %p57, %p58
      %p60 = scmp.ne.s32.totalorder %s52, %s54
      %p61 = scmp.eq.s32.totalorder %s23, 1
      %p62 = por %p60, %p61
      %p63 = scmp.ne.s32.totalorder %s54, %s55
      %p64 = scmp.eq.s32.totalorder %s23, 0
      %p65 = por %p63, %p64
      %p66 = scmp.ne.s32.totalorder %s54, %s55
      %p67 = scmp.eq.s32.totalorder %s24, 1
      %p68 = por %p66, %p67
      %p70 = scmp.ne.s32.totalorder %s55, %s69
      %p71 = scmp.eq.s32.totalorder %s24, 0
      %p72 = por %p70, %p71
      %s74 = sadd.s32 %s73, 1
      %p77 = scmp.eq.s32.totalorder %s18, 1
      %p78 = scmp.ne.s32.totalorder %s73, %s75
      %p79 = scmp.eq.s32.totalorder %s18, 0
      %p80 = por %p78, %p79
      %p81 = scmp.ne.s32.totalorder %s73, %s75
      %p82 = scmp.eq.s32.totalorder %s23, 1
      %p83 = por %p81, %p82
      %p84 = scmp.ne.s32.totalorder %s75, %s76
      %p85 = scmp.eq.s32.totalorder %s23, 0
      %p86 = por %p84, %p85
      %p87 = scmp.ne.s32.totalorder %s75, %s76
      %p88 = scmp.eq.s32.totalorder %s24, 1
      %p89 = por %p87, %p88
      %p91 = scmp.ne.s32.totalorder %s76, %s90
      %p92 = scmp.eq.s32.totalorder %s24, 0
      %p93 = por %p91, %p92
      %s95 = sadd.s32 %s94, 1
      %p98 = scmp.eq.s32.totalorder %s18, 1
      %p99 = scmp.ne.s32.totalorder %s94, %s96
      %p100 = scmp.eq.s32.totalorder %s18, 0
      %p101 = por %p99, %p100
      %p102 = scmp.ne.s32.totalorder %s94, %s96
      %p103 = scmp.eq.s32.totalorder %s23, 1
      %p104 = por %p102, %p103
      %p105 = scmp.ne.s32.totalorder %s96, %s97
      %p106 = scmp.eq.s32.totalorder %s23, 0
      %p107 = por %p105, %p106
      %p108 = scmp.ne.s32.totalorder %s96, %s97
      %p109 = scmp.eq.s32.totalorder %s24, 1
      %p110 = por %p108, %p109
      %p112 = scmp.ne.s32.totalorder %s97, %s111
      %p113 = scmp.eq.s32.totalorder %s24, 0
      %p114 = por %p112, %p113
      %s116 = sadd.s32 %s115, 1
      %p119 = scmp.eq.s32.totalorder %s18, 1
      %p120 = scmp.ne.s32.totalorder %s115, %s117
      %p121 = scmp.eq.s32.totalorder %s18, 0
      %p122 = por %p120, %p121
      %p123 = scmp.ne.s32.totalorder %s115, %s117
      %p124 = scmp.eq.s32.totalorder %s23, 1
      %p125 = por %p123, %p124
      %p126 = scmp.ne.s32.totalorder %s117, %s118
      %p127 = scmp.eq.s32.totalorder %s23, 0
      %p128 = por %p126, %p127
      %p129 = scmp.ne.s32.totalorder %s117, %s118
      %p130 = scmp.eq.s32.totalorder %s24, 1
      %p131 = por %p129, %p130
      %p133 = scmp.ne.s32.totalorder %s118, %s132
      %p134 = scmp.eq.s32.totalorder %s24, 0
      %p135 = por %p133, %p134
      %s136 = ssub.s32 %s18, %s25
      %p137 = scmp.eq.s32.totalorder %s136, 0
      %s139 = sadd.s32 %s138, 1
      %s140 = scalar_select %p137, %s138, %s139
      %p143 = pneg %p137
      %p144 = scmp.eq.s32.totalorder %s18, 1
      %p145 = por %p143, %p144
      %p146 = scmp.ne.s32.totalorder %s138, %s141
      %p147 = scmp.eq.s32.totalorder %s18, 0
      %p148 = por %p146, %p147
      %p149 = scmp.ne.s32.totalorder %s138, %s141
      %p150 = scmp.eq.s32.totalorder %s23, 1
      %p151 = por %p149, %p150
      %p152 = scmp.ne.s32.totalorder %s141, %s142
      %p153 = scmp.eq.s32.totalorder %s23, 0
      %p154 = por %p152, %p153
      %p155 = scmp.ne.s32.totalorder %s141, %s142
      %p156 = scmp.eq.s32.totalorder %s24, 1
      %p157 = por %p155, %p156
      %p159 = scmp.ne.s32.totalorder %s142, %s158
      %p160 = scmp.eq.s32.totalorder %s24, 0
      %p161 = por %p159, %p160
      %p162 = scmp.le.s32.totalorder 1, %s18
      %p163 = scmp.lt.s32.totalorder %s18, 3
      %p164 = pnand %p162, %p163
      %p165 = pneg %p164
      // Predicated region
      $region9: #{tpu_custom_call.1} parent=5 // pred_check
        _
      $region10: #{tpu_custom_call.1} parent=5 // pred_check_branch
        %167 = sbr.rel (%p164) target = $region12
      $region11: #{tpu_custom_call.1} parent=5 // pred_region
        %s168 = ssub.s32 %s18, 1
        // Predicated region
        $region13: #{tpu_custom_call.1} parent=11 // pred_check
          %p169 = pneg %p65
        $region14: #{tpu_custom_call.1} parent=11 // pred_check_branch
          %171 = sbr.rel (%p169) target = $region16
        $region15: #{tpu_custom_call.1} parent=11 // pred_region
          %s173 = ssub.s32 6144, 6144
          %174 = vsyncadd [#allocation6], %s173
          %s175 = sshll.u32 [#allocation5], 4
          %s176 = int_to_ptr.vmem [resolvable:$true] %s175
          %181 = dma.hbm_to_vmem [thread:$0]  %s1, 6144, %s176, [#allocation6], 384, 384, 24
        $region16: #{tpu_custom_call.1} parent=11 // pred_fallthru
          _
        // Predicated region
        $region17: #{tpu_custom_call.1} parent=11 // pred_check
          %p182 = pneg %p86
        $region18: #{tpu_custom_call.1} parent=11 // pred_check_branch
          %184 = sbr.rel (%p182) target = $region20
        $region19: #{tpu_custom_call.1} parent=11 // pred_region
          _
        $region20: #{tpu_custom_call.1} parent=11 // pred_fallthru
          _
        // Predicated region
        $region21: #{tpu_custom_call.1} parent=11 // pred_check
          %p185 = pneg %p107
        $region22: #{tpu_custom_call.1} parent=11 // pred_check_branch
          %187 = sbr.rel (%p185) target = $region24
        $region23: #{tpu_custom_call.1} parent=11 // pred_region
          _
        $region24: #{tpu_custom_call.1} parent=11 // pred_fallthru
          _
        // Predicated region
        $region25: #{tpu_custom_call.1} parent=11 // pred_check
          %p188 = pneg %p128
        $region26: #{tpu_custom_call.1} parent=11 // pred_check_branch
          %190 = sbr.rel (%p188) target = $region28
        $region27: #{tpu_custom_call.1} parent=11 // pred_region
          _
        $region28: #{tpu_custom_call.1} parent=11 // pred_fallthru
          _
      $region12: #{tpu_custom_call.1} parent=5 // pred_fallthru
        _
      %p191 = scmp.lt.s32.totalorder %s18, 2
      // Predicated region
      $region29: #{tpu_custom_call.1} parent=5 // pred_check
        %p192 = pneg %p191
      $region30: #{tpu_custom_call.1} parent=5 // pred_check_branch
        %194 = sbr.rel (%p192) target = $region32
      $region31: #{tpu_custom_call.1} parent=5 // pred_region
        // Predicated region
        $region33: #{tpu_custom_call.1} parent=31 // pred_check
          %p195 = pneg %p38
        $region34: #{tpu_custom_call.1} parent=31 // pred_check_branch
          %197 = sbr.rel (%p195) target = $region36
        $region35: #{tpu_custom_call.1} parent=31 // pred_region
          %s198 = sand.u32 %s28, 1
          %s199 = scalar_lea.sflag [#allocation3], %s198
          %s200 = sand.u32 %s28, 1
          %s201 = smul.addr %s200, 256
          %s202 = scalar_lea.vmem [#allocation2], %s201
          %s203 = smul.u32 32, %s18
          %s204 = ssub.s32 50, %s203
          %p205 = scmp.lt.s32.totalorder %s204, 32
          %s206 = scalar_select %p205, %s204, 32
          %s207 = smul.u32 128, %s206
          %s209 = ssub.s32 4096, %s207
          %210 = vsyncadd %s199, %s209
          %p211 = scmp.ne.s32.totalorder 0, %s207
          %s212 = smul.addr %s203, 128
          %s213 = scalar_lea.hbm %s0, %s212
          %s214 = smul.u32 8, %s206
          %s215 = sshll.u32 %s202, 4
          %s216 = int_to_ptr.vmem [resolvable:$true] %s215
          %s217 = sshll.u32 %s214, 4
          %221 = dma.hbm_to_vmem [thread:$0]  (%p211), %s213, %s217, %s216, %s199, 128, 128, 8
        $region36: #{tpu_custom_call.1} parent=31 // pred_fallthru
          _
      $region32: #{tpu_custom_call.1} parent=5 // pred_fallthru
        _
      %p222 = scmp.le.s32.totalorder 1, %s18
      %p223 = scmp.lt.s32.totalorder %s18, 3
      %p224 = pnand %p222, %p223
      %p225 = pneg %p224
      // Predicated region
      $region37: #{tpu_custom_call.1} parent=5 // pred_check
        _
      $region38: #{tpu_custom_call.1} parent=5 // pred_check_branch
        %227 = sbr.rel (%p224) target = $region40
      $region39: #{tpu_custom_call.1} parent=5 // pred_region
        %s228 = ssub.s32 %s18, 1
        %s229 = sand.u32 %s31, 1
        %s230 = scalar_lea.sflag [#allocation3], %s229
        %s231 = sand.u32 %s31, 1
        %s232 = smul.addr %s231, 256
        %s233 = scalar_lea.vmem [#allocation2], %s232
        // Predicated region
        $region41: #{tpu_custom_call.1} parent=39 // pred_check
          %p234 = pneg %p44
        $region42: #{tpu_custom_call.1} parent=39 // pred_check_branch
          %236 = sbr.rel (%p234) target = $region44
        $region43: #{tpu_custom_call.1} parent=39 // pred_region
          %237 = dma.done %s230, 4096
        $region44: #{tpu_custom_call.1} parent=39 // pred_fallthru
          _
        // Predicated region
        $region45: #{tpu_custom_call.1} parent=39 // pred_check
          %p238 = pneg %p65
        $region46: #{tpu_custom_call.1} parent=39 // pred_check_branch
          %240 = sbr.rel (%p238) target = $region48
        $region47: #{tpu_custom_call.1} parent=39 // pred_region
          %241 = dma.done [#allocation6], 6144
        $region48: #{tpu_custom_call.1} parent=39 // pred_fallthru
          _
        %s242 = sand.u32 %s31, 1
        %s243 = scalar_lea.sflag [#allocation3], %s242
        %s244 = sand.u32 %s31, 1
        %s245 = smul.addr %s244, 256
        %s246 = scalar_lea.vmem [#allocation2], %s245
        %p247 = pneg %p44
        %p248 = pneg %p41
        %p249 = pneg %p65
        %p250 = pneg %p62
        %p251 = pneg %p86
        %p252 = pneg %p83
        %p253 = pneg %p107
        %p254 = pneg %p104
        %p255 = pneg %p128
        %p256 = pneg %p125
        %p257 = pneg %p154
        %p258 = pneg %p151
        %s259 = sand.u32 %s141, 1
        %s260 = scalar_lea.sflag [#allocation4], %s259
        %s261 = sand.u32 %s141, 1
        %s262 = smul.addr %s261, 768
        %s263 = scalar_lea.vmem [#allocation7], %s262
        %s264 = smul.u32 32, %s23
        %s265 = ssub.s32 50, %s264
        %p266 = scmp.lt.s32.totalorder %s265, 32
        %s267 = scalar_select %p266, %s265, 32
        %s268 = smul.u32 128, %s267
        %s269 = smul.u32 32, %s23
        %s270 = ssub.s32 50, %s269
        %p271 = scmp.lt.s32.totalorder %s270, 32
        %s272 = scalar_select %p271, %s270, 32
        %s273 = smul.u32 128, %s272
        %s274 = smul.u32 %s273, 3
        %v275 = vld [vmem:[%s233] sm:$0xff]
        %v276 = vld [vmem:[%s233 + $0x8] sm:$0xff]
        %v277 = vld [vmem:[%s233 + $0x10] sm:$0xff]
        %v278 = vld [vmem:[%s233 + $0x18] sm:$0xff]
        %v279 = vld [vmem:[%s233 + $0x20] sm:$0xff]
        %v280 = vld [vmem:[%s233 + $0x28] sm:$0xff]
        %v281 = vld [vmem:[%s233 + $0x30] sm:$0xff]
        %v282 = vld [vmem:[%s233 + $0x38] sm:$0xff]
        %v283 = vld [vmem:[%s233 + $0x40] sm:$0xff]
        %v284 = vld [vmem:[%s233 + $0x48] sm:$0xff]
        %v285 = vld [vmem:[%s233 + $0x50] sm:$0xff]
        %v286 = vld [vmem:[%s233 + $0x58] sm:$0xff]
        %v287 = vld [vmem:[%s233 + $0x60] sm:$0xff]
        %v288 = vld [vmem:[%s233 + $0x68] sm:$0xff]
        %v289 = vld [vmem:[%s233 + $0x70] sm:$0xff]
        %v290 = vld [vmem:[%s233 + $0x78] sm:$0xff]
        %v291 = vld [vmem:[%s233 + $0x80] sm:$0xff]
        %v292 = vld [vmem:[%s233 + $0x88] sm:$0xff]
        %v293 = vld [vmem:[%s233 + $0x90] sm:$0xff]
        %v294 = vld [vmem:[%s233 + $0x98] sm:$0xff]
        %v295 = vld [vmem:[%s233 + $0xa0] sm:$0xff]
        %v296 = vld [vmem:[%s233 + $0xa8] sm:$0xff]
        %v297 = vld [vmem:[%s233 + $0xb0] sm:$0xff]
        %v298 = vld [vmem:[%s233 + $0xb8] sm:$0xff]
        %v299 = vld [vmem:[%s233 + $0xc0] sm:$0xff]
        %v300 = vld [vmem:[%s233 + $0xc8] sm:$0xff]
        %v301 = vld [vmem:[%s233 + $0xd0] sm:$0xff]
        %v302 = vld [vmem:[%s233 + $0xd8] sm:$0xff]
        %v303 = vld [vmem:[%s233 + $0xe0] sm:$0xff]
        %v304 = vld [vmem:[%s233 + $0xe8] sm:$0xff]
        %v305 = vld [vmem:[%s233 + $0xf0] sm:$0xff]
        %v306 = vld [vmem:[%s233 + $0xf8] sm:$0xff]
        %v307 = vld [vmem:[#allocation5] sm:$0xff]
        %v308 = vld [vmem:[#allocation5 + $0x8] sm:$0xff]
        %v309 = vld [vmem:[#allocation5 + $0x10] sm:$0xff]
        %v310 = vld [vmem:[#allocation5 + $0x18] sm:$0xff]
        %v311 = vld [vmem:[#allocation5 + $0x20] sm:$0xff]
        %v312 = vld [vmem:[#allocation5 + $0x28] sm:$0xff]
        %v313 = vld [vmem:[#allocation5 + $0x30] sm:$0xff]
        %v314 = vld [vmem:[#allocation5 + $0x38] sm:$0xff]
        %v315 = vld [vmem:[#allocation5 + $0x40] sm:$0xff]
        %v316 = vld [vmem:[#allocation5 + $0x48] sm:$0xff]
        %v317 = vld [vmem:[#allocation5 + $0x50] sm:$0xff]
        %v318 = vld [vmem:[#allocation5 + $0x58] sm:$0xff]
        %v319 = vld [vmem:[#allocation5 + $0x60] sm:$0xff]
        %v320 = vld [vmem:[#allocation5 + $0x68] sm:$0xff]
        %v321 = vld [vmem:[#allocation5 + $0x70] sm:$0xff]
        %v322 = vld [vmem:[#allocation5 + $0x78] sm:$0xff]
        %v323 = vld [vmem:[#allocation5 + $0x80] sm:$0xff]
        %v324 = vld [vmem:[#allocation5 + $0x88] sm:$0xff]
        %v325 = vld [vmem:[#allocation5 + $0x90] sm:$0xff]
        %v326 = vld [vmem:[#allocation5 + $0x98] sm:$0xff]
        %v327 = vld [vmem:[#allocation5 + $0xa0] sm:$0xff]
        %v328 = vld [vmem:[#allocation5 + $0xa8] sm:$0xff]
        %v329 = vld [vmem:[#allocation5 + $0xb0] sm:$0xff]
        %v330 = vld [vmem:[#allocation5 + $0xb8] sm:$0xff]
        %v331 = vld [vmem:[#allocation5 + $0xc0] sm:$0xff]
        %v332 = vld [vmem:[#allocation5 + $0xc8] sm:$0xff]
        %v333 = vld [vmem:[#allocation5 + $0xd0] sm:$0xff]
        %v334 = vld [vmem:[#allocation5 + $0xd8] sm:$0xff]
        %v335 = vld [vmem:[#allocation5 + $0xe0] sm:$0xff]
        %v336 = vld [vmem:[#allocation5 + $0xe8] sm:$0xff]
        %v337 = vld [vmem:[#allocation5 + $0xf0] sm:$0xff]
        %v338 = vld [vmem:[#allocation5 + $0xf8] sm:$0xff]
        %v339 = vld [vmem:[#allocation5 + $0x100] sm:$0xff]
        %v340 = vld [vmem:[#allocation5 + $0x108] sm:$0xff]
        %v341 = vld [vmem:[#allocation5 + $0x110] sm:$0xff]
        %v342 = vld [vmem:[#allocation5 + $0x118] sm:$0xff]
        %v343 = vld [vmem:[#allocation5 + $0x120] sm:$0xff]
        %v344 = vld [vmem:[#allocation5 + $0x128] sm:$0xff]
        %v345 = vld [vmem:[#allocation5 + $0x130] sm:$0xff]
        %v346 = vld [vmem:[#allocation5 + $0x138] sm:$0xff]
        %v347 = vld [vmem:[#allocation5 + $0x140] sm:$0xff]
        %v348 = vld [vmem:[#allocation5 + $0x148] sm:$0xff]
        %v349 = vld [vmem:[#allocation5 + $0x150] sm:$0xff]
        %v350 = vld [vmem:[#allocation5 + $0x158] sm:$0xff]
        %v351 = vld [vmem:[#allocation5 + $0x160] sm:$0xff]
        %v352 = vld [vmem:[#allocation5 + $0x168] sm:$0xff]
        %v353 = vld [vmem:[#allocation5 + $0x170] sm:$0xff]
        %v354 = vld [vmem:[#allocation5 + $0x178] sm:$0xff]
        %v355 = vld [vmem:[%s2] sm:$0x7]
        %v357 = vlaneseq
        %v358 = vshrl.u32 %v357, 7
        %v359 = vsub.s32 0, %v358
        %v360 = vrot.slane %v355, %v359
        %v361 = vlaneseq
        %v362 = vshrl.u32 %v361, 7
        %v363 = vsub.s32 1, %v362
        %v364 = vrot.slane %v355, %v363
        %v365 = vlaneseq
        %v366 = vshrl.u32 %v365, 7
        %v367 = vsub.s32 2, %v366
        %v368 = vrot.slane %v355, %v367
        %372 = vmatprep.subr.mxu0 %v308
        %373 = vmatpush1.msra.mxu0 %v307
        %374 = vmatprep.subr.mxu0 %v311
        %375 = vmatpush1.msra.mxu0 %v310
        %376 = vmatprep.subr.mxu0 %v314
        %377 = vmatpush1.msra.mxu0 %v313
        %378 = vmatprep.subr.mxu0 %v317
        %379 = vmatpush1.msra.mxu0 %v316
        %380 = vmatprep.subr.mxu0 %v320
        %381 = vmatpush1.msra.mxu0 %v319
        %382 = vmatprep.subr.mxu0 %v323
        %383 = vmatpush1.msra.mxu0 %v322
        %384 = vmatprep.subr.mxu0 %v326
        %385 = vmatpush1.msra.mxu0 %v325
        %386 = vmatprep.subr.mxu0 %v329
        %387 = vmatpush1.msra.mxu0 %v328
        %388 = vmatprep.subr.mxu0 %v332
        %389 = vmatpush1.msra.mxu0 %v331
        %390 = vmatprep.subr.mxu0 %v335
        %391 = vmatpush1.msra.mxu0 %v334
        %392 = vmatprep.subr.mxu0 %v338
        %393 = vmatpush1.msra.mxu0 %v337
        %394 = vmatprep.subr.mxu0 %v341
        %395 = vmatpush1.msra.mxu0 %v340
        %396 = vmatprep.subr.mxu0 %v344
        %397 = vmatpush1.msra.mxu0 %v343
        %398 = vmatprep.subr.mxu0 %v347
        %399 = vmatpush1.msra.mxu0 %v346
        %400 = vmatprep.subr.mxu0 %v350
        %401 = vmatpush1.msra.mxu0 %v349
        %402 = vmatprep.subr.mxu0 %v353
        %403 = vmatpush1.msra.mxu0 %v352
        %404 = vmatprep.subr.mxu0 0.0
        %405 = vmatpush1.msra.mxu0 0.0
        %406 = vmatprep.subr.mxu0 0.0
        %407 = vmatpush1.msra.mxu0 0.0
        %408 = vmatprep.subr.mxu0 0.0
        %409 = vmatpush1.msra.mxu0 0.0
        %410 = vmatprep.subr.mxu0 0.0
        %411 = vmatpush1.msra.mxu0 0.0
        %412 = vmatprep.subr.mxu0 0.0
        %413 = vmatpush1.msra.mxu0 0.0
        %414 = vmatprep.subr.mxu0 0.0
        %415 = vmatpush1.msra.mxu0 0.0
        %416 = vmatprep.subr.mxu0 0.0
        %417 = vmatpush1.msra.mxu0 0.0
        %418 = vmatprep.subr.mxu0 0.0
        %419 = vmatpush1.msra.mxu0 0.0
        %420 = vmatprep.subr.mxu0 0.0
        %421 = vmatpush1.msra.mxu0 0.0
        %422 = vmatprep.subr.mxu0 0.0
        %423 = vmatpush1.msra.mxu0 0.0
        %424 = vmatprep.subr.mxu0 0.0
        %425 = vmatpush1.msra.mxu0 0.0
        %426 = vmatprep.subr.mxu0 0.0
        %427 = vmatpush1.msra.mxu0 0.0
        %428 = vmatprep.subr.mxu0 0.0
        %429 = vmatpush1.msra.mxu0 0.0
        %430 = vmatprep.subr.mxu0 0.0
        %431 = vmatpush1.msra.mxu0 0.0
        %432 = vmatprep.subr.mxu0 0.0
        %433 = vmatpush1.msra.mxu0 0.0
        %434 = vmatprep.subr.mxu0 0.0
        %435 = vmatpush1.msra.mxu0 0.0
        %436 = vmatprep.mubr.f32.mxu0 0.0
        %437 = vmatmul.mubr.f32.gmra.mrb[0].mxu0 %v275
        %v438 = vpop.f32.mrb[0].mxu0
        %v439 = vadd.f32 %v360, %v438
        %v440 = vpop.f32.mrb[0].mxu0
        %v441 = vadd.f32 %v364, %v440
        %442 = vmatprep.mubr.f32.mxu0 0.0
        %443 = vmatmul.mubr.f32.gmra.mrb[0].mxu0 %v276
        %v444 = vpop.f32.mrb[0].mxu0
        %v445 = vadd.f32 %v360, %v444
        %v446 = vpop.f32.mrb[0].mxu0
        %v447 = vadd.f32 %v364, %v446
        %448 = vmatprep.mubr.f32.mxu0 0.0
        %449 = vmatmul.mubr.f32.gmra.mrb[0].mxu0 %v277
        %v450 = vpop.f32.mrb[0].mxu0
        %v451 = vadd.f32 %v360, %v450
        %v452 = vpop.f32.mrb[0].mxu0
        %v453 = vadd.f32 %v364, %v452
        %454 = vmatprep.mubr.f32.mxu0 0.0
        %455 = vmatmul.mubr.f32.gmra.mrb[0].mxu0 %v278
        %v456 = vpop.f32.mrb[0].mxu0
        %v457 = vadd.f32 %v360, %v456
        %v458 = vpop.f32.mrb[0].mxu0
        %v459 = vadd.f32 %v364, %v458
        %460 = vmatprep.mubr.f32.mxu0 0.0
        %461 = vmatmul.mubr.f32.gmra.mrb[0].mxu0 %v279
        %v462 = vpop.f32.mrb[0].mxu0
        %v463 = vadd.f32 %v360, %v462
        %v464 = vpop.f32.mrb[0].mxu0
        %v465 = vadd.f32 %v364, %v464
        %466 = vmatprep.mubr.f32.mxu0 0.0
        %467 = vmatmul.mubr.f32.gmra.mrb[0].mxu0 %v280
        %v468 = vpop.f32.mrb[0].mxu0
        %v469 = vadd.f32 %v360, %v468
        %v470 = vpop.f32.mrb[0].mxu0
        %v471 = vadd.f32 %v364, %v470
        %472 = vmatprep.mubr.f32.mxu0 0.0
        %473 = vmatmul.mubr.f32.gmra.mrb[0].mxu0 %v281
        %v474 = vpop.f32.mrb[0].mxu0
        %v475 = vadd.f32 %v360, %v474
        %v476 = vpop.f32.mrb[0].mxu0
        %v477 = vadd.f32 %v364, %v476
        %478 = vmatprep.mubr.f32.mxu0 0.0
        %479 = vmatmul.mubr.f32.gmra.mrb[0].mxu0 %v282
        %v480 = vpop.f32.mrb[0].mxu0
        %v481 = vadd.f32 %v360, %v480
        %v482 = vpop.f32.mrb[0].mxu0
        %v483 = vadd.f32 %v364, %v482
        %484 = vmatprep.mubr.f32.mxu0 0.0
        %485 = vmatmul.mubr.f32.gmra.mrb[0].mxu0 %v283
        %v486 = vpop.f32.mrb[0].mxu0
        %v487 = vadd.f32 %v360, %v486
        %v488 = vpop.f32.mrb[0].mxu0
        %v489 = vadd.f32 %v364, %v488
        %490 = vmatprep.mubr.f32.mxu0 0.0
        %491 = vmatmul.mubr.f32.gmra.mrb[0].mxu0 %v284
        %v492 = vpop.f32.mrb[0].mxu0
        %v493 = vadd.f32 %v360, %v492
        %v494 = vpop.f32.mrb[0].mxu0
        %v495 = vadd.f32 %v364, %v494
        %496 = vmatprep.mubr.f32.mxu0 0.0
        %497 = vmatmul.mubr.f32.gmra.mrb[0].mxu0 %v285
        %v498 = vpop.f32.mrb[0].mxu0
        %v499 = vadd.f32 %v360, %v498
        %v500 = vpop.f32.mrb[0].mxu0
        %v501 = vadd.f32 %v364, %v500
        %502 = vmatprep.mubr.f32.mxu0 0.0
        %503 = vmatmul.mubr.f32.gmra.mrb[0].mxu0 %v286
        %v504 = vpop.f32.mrb[0].mxu0
        %v505 = vadd.f32 %v360, %v504
        %v506 = vpop.f32.mrb[0].mxu0
        %v507 = vadd.f32 %v364, %v506
        %508 = vmatprep.mubr.f32.mxu0 0.0
        %509 = vmatmul.mubr.f32.gmra.mrb[0].mxu0 %v287
        %v510 = vpop.f32.mrb[0].mxu0
        %v511 = vadd.f32 %v360, %v510
        %v512 = vpop.f32.mrb[0].mxu0
        %v513 = vadd.f32 %v364, %v512
        %514 = vmatprep.mubr.f32.mxu0 0.0
        %515 = vmatmul.mubr.f32.gmra.mrb[0].mxu0 %v288
        %v516 = vpop.f32.mrb[0].mxu0
        %v517 = vadd.f32 %v360, %v516
        %v518 = vpop.f32.mrb[0].mxu0
        %v519 = vadd.f32 %v364, %v518
        %520 = vmatprep.mubr.f32.mxu0 0.0
        %521 = vmatmul.mubr.f32.gmra.mrb[0].mxu0 %v289
        %v522 = vpop.f32.mrb[0].mxu0
        %v523 = vadd.f32 %v360, %v522
        %v524 = vpop.f32.mrb[0].mxu0
        %v525 = vadd.f32 %v364, %v524
        %526 = vmatprep.mubr.f32.mxu0 0.0
        %527 = vmatmul.mubr.f32.gmra.mrb[0].mxu0 %v290
        %v528 = vpop.f32.mrb[0].mxu0
        %v529 = vadd.f32 %v360, %v528
        %v530 = vpop.f32.mrb[0].mxu0
        %v531 = vadd.f32 %v364, %v530
        %532 = vmatprep.mubr.f32.mxu0 0.0
        %533 = vmatmul.mubr.f32.gmra.mrb[0].mxu0 %v291
        %v534 = vpop.f32.mrb[0].mxu0
        %v535 = vadd.f32 %v360, %v534
        %v536 = vpop.f32.mrb[0].mxu0
        %v537 = vadd.f32 %v364, %v536
        %538 = vmatprep.mubr.f32.mxu0 0.0
        %539 = vmatmul.mubr.f32.gmra.mrb[0].mxu0 %v292
        %v540 = vpop.f32.mrb[0].mxu0
        %v541 = vadd.f32 %v360, %v540
        %v542 = vpop.f32.mrb[0].mxu0
        %v543 = vadd.f32 %v364, %v542
        %544 = vmatprep.mubr.f32.mxu0 0.0
        %545 = vmatmul.mubr.f32.gmra.mrb[0].mxu0 %v293
        %v546 = vpop.f32.mrb[0].mxu0
        %v547 = vadd.f32 %v360, %v546
        %v548 = vpop.f32.mrb[0].mxu0
        %v549 = vadd.f32 %v364, %v548
        %550 = vmatprep.mubr.f32.mxu0 0.0
        %551 = vmatmul.mubr.f32.gmra.mrb[0].mxu0 %v294
        %v552 = vpop.f32.mrb[0].mxu0
        %v553 = vadd.f32 %v360, %v552
        %v554 = vpop.f32.mrb[0].mxu0
        %v555 = vadd.f32 %v364, %v554
        %556 = vmatprep.mubr.f32.mxu0 0.0
        %557 = vmatmul.mubr.f32.gmra.mrb[0].mxu0 %v295
        %v558 = vpop.f32.mrb[0].mxu0
        %v559 = vadd.f32 %v360, %v558
        %v560 = vpop.f32.mrb[0].mxu0
        %v561 = vadd.f32 %v364, %v560
        %562 = vmatprep.mubr.f32.mxu0 0.0
        %563 = vmatmul.mubr.f32.gmra.mrb[0].mxu0 %v296
        %v564 = vpop.f32.mrb[0].mxu0
        %v565 = vadd.f32 %v360, %v564
        %v566 = vpop.f32.mrb[0].mxu0
        %v567 = vadd.f32 %v364, %v566
        %568 = vmatprep.mubr.f32.mxu0 0.0
        %569 = vmatmul.mubr.f32.gmra.mrb[0].mxu0 %v297
        %v570 = vpop.f32.mrb[0].mxu0
        %v571 = vadd.f32 %v360, %v570
        %v572 = vpop.f32.mrb[0].mxu0
        %v573 = vadd.f32 %v364, %v572
        %574 = vmatprep.mubr.f32.mxu0 0.0
        %575 = vmatmul.mubr.f32.gmra.mrb[0].mxu0 %v298
        %v576 = vpop.f32.mrb[0].mxu0
        %v577 = vadd.f32 %v360, %v576
        %v578 = vpop.f32.mrb[0].mxu0
        %v579 = vadd.f32 %v364, %v578
        %580 = vmatprep.mubr.f32.mxu0 0.0
        %581 = vmatmul.mubr.f32.gmra.mrb[0].mxu0 %v299
        %v582 = vpop.f32.mrb[0].mxu0
        %v583 = vadd.f32 %v360, %v582
        %v584 = vpop.f32.mrb[0].mxu0
        %v585 = vadd.f32 %v364, %v584
        %586 = vmatprep.mubr.f32.mxu0 0.0
        %587 = vmatmul.mubr.f32.gmra.mrb[0].mxu0 %v300
        %v588 = vpop.f32.mrb[0].mxu0
        %v589 = vadd.f32 %v360, %v588
        %v590 = vpop.f32.mrb[0].mxu0
        %v591 = vadd.f32 %v364, %v590
        %592 = vmatprep.mubr.f32.mxu0 0.0
        %593 = vmatmul.mubr.f32.gmra.mrb[0].mxu0 %v301
        %v594 = vpop.f32.mrb[0].mxu0
        %v595 = vadd.f32 %v360, %v594
        %v596 = vpop.f32.mrb[0].mxu0
        %v597 = vadd.f32 %v364, %v596
        %598 = vmatprep.mubr.f32.mxu0 0.0
        %599 = vmatmul.mubr.f32.gmra.mrb[0].mxu0 %v302
        %v600 = vpop.f32.mrb[0].mxu0
        %v601 = vadd.f32 %v360, %v600
        %v602 = vpop.f32.mrb[0].mxu0
        %v603 = vadd.f32 %v364, %v602
        %604 = vmatprep.mubr.f32.mxu0 0.0
        %605 = vmatmul.mubr.f32.gmra.mrb[0].mxu0 %v303
        %v606 = vpop.f32.mrb[0].mxu0
        %v607 = vadd.f32 %v360, %v606
        %v608 = vpop.f32.mrb[0].mxu0
        %v609 = vadd.f32 %v364, %v608
        %610 = vmatprep.mubr.f32.mxu0 0.0
        %611 = vmatmul.mubr.f32.gmra.mrb[0].mxu0 %v304
        %v612 = vpop.f32.mrb[0].mxu0
        %v613 = vadd.f32 %v360, %v612
        %v614 = vpop.f32.mrb[0].mxu0
        %v615 = vadd.f32 %v364, %v614
        %616 = vmatprep.mubr.f32.mxu0 0.0
        %617 = vmatmul.mubr.f32.gmra.mrb[0].mxu0 %v305
        %v618 = vpop.f32.mrb[0].mxu0
        %v619 = vadd.f32 %v360, %v618
        %v620 = vpop.f32.mrb[0].mxu0
        %v621 = vadd.f32 %v364, %v620
        %622 = vmatprep.mubr.f32.mxu0 0.0
        %623 = vmatmul.mubr.f32.gmra.mrb[0].mxu0 %v306
        %v624 = vpop.f32.mrb[0].mxu0
        %v625 = vadd.f32 %v360, %v624
        %v626 = vpop.f32.mrb[0].mxu0
        %v627 = vadd.f32 %v364, %v626
        %628 = vdwg.mxu0
        %629 = vmatprep.subr.mxu0 0.0
        %630 = vmatpush1.msra.mxu0 %v309
        %631 = vmatprep.subr.mxu0 0.0
        %632 = vmatpush1.msra.mxu0 %v312
        %633 = vmatprep.subr.mxu0 0.0
        %634 = vmatpush1.msra.mxu0 %v315
        %635 = vmatprep.subr.mxu0 0.0
        %636 = vmatpush1.msra.mxu0 %v318
        %637 = vmatprep.subr.mxu0 0.0
        %638 = vmatpush1.msra.mxu0 %v321
        %639 = vmatprep.subr.mxu0 0.0
        %640 = vmatpush1.msra.mxu0 %v324
        %641 = vmatprep.subr.mxu0 0.0
        %642 = vmatpush1.msra.mxu0 %v327
        %643 = vmatprep.subr.mxu0 0.0
        %644 = vmatpush1.msra.mxu0 %v330
        %645 = vmatprep.subr.mxu0 0.0
        %646 = vmatpush1.msra.mxu0 %v333
        %647 = vmatprep.subr.mxu0 0.0
        %648 = vmatpush1.msra.mxu0 %v336
        %649 = vmatprep.subr.mxu0 0.0
        %650 = vmatpush1.msra.mxu0 %v339
        %651 = vmatprep.subr.mxu0 0.0
        %652 = vmatpush1.msra.mxu0 %v342
        %653 = vmatprep.subr.mxu0 0.0
        %654 = vmatpush1.msra.mxu0 %v345
        %655 = vmatprep.subr.mxu0 0.0
        %656 = vmatpush1.msra.mxu0 %v348
        %657 = vmatprep.subr.mxu0 0.0
        %658 = vmatpush1.msra.mxu0 %v351
        %659 = vmatprep.subr.mxu0 0.0
        %660 = vmatpush1.msra.mxu0 %v354
        %661 = vmatprep.subr.mxu0 0.0
        %662 = vmatpush1.msra.mxu0 0.0
        %663 = vmatprep.subr.mxu0 0.0
        %664 = vmatpush1.msra.mxu0 0.0
        %665 = vmatprep.subr.mxu0 0.0
        %666 = vmatpush1.msra.mxu0 0.0
        %667 = vmatprep.subr.mxu0 0.0
        %668 = vmatpush1.msra.mxu0 0.0
        %669 = vmatprep.subr.mxu0 0.0
        %670 = vmatpush1.msra.mxu0 0.0
        %671 = vmatprep.subr.mxu0 0.0
        %672 = vmatpush1.msra.mxu0 0.0
        %673 = vmatprep.subr.mxu0 0.0
        %674 = vmatpush1.msra.mxu0 0.0
        %675 = vmatprep.subr.mxu0 0.0
        %676 = vmatpush1.msra.mxu0 0.0
        %677 = vmatprep.subr.mxu0 0.0
        %678 = vmatpush1.msra.mxu0 0.0
        %679 = vmatprep.subr.mxu0 0.0
        %680 = vmatpush1.msra.mxu0 0.0
        %681 = vmatprep.subr.mxu0 0.0
        %682 = vmatpush1.msra.mxu0 0.0
        %683 = vmatprep.subr.mxu0 0.0
        %684 = vmatpush1.msra.mxu0 0.0
        %685 = vmatprep.subr.mxu0 0.0
        %686 = vmatpush1.msra.mxu0 0.0
        %687 = vmatprep.subr.mxu0 0.0
        %688 = vmatpush1.msra.mxu0 0.0
        %689 = vmatprep.subr.mxu0 0.0
        %690 = vmatpush1.msra.mxu0 0.0
        %691 = vmatprep.subr.mxu0 0.0
        %692 = vmatpush1.msra.mxu0 0.0
        %693 = vmatprep.mubr.f32.mxu0 0.0
        %694 = vmatmul.mubr.f32.gmra.mrb[0].mxu0 %v275
        %v695 = vpop.f32.mrb[0].mxu0
        %v696 = vadd.f32 %v368, %v695
        %v697 = vpop.f32.mrb[0].mxu0
        %698 = vmatprep.mubr.f32.mxu0 0.0
        %699 = vmatmul.mubr.f32.gmra.mrb[0].mxu0 %v276
        %v700 = vpop.f32.mrb[0].mxu0
        %v701 = vadd.f32 %v368, %v700
        %v702 = vpop.f32.mrb[0].mxu0
        %703 = vmatprep.mubr.f32.mxu0 0.0
        %704 = vmatmul.mubr.f32.gmra.mrb[0].mxu0 %v277
        %v705 = vpop.f32.mrb[0].mxu0
        %v706 = vadd.f32 %v368, %v705
        %v707 = vpop.f32.mrb[0].mxu0
        %708 = vmatprep.mubr.f32.mxu0 0.0
        %709 = vmatmul.mubr.f32.gmra.mrb[0].mxu0 %v278
        %v710 = vpop.f32.mrb[0].mxu0
        %v711 = vadd.f32 %v368, %v710
        %v712 = vpop.f32.mrb[0].mxu0
        %713 = vmatprep.mubr.f32.mxu0 0.0
        %714 = vmatmul.mubr.f32.gmra.mrb[0].mxu0 %v279
        %v715 = vpop.f32.mrb[0].mxu0
        %v716 = vadd.f32 %v368, %v715
        %v717 = vpop.f32.mrb[0].mxu0
        %718 = vmatprep.mubr.f32.mxu0 0.0
        %719 = vmatmul.mubr.f32.gmra.mrb[0].mxu0 %v280
        %v720 = vpop.f32.mrb[0].mxu0
        %v721 = vadd.f32 %v368, %v720
        %v722 = vpop.f32.mrb[0].mxu0
        %723 = vmatprep.mubr.f32.mxu0 0.0
        %724 = vmatmul.mubr.f32.gmra.mrb[0].mxu0 %v281
        %v725 = vpop.f32.mrb[0].mxu0
        %v726 = vadd.f32 %v368, %v725
        %v727 = vpop.f32.mrb[0].mxu0
        %728 = vmatprep.mubr.f32.mxu0 0.0
        %729 = vmatmul.mubr.f32.gmra.mrb[0].mxu0 %v282
        %v730 = vpop.f32.mrb[0].mxu0
        %v731 = vadd.f32 %v368, %v730
        %v732 = vpop.f32.mrb[0].mxu0
        %733 = vmatprep.mubr.f32.mxu0 0.0
        %734 = vmatmul.mubr.f32.gmra.mrb[0].mxu0 %v283
        %v735 = vpop.f32.mrb[0].mxu0
        %v736 = vadd.f32 %v368, %v735
        %v737 = vpop.f32.mrb[0].mxu0
        %738 = vmatprep.mubr.f32.mxu0 0.0
        %739 = vmatmul.mubr.f32.gmra.mrb[0].mxu0 %v284
        %v740 = vpop.f32.mrb[0].mxu0
        %v741 = vadd.f32 %v368, %v740
        %v742 = vpop.f32.mrb[0].mxu0
        %743 = vmatprep.mubr.f32.mxu0 0.0
        %744 = vmatmul.mubr.f32.gmra.mrb[0].mxu0 %v285
        %v745 = vpop.f32.mrb[0].mxu0
        %v746 = vadd.f32 %v368, %v745
        %v747 = vpop.f32.mrb[0].mxu0
        %748 = vmatprep.mubr.f32.mxu0 0.0
        %749 = vmatmul.mubr.f32.gmra.mrb[0].mxu0 %v286
        %v750 = vpop.f32.mrb[0].mxu0
        %v751 = vadd.f32 %v368, %v750
        %v752 = vpop.f32.mrb[0].mxu0
        %753 = vmatprep.mubr.f32.mxu0 0.0
        %754 = vmatmul.mubr.f32.gmra.mrb[0].mxu0 %v287
        %v755 = vpop.f32.mrb[0].mxu0
        %v756 = vadd.f32 %v368, %v755
        %v757 = vpop.f32.mrb[0].mxu0
        %758 = vmatprep.mubr.f32.mxu0 0.0
        %759 = vmatmul.mubr.f32.gmra.mrb[0].mxu0 %v288
        %v760 = vpop.f32.mrb[0].mxu0
        %v761 = vadd.f32 %v368, %v760
        %v762 = vpop.f32.mrb[0].mxu0
        %763 = vmatprep.mubr.f32.mxu0 0.0
        %764 = vmatmul.mubr.f32.gmra.mrb[0].mxu0 %v289
        %v765 = vpop.f32.mrb[0].mxu0
        %v766 = vadd.f32 %v368, %v765
        %v767 = vpop.f32.mrb[0].mxu0
        %768 = vmatprep.mubr.f32.mxu0 0.0
        %769 = vmatmul.mubr.f32.gmra.mrb[0].mxu0 %v290
        %v770 = vpop.f32.mrb[0].mxu0
        %v771 = vadd.f32 %v368, %v770
        %v772 = vpop.f32.mrb[0].mxu0
        %773 = vmatprep.mubr.f32.mxu0 0.0
        %774 = vmatmul.mubr.f32.gmra.mrb[0].mxu0 %v291
        %v775 = vpop.f32.mrb[0].mxu0
        %v776 = vadd.f32 %v368, %v775
        %v777 = vpop.f32.mrb[0].mxu0
        %778 = vmatprep.mubr.f32.mxu0 0.0
        %779 = vmatmul.mubr.f32.gmra.mrb[0].mxu0 %v292
        %v780 = vpop.f32.mrb[0].mxu0
        %v781 = vadd.f32 %v368, %v780
        %v782 = vpop.f32.mrb[0].mxu0
        %783 = vmatprep.mubr.f32.mxu0 0.0
        %784 = vmatmul.mubr.f32.gmra.mrb[0].mxu0 %v293
        %v785 = vpop.f32.mrb[0].mxu0
        %v786 = vadd.f32 %v368, %v785
        %v787 = vpop.f32.mrb[0].mxu0
        %788 = vmatprep.mubr.f32.mxu0 0.0
        %789 = vmatmul.mubr.f32.gmra.mrb[0].mxu0 %v294
        %v790 = vpop.f32.mrb[0].mxu0
        %v791 = vadd.f32 %v368, %v790
        %v792 = vpop.f32.mrb[0].mxu0
        %793 = vmatprep.mubr.f32.mxu0 0.0
        %794 = vmatmul.mubr.f32.gmra.mrb[0].mxu0 %v295
        %v795 = vpop.f32.mrb[0].mxu0
        %v796 = vadd.f32 %v368, %v795
        %v797 = vpop.f32.mrb[0].mxu0
        %798 = vmatprep.mubr.f32.mxu0 0.0
        %799 = vmatmul.mubr.f32.gmra.mrb[0].mxu0 %v296
        %v800 = vpop.f32.mrb[0].mxu0
        %v801 = vadd.f32 %v368, %v800
        %v802 = vpop.f32.mrb[0].mxu0
        %803 = vmatprep.mubr.f32.mxu0 0.0
        %804 = vmatmul.mubr.f32.gmra.mrb[0].mxu0 %v297
        %v805 = vpop.f32.mrb[0].mxu0
        %v806 = vadd.f32 %v368, %v805
        %v807 = vpop.f32.mrb[0].mxu0
        %808 = vmatprep.mubr.f32.mxu0 0.0
        %809 = vmatmul.mubr.f32.gmra.mrb[0].mxu0 %v298
        %v810 = vpop.f32.mrb[0].mxu0
        %v811 = vadd.f32 %v368, %v810
        %v812 = vpop.f32.mrb[0].mxu0
        %813 = vmatprep.mubr.f32.mxu0 0.0
        %814 = vmatmul.mubr.f32.gmra.mrb[0].mxu0 %v299
        %v815 = vpop.f32.mrb[0].mxu0
        %v816 = vadd.f32 %v368, %v815
        %v817 = vpop.f32.mrb[0].mxu0
        %818 = vmatprep.mubr.f32.mxu0 0.0
        %819 = vmatmul.mubr.f32.gmra.mrb[0].mxu0 %v300
        %v820 = vpop.f32.mrb[0].mxu0
        %v821 = vadd.f32 %v368, %v820
        %v822 = vpop.f32.mrb[0].mxu0
        %823 = vmatprep.mubr.f32.mxu0 0.0
        %824 = vmatmul.mubr.f32.gmra.mrb[0].mxu0 %v301
        %v825 = vpop.f32.mrb[0].mxu0
        %v826 = vadd.f32 %v368, %v825
        %v827 = vpop.f32.mrb[0].mxu0
        %828 = vmatprep.mubr.f32.mxu0 0.0
        %829 = vmatmul.mubr.f32.gmra.mrb[0].mxu0 %v302
        %v830 = vpop.f32.mrb[0].mxu0
        %v831 = vadd.f32 %v368, %v830
        %v832 = vpop.f32.mrb[0].mxu0
        %833 = vmatprep.mubr.f32.mxu0 0.0
        %834 = vmatmul.mubr.f32.gmra.mrb[0].mxu0 %v303
        %v835 = vpop.f32.mrb[0].mxu0
        %v836 = vadd.f32 %v368, %v835
        %v837 = vpop.f32.mrb[0].mxu0
        %838 = vmatprep.mubr.f32.mxu0 0.0
        %839 = vmatmul.mubr.f32.gmra.mrb[0].mxu0 %v304
        %v840 = vpop.f32.mrb[0].mxu0
        %v841 = vadd.f32 %v368, %v840
        %v842 = vpop.f32.mrb[0].mxu0
        %843 = vmatprep.mubr.f32.mxu0 0.0
        %844 = vmatmul.mubr.f32.gmra.mrb[0].mxu0 %v305
        %v845 = vpop.f32.mrb[0].mxu0
        %v846 = vadd.f32 %v368, %v845
        %v847 = vpop.f32.mrb[0].mxu0
        %848 = vmatprep.mubr.f32.mxu0 0.0
        %849 = vmatmul.mubr.f32.gmra.mrb[0].mxu0 %v306
        %v850 = vpop.f32.mrb[0].mxu0
        %v851 = vadd.f32 %v368, %v850
        %v852 = vpop.f32.mrb[0].mxu0
        %853 = vdwg.mxu0
        %v854 = vld [vmem:[%s3] sm:$0xff]
        %v855 = vld [vmem:[%s3 + $0x8] sm:$0xff]
        %v856 = vld [vmem:[%s3 + $0x10] sm:$0xff]
        %v857 = vld [vmem:[%s3 + $0x18] sm:$0xff]
        %v858 = vld [vmem:[%s3 + $0x20] sm:$0xff]
        %v859 = vld [vmem:[%s3 + $0x28] sm:$0xff]
        %v860 = vld [vmem:[%s3 + $0x30] sm:$0xff]
        %v861 = vld [vmem:[%s3 + $0x38] sm:$0xff]
        %v862 = vld [vmem:[%s3 + $0x40] sm:$0xff]
        %v863 = vld [vmem:[%s3 + $0x48] sm:$0xff]
        %v864 = vld [vmem:[%s3 + $0x50] sm:$0xff]
        %v865 = vld [vmem:[%s3 + $0x58] sm:$0xff]
        %v866 = vld [vmem:[%s3 + $0x60] sm:$0xff]
        %v867 = vld [vmem:[%s3 + $0x68] sm:$0xff]
        %v868 = vld [vmem:[%s3 + $0x70] sm:$0xff]
        %v869 = vld [vmem:[%s3 + $0x78] sm:$0xff]
        %870 = vmatprep.subr.mxu0 0.0
        %871 = vmatpush1.msra.mxu0 %v854
        %872 = vmatprep.subr.mxu0 0.0
        %873 = vmatpush1.msra.mxu0 %v855
        %874 = vmatprep.subr.mxu0 0.0
        %875 = vmatpush1.msra.mxu0 %v856
        %876 = vmatprep.subr.mxu0 0.0
        %877 = vmatpush1.msra.mxu0 %v857
        %878 = vmatprep.subr.mxu0 0.0
        %879 = vmatpush1.msra.mxu0 %v858
        %880 = vmatprep.subr.mxu0 0.0
        %881 = vmatpush1.msra.mxu0 %v859
        %882 = vmatprep.subr.mxu0 0.0
        %883 = vmatpush1.msra.mxu0 %v860
        %884 = vmatprep.subr.mxu0 0.0
        %885 = vmatpush1.msra.mxu0 %v861
        %886 = vmatprep.subr.mxu0 0.0
        %887 = vmatpush1.msra.mxu0 %v862
        %888 = vmatprep.subr.mxu0 0.0
        %889 = vmatpush1.msra.mxu0 %v863
        %890 = vmatprep.subr.mxu0 0.0
        %891 = vmatpush1.msra.mxu0 %v864
        %892 = vmatprep.subr.mxu0 0.0
        %893 = vmatpush1.msra.mxu0 %v865
        %894 = vmatprep.subr.mxu0 0.0
        %895 = vmatpush1.msra.mxu0 %v866
        %896 = vmatprep.subr.mxu0 0.0
        %897 = vmatpush1.msra.mxu0 %v867
        %898 = vmatprep.subr.mxu0 0.0
        %899 = vmatpush1.msra.mxu0 %v868
        %900 = vmatprep.subr.mxu0 0.0
        %901 = vmatpush1.msra.mxu0 %v869
        %902 = vmatprep.subr.mxu0 0.0
        %903 = vmatpush1.msra.mxu0 0.0
        %904 = vmatprep.subr.mxu0 0.0
        %905 = vmatpush1.msra.mxu0 0.0
        %906 = vmatprep.subr.mxu0 0.0
        %907 = vmatpush1.msra.mxu0 0.0
        %908 = vmatprep.subr.mxu0 0.0
        %909 = vmatpush1.msra.mxu0 0.0
        %910 = vmatprep.subr.mxu0 0.0
        %911 = vmatpush1.msra.mxu0 0.0
        %912 = vmatprep.subr.mxu0 0.0
        %913 = vmatpush1.msra.mxu0 0.0
        %914 = vmatprep.subr.mxu0 0.0
        %915 = vmatpush1.msra.mxu0 0.0
        %916 = vmatprep.subr.mxu0 0.0
        %917 = vmatpush1.msra.mxu0 0.0
        %918 = vmatprep.subr.mxu0 0.0
        %919 = vmatpush1.msra.mxu0 0.0
        %920 = vmatprep.subr.mxu0 0.0
        %921 = vmatpush1.msra.mxu0 0.0
        %922 = vmatprep.subr.mxu0 0.0
        %923 = vmatpush1.msra.mxu0 0.0
        %924 = vmatprep.subr.mxu0 0.0
        %925 = vmatpush1.msra.mxu0 0.0
        %926 = vmatprep.subr.mxu0 0.0
        %927 = vmatpush1.msra.mxu0 0.0
        %928 = vmatprep.subr.mxu0 0.0
        %929 = vmatpush1.msra.mxu0 0.0
        %930 = vmatprep.subr.mxu0 0.0
        %931 = vmatpush1.msra.mxu0 0.0
        %932 = vmatprep.subr.mxu0 0.0
        %933 = vmatpush1.msra.mxu0 0.0
        %934 = vmatprep.mubr.f32.mxu0 0.0
        %935 = vmatmul.mubr.f32.gmra.mrb[0].mxu0 %v275
        %v936 = vpop.f32.mrb[0].mxu0
        %v937 = vadd.f32 0.0, %v936
        %v938 = vpop.f32.mrb[0].mxu0
        %939 = vmatprep.mubr.f32.mxu0 0.0
        %940 = vmatmul.mubr.f32.gmra.mrb[0].mxu0 %v276
        %v941 = vpop.f32.mrb[0].mxu0
        %v942 = vadd.f32 0.0, %v941
        %v943 = vpop.f32.mrb[0].mxu0
        %944 = vmatprep.mubr.f32.mxu0 0.0
        %945 = vmatmul.mubr.f32.gmra.mrb[0].mxu0 %v277
        %v946 = vpop.f32.mrb[0].mxu0
        %v947 = vadd.f32 0.0, %v946
        %v948 = vpop.f32.mrb[0].mxu0
        %949 = vmatprep.mubr.f32.mxu0 0.0
        %950 = vmatmul.mubr.f32.gmra.mrb[0].mxu0 %v278
        %v951 = vpop.f32.mrb[0].mxu0
        %v952 = vadd.f32 0.0, %v951
        %v953 = vpop.f32.mrb[0].mxu0
        %954 = vmatprep.mubr.f32.mxu0 0.0
        %955 = vmatmul.mubr.f32.gmra.mrb[0].mxu0 %v279
        %v956 = vpop.f32.mrb[0].mxu0
        %v957 = vadd.f32 0.0, %v956
        %v958 = vpop.f32.mrb[0].mxu0
        %959 = vmatprep.mubr.f32.mxu0 0.0
        %960 = vmatmul.mubr.f32.gmra.mrb[0].mxu0 %v280
        %v961 = vpop.f32.mrb[0].mxu0
        %v962 = vadd.f32 0.0, %v961
        %v963 = vpop.f32.mrb[0].mxu0
        %964 = vmatprep.mubr.f32.mxu0 0.0
        %965 = vmatmul.mubr.f32.gmra.mrb[0].mxu0 %v281
        %v966 = vpop.f32.mrb[0].mxu0
        %v967 = vadd.f32 0.0, %v966
        %v968 = vpop.f32.mrb[0].mxu0
        %969 = vmatprep.mubr.f32.mxu0 0.0
        %970 = vmatmul.mubr.f32.gmra.mrb[0].mxu0 %v282
        %v971 = vpop.f32.mrb[0].mxu0
        %v972 = vadd.f32 0.0, %v971
        %v973 = vpop.f32.mrb[0].mxu0
        %974 = vmatprep.mubr.f32.mxu0 0.0
        %975 = vmatmul.mubr.f32.gmra.mrb[0].mxu0 %v283
        %v976 = vpop.f32.mrb[0].mxu0
        %v977 = vadd.f32 0.0, %v976
        %v978 = vpop.f32.mrb[0].mxu0
        %979 = vmatprep.mubr.f32.mxu0 0.0
        %980 = vmatmul.mubr.f32.gmra.mrb[0].mxu0 %v284
        %v981 = vpop.f32.mrb[0].mxu0
        %v982 = vadd.f32 0.0, %v981
        %v983 = vpop.f32.mrb[0].mxu0
        %984 = vmatprep.mubr.f32.mxu0 0.0
        %985 = vmatmul.mubr.f32.gmra.mrb[0].mxu0 %v285
        %v986 = vpop.f32.mrb[0].mxu0
        %v987 = vadd.f32 0.0, %v986
        %v988 = vpop.f32.mrb[0].mxu0
        %989 = vmatprep.mubr.f32.mxu0 0.0
        %990 = vmatmul.mubr.f32.gmra.mrb[0].mxu0 %v286
        %v991 = vpop.f32.mrb[0].mxu0
        %v992 = vadd.f32 0.0, %v991
        %v993 = vpop.f32.mrb[0].mxu0
        %994 = vmatprep.mubr.f32.mxu0 0.0
        %995 = vmatmul.mubr.f32.gmra.mrb[0].mxu0 %v287
        %v996 = vpop.f32.mrb[0].mxu0
        %v997 = vadd.f32 0.0, %v996
        %v998 = vpop.f32.mrb[0].mxu0
        %999 = vmatprep.mubr.f32.mxu0 0.0
        %1000 = vmatmul.mubr.f32.gmra.mrb[0].mxu0 %v288
        %v1001 = vpop.f32.mrb[0].mxu0
        %v1002 = vadd.f32 0.0, %v1001
        %v1003 = vpop.f32.mrb[0].mxu0
        %1004 = vmatprep.mubr.f32.mxu0 0.0
        %1005 = vmatmul.mubr.f32.gmra.mrb[0].mxu0 %v289
        %v1006 = vpop.f32.mrb[0].mxu0
        %v1007 = vadd.f32 0.0, %v1006
        %v1008 = vpop.f32.mrb[0].mxu0
        %1009 = vmatprep.mubr.f32.mxu0 0.0
        %1010 = vmatmul.mubr.f32.gmra.mrb[0].mxu0 %v290
        %v1011 = vpop.f32.mrb[0].mxu0
        %v1012 = vadd.f32 0.0, %v1011
        %v1013 = vpop.f32.mrb[0].mxu0
        %1014 = vmatprep.mubr.f32.mxu0 0.0
        %1015 = vmatmul.mubr.f32.gmra.mrb[0].mxu0 %v291
        %v1016 = vpop.f32.mrb[0].mxu0
        %v1017 = vadd.f32 0.0, %v1016
        %v1018 = vpop.f32.mrb[0].mxu0
        %1019 = vmatprep.mubr.f32.mxu0 0.0
        %1020 = vmatmul.mubr.f32.gmra.mrb[0].mxu0 %v292
        %v1021 = vpop.f32.mrb[0].mxu0
        %v1022 = vadd.f32 0.0, %v1021
        %v1023 = vpop.f32.mrb[0].mxu0
        %1024 = vmatprep.mubr.f32.mxu0 0.0
        %1025 = vmatmul.mubr.f32.gmra.mrb[0].mxu0 %v293
        %v1026 = vpop.f32.mrb[0].mxu0
        %v1027 = vadd.f32 0.0, %v1026
        %v1028 = vpop.f32.mrb[0].mxu0
        %1029 = vmatprep.mubr.f32.mxu0 0.0
        %1030 = vmatmul.mubr.f32.gmra.mrb[0].mxu0 %v294
        %v1031 = vpop.f32.mrb[0].mxu0
        %v1032 = vadd.f32 0.0, %v1031
        %v1033 = vpop.f32.mrb[0].mxu0
        %1034 = vmatprep.mubr.f32.mxu0 0.0
        %1035 = vmatmul.mubr.f32.gmra.mrb[0].mxu0 %v295
        %v1036 = vpop.f32.mrb[0].mxu0
        %v1037 = vadd.f32 0.0, %v1036
        %v1038 = vpop.f32.mrb[0].mxu0
        %1039 = vmatprep.mubr.f32.mxu0 0.0
        %1040 = vmatmul.mubr.f32.gmra.mrb[0].mxu0 %v296
        %v1041 = vpop.f32.mrb[0].mxu0
        %v1042 = vadd.f32 0.0, %v1041
        %v1043 = vpop.f32.mrb[0].mxu0
        %1044 = vmatprep.mubr.f32.mxu0 0.0
        %1045 = vmatmul.mubr.f32.gmra.mrb[0].mxu0 %v297
        %v1046 = vpop.f32.mrb[0].mxu0
        %v1047 = vadd.f32 0.0, %v1046
        %v1048 = vpop.f32.mrb[0].mxu0
        %1049 = vmatprep.mubr.f32.mxu0 0.0
        %1050 = vmatmul.mubr.f32.gmra.mrb[0].mxu0 %v298
        %v1051 = vpop.f32.mrb[0].mxu0
        %v1052 = vadd.f32 0.0, %v1051
        %v1053 = vpop.f32.mrb[0].mxu0
        %1054 = vmatprep.mubr.f32.mxu0 0.0
        %1055 = vmatmul.mubr.f32.gmra.mrb[0].mxu0 %v299
        %v1056 = vpop.f32.mrb[0].mxu0
        %v1057 = vadd.f32 0.0, %v1056
        %v1058 = vpop.f32.mrb[0].mxu0
        %1059 = vmatprep.mubr.f32.mxu0 0.0
        %1060 = vmatmul.mubr.f32.gmra.mrb[0].mxu0 %v300
        %v1061 = vpop.f32.mrb[0].mxu0
        %v1062 = vadd.f32 0.0, %v1061
        %v1063 = vpop.f32.mrb[0].mxu0
        %1064 = vmatprep.mubr.f32.mxu0 0.0
        %1065 = vmatmul.mubr.f32.gmra.mrb[0].mxu0 %v301
        %v1066 = vpop.f32.mrb[0].mxu0
        %v1067 = vadd.f32 0.0, %v1066
        %v1068 = vpop.f32.mrb[0].mxu0
        %1069 = vmatprep.mubr.f32.mxu0 0.0
        %1070 = vmatmul.mubr.f32.gmra.mrb[0].mxu0 %v302
        %v1071 = vpop.f32.mrb[0].mxu0
        %v1072 = vadd.f32 0.0, %v1071
        %v1073 = vpop.f32.mrb[0].mxu0
        %1074 = vmatprep.mubr.f32.mxu0 0.0
        %1075 = vmatmul.mubr.f32.gmra.mrb[0].mxu0 %v303
        %v1076 = vpop.f32.mrb[0].mxu0
        %v1077 = vadd.f32 0.0, %v1076
        %v1078 = vpop.f32.mrb[0].mxu0
        %1079 = vmatprep.mubr.f32.mxu0 0.0
        %1080 = vmatmul.mubr.f32.gmra.mrb[0].mxu0 %v304
        %v1081 = vpop.f32.mrb[0].mxu0
        %v1082 = vadd.f32 0.0, %v1081
        %v1083 = vpop.f32.mrb[0].mxu0
        %1084 = vmatprep.mubr.f32.mxu0 0.0
        %1085 = vmatmul.mubr.f32.gmra.mrb[0].mxu0 %v305
        %v1086 = vpop.f32.mrb[0].mxu0
        %v1087 = vadd.f32 0.0, %v1086
        %v1088 = vpop.f32.mrb[0].mxu0
        %1089 = vmatprep.mubr.f32.mxu0 0.0
        %1090 = vmatmul.mubr.f32.gmra.mrb[0].mxu0 %v306
        %v1091 = vpop.f32.mrb[0].mxu0
        %v1092 = vadd.f32 0.0, %v1091
        %v1093 = vpop.f32.mrb[0].mxu0
        %1094 = vdwg.mxu0
        %v1095 = vld [vmem:[%s4] sm:$0xff]
        %v1096 = vld [vmem:[%s4 + $0x8] sm:$0xff]
        %vm1097 = vcmask 64512
        %v1099 = vsel %vm1097, %v937, 0
        %v1102 = vsel %vm1097, %v942, 0
        %v1105 = vsel %vm1097, %v947, 0
        %v1108 = vsel %vm1097, %v952, 0
        %v1111 = vsel %vm1097, %v957, 0
        %v1114 = vsel %vm1097, %v962, 0
        %v1117 = vsel %vm1097, %v967, 0
        %v1120 = vsel %vm1097, %v972, 0
        %v1123 = vsel %vm1097, %v977, 0
        %v1126 = vsel %vm1097, %v982, 0
        %v1129 = vsel %vm1097, %v987, 0
        %v1132 = vsel %vm1097, %v992, 0
        %v1135 = vsel %vm1097, %v997, 0
        %v1138 = vsel %vm1097, %v1002, 0
        %v1141 = vsel %vm1097, %v1007, 0
        %v1144 = vsel %vm1097, %v1012, 0
        %v1147 = vsel %vm1097, %v1017, 0
        %v1150 = vsel %vm1097, %v1022, 0
        %v1153 = vsel %vm1097, %v1027, 0
        %v1156 = vsel %vm1097, %v1032, 0
        %v1159 = vsel %vm1097, %v1037, 0
        %v1162 = vsel %vm1097, %v1042, 0
        %v1165 = vsel %vm1097, %v1047, 0
        %v1168 = vsel %vm1097, %v1052, 0
        %v1171 = vsel %vm1097, %v1057, 0
        %v1174 = vsel %vm1097, %v1062, 0
        %v1177 = vsel %vm1097, %v1067, 0
        %v1180 = vsel %vm1097, %v1072, 0
        %v1183 = vsel %vm1097, %v1077, 0
        %v1186 = vsel %vm1097, %v1082, 0
        %v1189 = vsel %vm1097, %v1087, 0
        %v1192 = vsel %vm1097, %v1092, 0
        %1194 = vmatprep.subr.mxu0 %v1096
        %1195 = vmatpush1.msra.mxu0 %v1095
        %1196 = vmatprep.subr.mxu0 0.0
        %1197 = vmatpush1.msra.mxu0 0.0
        %1198 = vmatprep.subr.mxu0 0.0
        %1199 = vmatpush1.msra.mxu0 0.0
        %1200 = vmatprep.subr.mxu0 0.0
        %1201 = vmatpush1.msra.mxu0 0.0
        %1202 = vmatprep.subr.mxu0 0.0
        %1203 = vmatpush1.msra.mxu0 0.0
        %1204 = vmatprep.subr.mxu0 0.0
        %1205 = vmatpush1.msra.mxu0 0.0
        %1206 = vmatprep.subr.mxu0 0.0
        %1207 = vmatpush1.msra.mxu0 0.0
        %1208 = vmatprep.subr.mxu0 0.0
        %1209 = vmatpush1.msra.mxu0 0.0
        %1210 = vmatprep.subr.mxu0 0.0
        %1211 = vmatpush1.msra.mxu0 0.0
        %1212 = vmatprep.subr.mxu0 0.0
        %1213 = vmatpush1.msra.mxu0 0.0
        %1214 = vmatprep.subr.mxu0 0.0
        %1215 = vmatpush1.msra.mxu0 0.0
        %1216 = vmatprep.subr.mxu0 0.0
        %1217 = vmatpush1.msra.mxu0 0.0
        %1218 = vmatprep.subr.mxu0 0.0
        %1219 = vmatpush1.msra.mxu0 0.0
        %1220 = vmatprep.subr.mxu0 0.0
        %1221 = vmatpush1.msra.mxu0 0.0
        %1222 = vmatprep.subr.mxu0 0.0
        %1223 = vmatpush1.msra.mxu0 0.0
        %1224 = vmatprep.subr.mxu0 0.0
        %1225 = vmatpush1.msra.mxu0 0.0
        %1226 = vmatprep.subr.mxu0 0.0
        %1227 = vmatpush1.msra.mxu0 0.0
        %1228 = vmatprep.subr.mxu0 0.0
        %1229 = vmatpush1.msra.mxu0 0.0
        %1230 = vmatprep.subr.mxu0 0.0
        %1231 = vmatpush1.msra.mxu0 0.0
        %1232 = vmatprep.subr.mxu0 0.0
        %1233 = vmatpush1.msra.mxu0 0.0
        %1234 = vmatprep.subr.mxu0 0.0
        %1235 = vmatpush1.msra.mxu0 0.0
        %1236 = vmatprep.subr.mxu0 0.0
        %1237 = vmatpush1.msra.mxu0 0.0
        %1238 = vmatprep.subr.mxu0 0.0
        %1239 = vmatpush1.msra.mxu0 0.0
        %1240 = vmatprep.subr.mxu0 0.0
        %1241 = vmatpush1.msra.mxu0 0.0
        %1242 = vmatprep.subr.mxu0 0.0
        %1243 = vmatpush1.msra.mxu0 0.0
        %1244 = vmatprep.subr.mxu0 0.0
        %1245 = vmatpush1.msra.mxu0 0.0
        %1246 = vmatprep.subr.mxu0 0.0
        %1247 = vmatpush1.msra.mxu0 0.0
        %1248 = vmatprep.subr.mxu0 0.0
        %1249 = vmatpush1.msra.mxu0 0.0
        %1250 = vmatprep.subr.mxu0 0.0
        %1251 = vmatpush1.msra.mxu0 0.0
        %1252 = vmatprep.subr.mxu0 0.0
        %1253 = vmatpush1.msra.mxu0 0.0
        %1254 = vmatprep.subr.mxu0 0.0
        %1255 = vmatpush1.msra.mxu0 0.0
        %1256 = vmatprep.subr.mxu0 0.0
        %1257 = vmatpush1.msra.mxu0 0.0
        %1258 = vmatprep.mubr.f32.mxu0 0.0
        %1259 = vmatmul.mubr.f32.gmra.mrb[0].mxu0 %v1099
        %v1260 = vpop.f32.mrb[0].mxu0
        %v1261 = vadd.f32 0.0, %v1260
        %v1262 = vpop.f32.mrb[0].mxu0
        %v1263 = vadd.f32 0.0, %v1262
        %1264 = vmatprep.mubr.f32.mxu0 0.0
        %1265 = vmatmul.mubr.f32.gmra.mrb[0].mxu0 %v1102
        %v1266 = vpop.f32.mrb[0].mxu0
        %v1267 = vadd.f32 0.0, %v1266
        %v1268 = vpop.f32.mrb[0].mxu0
        %v1269 = vadd.f32 0.0, %v1268
        %1270 = vmatprep.mubr.f32.mxu0 0.0
        %1271 = vmatmul.mubr.f32.gmra.mrb[0].mxu0 %v1105
        %v1272 = vpop.f32.mrb[0].mxu0
        %v1273 = vadd.f32 0.0, %v1272
        %v1274 = vpop.f32.mrb[0].mxu0
        %v1275 = vadd.f32 0.0, %v1274
        %1276 = vmatprep.mubr.f32.mxu0 0.0
        %1277 = vmatmul.mubr.f32.gmra.mrb[0].mxu0 %v1108
        %v1278 = vpop.f32.mrb[0].mxu0
        %v1279 = vadd.f32 0.0, %v1278
        %v1280 = vpop.f32.mrb[0].mxu0
        %v1281 = vadd.f32 0.0, %v1280
        %1282 = vmatprep.mubr.f32.mxu0 0.0
        %1283 = vmatmul.mubr.f32.gmra.mrb[0].mxu0 %v1111
        %v1284 = vpop.f32.mrb[0].mxu0
        %v1285 = vadd.f32 0.0, %v1284
        %v1286 = vpop.f32.mrb[0].mxu0
        %v1287 = vadd.f32 0.0, %v1286
        %1288 = vmatprep.mubr.f32.mxu0 0.0
        %1289 = vmatmul.mubr.f32.gmra.mrb[0].mxu0 %v1114
        %v1290 = vpop.f32.mrb[0].mxu0
        %v1291 = vadd.f32 0.0, %v1290
        %v1292 = vpop.f32.mrb[0].mxu0
        %v1293 = vadd.f32 0.0, %v1292
        %1294 = vmatprep.mubr.f32.mxu0 0.0
        %1295 = vmatmul.mubr.f32.gmra.mrb[0].mxu0 %v1117
        %v1296 = vpop.f32.mrb[0].mxu0
        %v1297 = vadd.f32 0.0, %v1296
        %v1298 = vpop.f32.mrb[0].mxu0
        %v1299 = vadd.f32 0.0, %v1298
        %1300 = vmatprep.mubr.f32.mxu0 0.0
        %1301 = vmatmul.mubr.f32.gmra.mrb[0].mxu0 %v1120
        %v1302 = vpop.f32.mrb[0].mxu0
        %v1303 = vadd.f32 0.0, %v1302
        %v1304 = vpop.f32.mrb[0].mxu0
        %v1305 = vadd.f32 0.0, %v1304
        %1306 = vmatprep.mubr.f32.mxu0 0.0
        %1307 = vmatmul.mubr.f32.gmra.mrb[0].mxu0 %v1123
        %v1308 = vpop.f32.mrb[0].mxu0
        %v1309 = vadd.f32 0.0, %v1308
        %v1310 = vpop.f32.mrb[0].mxu0
        %v1311 = vadd.f32 0.0, %v1310
        %1312 = vmatprep.mubr.f32.mxu0 0.0
        %1313 = vmatmul.mubr.f32.gmra.mrb[0].mxu0 %v1126
        %v1314 = vpop.f32.mrb[0].mxu0
        %v1315 = vadd.f32 0.0, %v1314
        %v1316 = vpop.f32.mrb[0].mxu0
        %v1317 = vadd.f32 0.0, %v1316
        %1318 = vmatprep.mubr.f32.mxu0 0.0
        %1319 = vmatmul.mubr.f32.gmra.mrb[0].mxu0 %v1129
        %v1320 = vpop.f32.mrb[0].mxu0
        %v1321 = vadd.f32 0.0, %v1320
        %v1322 = vpop.f32.mrb[0].mxu0
        %v1323 = vadd.f32 0.0, %v1322
        %1324 = vmatprep.mubr.f32.mxu0 0.0
        %1325 = vmatmul.mubr.f32.gmra.mrb[0].mxu0 %v1132
        %v1326 = vpop.f32.mrb[0].mxu0
        %v1327 = vadd.f32 0.0, %v1326
        %v1328 = vpop.f32.mrb[0].mxu0
        %v1329 = vadd.f32 0.0, %v1328
        %1330 = vmatprep.mubr.f32.mxu0 0.0
        %1331 = vmatmul.mubr.f32.gmra.mrb[0].mxu0 %v1135
        %v1332 = vpop.f32.mrb[0].mxu0
        %v1333 = vadd.f32 0.0, %v1332
        %v1334 = vpop.f32.mrb[0].mxu0
        %v1335 = vadd.f32 0.0, %v1334
        %1336 = vmatprep.mubr.f32.mxu0 0.0
        %1337 = vmatmul.mubr.f32.gmra.mrb[0].mxu0 %v1138
        %v1338 = vpop.f32.mrb[0].mxu0
        %v1339 = vadd.f32 0.0, %v1338
        %v1340 = vpop.f32.mrb[0].mxu0
        %v1341 = vadd.f32 0.0, %v1340
        %1342 = vmatprep.mubr.f32.mxu0 0.0
        %1343 = vmatmul.mubr.f32.gmra.mrb[0].mxu0 %v1141
        %v1344 = vpop.f32.mrb[0].mxu0
        %v1345 = vadd.f32 0.0, %v1344
        %v1346 = vpop.f32.mrb[0].mxu0
        %v1347 = vadd.f32 0.0, %v1346
        %1348 = vmatprep.mubr.f32.mxu0 0.0
        %1349 = vmatmul.mubr.f32.gmra.mrb[0].mxu0 %v1144
        %v1350 = vpop.f32.mrb[0].mxu0
        %v1351 = vadd.f32 0.0, %v1350
        %v1352 = vpop.f32.mrb[0].mxu0
        %v1353 = vadd.f32 0.0, %v1352
        %1354 = vmatprep.mubr.f32.mxu0 0.0
        %1355 = vmatmul.mubr.f32.gmra.mrb[0].mxu0 %v1147
        %v1356 = vpop.f32.mrb[0].mxu0
        %v1357 = vadd.f32 0.0, %v1356
        %v1358 = vpop.f32.mrb[0].mxu0
        %v1359 = vadd.f32 0.0, %v1358
        %1360 = vmatprep.mubr.f32.mxu0 0.0
        %1361 = vmatmul.mubr.f32.gmra.mrb[0].mxu0 %v1150
        %v1362 = vpop.f32.mrb[0].mxu0
        %v1363 = vadd.f32 0.0, %v1362
        %v1364 = vpop.f32.mrb[0].mxu0
        %v1365 = vadd.f32 0.0, %v1364
        %1366 = vmatprep.mubr.f32.mxu0 0.0
        %1367 = vmatmul.mubr.f32.gmra.mrb[0].mxu0 %v1153
        %v1368 = vpop.f32.mrb[0].mxu0
        %v1369 = vadd.f32 0.0, %v1368
        %v1370 = vpop.f32.mrb[0].mxu0
        %v1371 = vadd.f32 0.0, %v1370
        %1372 = vmatprep.mubr.f32.mxu0 0.0
        %1373 = vmatmul.mubr.f32.gmra.mrb[0].mxu0 %v1156
        %v1374 = vpop.f32.mrb[0].mxu0
        %v1375 = vadd.f32 0.0, %v1374
        %v1376 = vpop.f32.mrb[0].mxu0
        %v1377 = vadd.f32 0.0, %v1376
        %1378 = vmatprep.mubr.f32.mxu0 0.0
        %1379 = vmatmul.mubr.f32.gmra.mrb[0].mxu0 %v1159
        %v1380 = vpop.f32.mrb[0].mxu0
        %v1381 = vadd.f32 0.0, %v1380
        %v1382 = vpop.f32.mrb[0].mxu0
        %v1383 = vadd.f32 0.0, %v1382
        %1384 = vmatprep.mubr.f32.mxu0 0.0
        %1385 = vmatmul.mubr.f32.gmra.mrb[0].mxu0 %v1162
        %v1386 = vpop.f32.mrb[0].mxu0
        %v1387 = vadd.f32 0.0, %v1386
        %v1388 = vpop.f32.mrb[0].mxu0
        %v1389 = vadd.f32 0.0, %v1388
        %1390 = vmatprep.mubr.f32.mxu0 0.0
        %1391 = vmatmul.mubr.f32.gmra.mrb[0].mxu0 %v1165
        %v1392 = vpop.f32.mrb[0].mxu0
        %v1393 = vadd.f32 0.0, %v1392
        %v1394 = vpop.f32.mrb[0].mxu0
        %v1395 = vadd.f32 0.0, %v1394
        %1396 = vmatprep.mubr.f32.mxu0 0.0
        %1397 = vmatmul.mubr.f32.gmra.mrb[0].mxu0 %v1168
        %v1398 = vpop.f32.mrb[0].mxu0
        %v1399 = vadd.f32 0.0, %v1398
        %v1400 = vpop.f32.mrb[0].mxu0
        %v1401 = vadd.f32 0.0, %v1400
        %1402 = vmatprep.mubr.f32.mxu0 0.0
        %1403 = vmatmul.mubr.f32.gmra.mrb[0].mxu0 %v1171
        %v1404 = vpop.f32.mrb[0].mxu0
        %v1405 = vadd.f32 0.0, %v1404
        %v1406 = vpop.f32.mrb[0].mxu0
        %v1407 = vadd.f32 0.0, %v1406
        %1408 = vmatprep.mubr.f32.mxu0 0.0
        %1409 = vmatmul.mubr.f32.gmra.mrb[0].mxu0 %v1174
        %v1410 = vpop.f32.mrb[0].mxu0
        %v1411 = vadd.f32 0.0, %v1410
        %v1412 = vpop.f32.mrb[0].mxu0
        %v1413 = vadd.f32 0.0, %v1412
        %1414 = vmatprep.mubr.f32.mxu0 0.0
        %1415 = vmatmul.mubr.f32.gmra.mrb[0].mxu0 %v1177
        %v1416 = vpop.f32.mrb[0].mxu0
        %v1417 = vadd.f32 0.0, %v1416
        %v1418 = vpop.f32.mrb[0].mxu0
        %v1419 = vadd.f32 0.0, %v1418
        %1420 = vmatprep.mubr.f32.mxu0 0.0
        %1421 = vmatmul.mubr.f32.gmra.mrb[0].mxu0 %v1180
        %v1422 = vpop.f32.mrb[0].mxu0
        %v1423 = vadd.f32 0.0, %v1422
        %v1424 = vpop.f32.mrb[0].mxu0
        %v1425 = vadd.f32 0.0, %v1424
        %1426 = vmatprep.mubr.f32.mxu0 0.0
        %1427 = vmatmul.mubr.f32.gmra.mrb[0].mxu0 %v1183
        %v1428 = vpop.f32.mrb[0].mxu0
        %v1429 = vadd.f32 0.0, %v1428
        %v1430 = vpop.f32.mrb[0].mxu0
        %v1431 = vadd.f32 0.0, %v1430
        %1432 = vmatprep.mubr.f32.mxu0 0.0
        %1433 = vmatmul.mubr.f32.gmra.mrb[0].mxu0 %v1186
        %v1434 = vpop.f32.mrb[0].mxu0
        %v1435 = vadd.f32 0.0, %v1434
        %v1436 = vpop.f32.mrb[0].mxu0
        %v1437 = vadd.f32 0.0, %v1436
        %1438 = vmatprep.mubr.f32.mxu0 0.0
        %1439 = vmatmul.mubr.f32.gmra.mrb[0].mxu0 %v1189
        %v1440 = vpop.f32.mrb[0].mxu0
        %v1441 = vadd.f32 0.0, %v1440
        %v1442 = vpop.f32.mrb[0].mxu0
        %v1443 = vadd.f32 0.0, %v1442
        %1444 = vmatprep.mubr.f32.mxu0 0.0
        %1445 = vmatmul.mubr.f32.gmra.mrb[0].mxu0 %v1192
        %v1446 = vpop.f32.mrb[0].mxu0
        %v1447 = vadd.f32 0.0, %v1446
        %v1448 = vpop.f32.mrb[0].mxu0
        %v1449 = vadd.f32 0.0, %v1448
        %1450 = vdwg.mxu0
        %v1451 = vadd.f32 %v439, %v1261
        %v1452 = vadd.f32 %v445, %v1267
        %v1453 = vadd.f32 %v451, %v1273
        %v1454 = vadd.f32 %v457, %v1279
        %v1455 = vadd.f32 %v463, %v1285
        %v1456 = vadd.f32 %v469, %v1291
        %v1457 = vadd.f32 %v475, %v1297
        %v1458 = vadd.f32 %v481, %v1303
        %v1459 = vadd.f32 %v487, %v1309
        %v1460 = vadd.f32 %v493, %v1315
        %v1461 = vadd.f32 %v499, %v1321
        %v1462 = vadd.f32 %v505, %v1327
        %v1463 = vadd.f32 %v511, %v1333
        %v1464 = vadd.f32 %v517, %v1339
        %v1465 = vadd.f32 %v523, %v1345
        %v1466 = vadd.f32 %v529, %v1351
        %v1467 = vadd.f32 %v535, %v1357
        %v1468 = vadd.f32 %v541, %v1363
        %v1469 = vadd.f32 %v547, %v1369
        %v1470 = vadd.f32 %v553, %v1375
        %v1471 = vadd.f32 %v559, %v1381
        %v1472 = vadd.f32 %v565, %v1387
        %v1473 = vadd.f32 %v571, %v1393
        %v1474 = vadd.f32 %v577, %v1399
        %v1475 = vadd.f32 %v583, %v1405
        %v1476 = vadd.f32 %v589, %v1411
        %v1477 = vadd.f32 %v595, %v1417
        %v1478 = vadd.f32 %v601, %v1423
        %v1479 = vadd.f32 %v607, %v1429
        %v1480 = vadd.f32 %v613, %v1435
        %v1481 = vadd.f32 %v619, %v1441
        %v1482 = vadd.f32 %v625, %v1447
        %1483 = vst [vmem:[%s263] sm:$0xff] %v1451
        %1484 = vst [vmem:[%s263 + $0x18] sm:$0xff] %v1452
        %1485 = vst [vmem:[%s263 + $0x30] sm:$0xff] %v1453
        %1486 = vst [vmem:[%s263 + $0x48] sm:$0xff] %v1454
        %1487 = vst [vmem:[%s263 + $0x60] sm:$0xff] %v1455
        %1488 = vst [vmem:[%s263 + $0x78] sm:$0xff] %v1456
        %1489 = vst [vmem:[%s263 + $0x90] sm:$0xff] %v1457
        %1490 = vst [vmem:[%s263 + $0xa8] sm:$0xff] %v1458
        %1491 = vst [vmem:[%s263 + $0xc0] sm:$0xff] %v1459
        %1492 = vst [vmem:[%s263 + $0xd8] sm:$0xff] %v1460
        %1493 = vst [vmem:[%s263 + $0xf0] sm:$0xff] %v1461
        %1494 = vst [vmem:[%s263 + $0x108] sm:$0xff] %v1462
        %1495 = vst [vmem:[%s263 + $0x120] sm:$0xff] %v1463
        %1496 = vst [vmem:[%s263 + $0x138] sm:$0xff] %v1464
        %1497 = vst [vmem:[%s263 + $0x150] sm:$0xff] %v1465
        %1498 = vst [vmem:[%s263 + $0x168] sm:$0xff] %v1466
        %1499 = vst [vmem:[%s263 + $0x180] sm:$0xff] %v1467
        %1500 = vst [vmem:[%s263 + $0x198] sm:$0xff] %v1468
        %1501 = vst [vmem:[%s263 + $0x1b0] sm:$0xff] %v1469
        %1502 = vst [vmem:[%s263 + $0x1c8] sm:$0xff] %v1470
        %1503 = vst [vmem:[%s263 + $0x1e0] sm:$0xff] %v1471
        %1504 = vst [vmem:[%s263 + $0x1f8] sm:$0xff] %v1472
        %1505 = vst [vmem:[%s263 + $0x210] sm:$0xff] %v1473
        %1506 = vst [vmem:[%s263 + $0x228] sm:$0xff] %v1474
        %1507 = vst [vmem:[%s263 + $0x240] sm:$0xff] %v1475
        %1508 = vst [vmem:[%s263 + $0x258] sm:$0xff] %v1476
        %1509 = vst [vmem:[%s263 + $0x270] sm:$0xff] %v1477
        %1510 = vst [vmem:[%s263 + $0x288] sm:$0xff] %v1478
        %1511 = vst [vmem:[%s263 + $0x2a0] sm:$0xff] %v1479
        %1512 = vst [vmem:[%s263 + $0x2b8] sm:$0xff] %v1480
        %1513 = vst [vmem:[%s263 + $0x2d0] sm:$0xff] %v1481
        %1514 = vst [vmem:[%s263 + $0x2e8] sm:$0xff] %v1482
        %1515 = vst [vmem:[%s263 + $0x8] sm:$0xff] %v441
        %1516 = vst [vmem:[%s263 + $0x20] sm:$0xff] %v447
        %1517 = vst [vmem:[%s263 + $0x38] sm:$0xff] %v453
        %1518 = vst [vmem:[%s263 + $0x50] sm:$0xff] %v459
        %1519 = vst [vmem:[%s263 + $0x68] sm:$0xff] %v465
        %1520 = vst [vmem:[%s263 + $0x80] sm:$0xff] %v471
        %1521 = vst [vmem:[%s263 + $0x98] sm:$0xff] %v477
        %1522 = vst [vmem:[%s263 + $0xb0] sm:$0xff] %v483
        %1523 = vst [vmem:[%s263 + $0xc8] sm:$0xff] %v489
        %1524 = vst [vmem:[%s263 + $0xe0] sm:$0xff] %v495
        %1525 = vst [vmem:[%s263 + $0xf8] sm:$0xff] %v501
        %1526 = vst [vmem:[%s263 + $0x110] sm:$0xff] %v507
        %1527 = vst [vmem:[%s263 + $0x128] sm:$0xff] %v513
        %1528 = vst [vmem:[%s263 + $0x140] sm:$0xff] %v519
        %1529 = vst [vmem:[%s263 + $0x158] sm:$0xff] %v525
        %1530 = vst [vmem:[%s263 + $0x170] sm:$0xff] %v531
        %1531 = vst [vmem:[%s263 + $0x188] sm:$0xff] %v537
        %1532 = vst [vmem:[%s263 + $0x1a0] sm:$0xff] %v543
        %1533 = vst [vmem:[%s263 + $0x1b8] sm:$0xff] %v549
        %1534 = vst [vmem:[%s263 + $0x1d0] sm:$0xff] %v555
        %1535 = vst [vmem:[%s263 + $0x1e8] sm:$0xff] %v561
        %1536 = vst [vmem:[%s263 + $0x200] sm:$0xff] %v567
        %1537 = vst [vmem:[%s263 + $0x218] sm:$0xff] %v573
        %1538 = vst [vmem:[%s263 + $0x230] sm:$0xff] %v579
        %1539 = vst [vmem:[%s263 + $0x248] sm:$0xff] %v585
        %1540 = vst [vmem:[%s263 + $0x260] sm:$0xff] %v591
        %1541 = vst [vmem:[%s263 + $0x278] sm:$0xff] %v597
        %1542 = vst [vmem:[%s263 + $0x290] sm:$0xff] %v603
        %1543 = vst [vmem:[%s263 + $0x2a8] sm:$0xff] %v609
        %1544 = vst [vmem:[%s263 + $0x2c0] sm:$0xff] %v615
        %1545 = vst [vmem:[%s263 + $0x2d8] sm:$0xff] %v621
        %1546 = vst [vmem:[%s263 + $0x2f0] sm:$0xff] %v627
        %v1547 = vadd.f32 %v696, %v1263
        %v1548 = vadd.f32 %v701, %v1269
        %v1549 = vadd.f32 %v706, %v1275
        %v1550 = vadd.f32 %v711, %v1281
        %v1551 = vadd.f32 %v716, %v1287
        %v1552 = vadd.f32 %v721, %v1293
        %v1553 = vadd.f32 %v726, %v1299
        %v1554 = vadd.f32 %v731, %v1305
        %v1555 = vadd.f32 %v736, %v1311
        %v1556 = vadd.f32 %v741, %v1317
        %v1557 = vadd.f32 %v746, %v1323
        %v1558 = vadd.f32 %v751, %v1329
        %v1559 = vadd.f32 %v756, %v1335
        %v1560 = vadd.f32 %v761, %v1341
        %v1561 = vadd.f32 %v766, %v1347
        %v1562 = vadd.f32 %v771, %v1353
        %v1563 = vadd.f32 %v776, %v1359
        %v1564 = vadd.f32 %v781, %v1365
        %v1565 = vadd.f32 %v786, %v1371
        %v1566 = vadd.f32 %v791, %v1377
        %v1567 = vadd.f32 %v796, %v1383
        %v1568 = vadd.f32 %v801, %v1389
        %v1569 = vadd.f32 %v806, %v1395
        %v1570 = vadd.f32 %v811, %v1401
        %v1571 = vadd.f32 %v816, %v1407
        %v1572 = vadd.f32 %v821, %v1413
        %v1573 = vadd.f32 %v826, %v1419
        %v1574 = vadd.f32 %v831, %v1425
        %v1575 = vadd.f32 %v836, %v1431
        %v1576 = vadd.f32 %v841, %v1437
        %v1577 = vadd.f32 %v846, %v1443
        %v1578 = vadd.f32 %v851, %v1449
        %1579 = vst [vmem:[%s263 + $0x10] sm:$0xff] %v1547
        %1580 = vst [vmem:[%s263 + $0x28] sm:$0xff] %v1548
        %1581 = vst [vmem:[%s263 + $0x40] sm:$0xff] %v1549
        %1582 = vst [vmem:[%s263 + $0x58] sm:$0xff] %v1550
        %1583 = vst [vmem:[%s263 + $0x70] sm:$0xff] %v1551
        %1584 = vst [vmem:[%s263 + $0x88] sm:$0xff] %v1552
        %1585 = vst [vmem:[%s263 + $0xa0] sm:$0xff] %v1553
        %1586 = vst [vmem:[%s263 + $0xb8] sm:$0xff] %v1554
        %1587 = vst [vmem:[%s263 + $0xd0] sm:$0xff] %v1555
        %1588 = vst [vmem:[%s263 + $0xe8] sm:$0xff] %v1556
        %1589 = vst [vmem:[%s263 + $0x100] sm:$0xff] %v1557
        %1590 = vst [vmem:[%s263 + $0x118] sm:$0xff] %v1558
        %1591 = vst [vmem:[%s263 + $0x130] sm:$0xff] %v1559
        %1592 = vst [vmem:[%s263 + $0x148] sm:$0xff] %v1560
        %1593 = vst [vmem:[%s263 + $0x160] sm:$0xff] %v1561
        %1594 = vst [vmem:[%s263 + $0x178] sm:$0xff] %v1562
        %1595 = vst [vmem:[%s263 + $0x190] sm:$0xff] %v1563
        %1596 = vst [vmem:[%s263 + $0x1a8] sm:$0xff] %v1564
        %1597 = vst [vmem:[%s263 + $0x1c0] sm:$0xff] %v1565
        %1598 = vst [vmem:[%s263 + $0x1d8] sm:$0xff] %v1566
        %1599 = vst [vmem:[%s263 + $0x1f0] sm:$0xff] %v1567
        %1600 = vst [vmem:[%s263 + $0x208] sm:$0xff] %v1568
        %1601 = vst [vmem:[%s263 + $0x220] sm:$0xff] %v1569
        %1602 = vst [vmem:[%s263 + $0x238] sm:$0xff] %v1570
        %1603 = vst [vmem:[%s263 + $0x250] sm:$0xff] %v1571
        %1604 = vst [vmem:[%s263 + $0x268] sm:$0xff] %v1572
        %1605 = vst [vmem:[%s263 + $0x280] sm:$0xff] %v1573
        %1606 = vst [vmem:[%s263 + $0x298] sm:$0xff] %v1574
        %1607 = vst [vmem:[%s263 + $0x2b0] sm:$0xff] %v1575
        %1608 = vst [vmem:[%s263 + $0x2c8] sm:$0xff] %v1576
        %1609 = vst [vmem:[%s263 + $0x2e0] sm:$0xff] %v1577
        %1610 = vst [vmem:[%s263 + $0x2f8] sm:$0xff] %v1578
        %s1611 = sand.u32 %s141, 1
        %s1612 = scalar_lea.sflag [#allocation4], %s1611
        %s1613 = sand.u32 %s141, 1
        %s1614 = smul.addr %s1613, 768
        %s1615 = scalar_lea.vmem [#allocation7], %s1614
        // Predicated region
        $region49: #{tpu_custom_call.1} parent=39 // pred_check
          %p1616 = pneg %p151
        $region50: #{tpu_custom_call.1} parent=39 // pred_check_branch
          %1618 = sbr.rel (%p1616) target = $region52
        $region51: #{tpu_custom_call.1} parent=39 // pred_region
          %s1619 = smul.u32 32, %s23
          %s1620 = ssub.s32 50, %s1619
          %p1621 = scmp.lt.s32.totalorder %s1620, 32
          %s1622 = scalar_select %p1621, %s1620, 32
          %s1623 = smul.u32 128, %s1622
          %s1624 = smul.u32 %s1623, 3
          %s1626 = ssub.s32 12288, %s1624
          %1627 = vsyncadd %s1612, %s1626
          %p1628 = scmp.ne.s32.totalorder 0, %s1624
          %s1629 = smul.addr %s1619, 3
          %s1630 = smul.addr %s1629, 128
          %s1631 = scalar_lea.hbm %s5, %s1630
          %s1632 = smul.u32 24, %s1622
          %s1633 = sshll.u32 %s1615, 4
          %s1634 = int_to_ptr.vmem [resolvable:$true] %s1633
          %s1635 = sshll.u32 %s1632, 4
          %1639 = dma.vmem_to_hbm [thread:$0]  (%p1628), %s1634, %s1635, %s1631, %s1612, 384, 384, 24
        $region52: #{tpu_custom_call.1} parent=39 // pred_fallthru
          _
      $region40: #{tpu_custom_call.1} parent=5 // pred_fallthru
        _
      %p1640 = scmp.le.s32.totalorder 2, %s18
      // Predicated region
      $region53: #{tpu_custom_call.1} parent=5 // pred_check
        %p1641 = pneg %p1640
      $region54: #{tpu_custom_call.1} parent=5 // pred_check_branch
        %1643 = sbr.rel (%p1641) target = $region56
      $region55: #{tpu_custom_call.1} parent=5 // pred_region
        %s1644 = ssub.s32 %s18, 2
        // Predicated region
        $region57: #{tpu_custom_call.1} parent=55 // pred_check
          %p1645 = pneg %p157
        $region58: #{tpu_custom_call.1} parent=55 // pred_check_branch
          %1647 = sbr.rel (%p1645) target = $region60
        $region59: #{tpu_custom_call.1} parent=55 // pred_region
          %s1648 = sand.u32 %s142, 1
          %s1649 = scalar_lea.sflag [#allocation4], %s1648
          %s1650 = sand.u32 %s142, 1
          %s1651 = smul.addr %s1650, 768
          %s1652 = scalar_lea.vmem [#allocation7], %s1651
          %1653 = dma.done %s1649, 12288
        $region60: #{tpu_custom_call.1} parent=55 // pred_fallthru
          _
      $region56: #{tpu_custom_call.1} parent=5 // pred_fallthru
        _
    $region6: #{tpu_custom_call.1} parent=1 // loop_footer
      %s22 = sadd.s32 1, %s18
    $region7: #{tpu_custom_call.1} parent=1 // loop_footer_branch
      %17 = sbr.rel target = $region3
    $region8: #{tpu_custom_call.1} parent=1 // loop_exit
      _
    %1654 = vsyncpa [#allocation3], 1
    %s1655 = scalar_lea.sflag [#allocation3], 1
    %1656 = vsyncpa %s1655, 1
    %1657 = vsyncpa [#allocation6], 1
    %1658 = vsyncpa [#allocation4], 1
    %s1659 = scalar_lea.sflag [#allocation4], 1
    %1660 = vsyncpa %s1659, 1

</llo_original>
